<compile_context>
chip_gen: v7x
topology: tpu7x:2x2x1
jax: 0.10.0
libtpu: 0.0.40
codegen_flags: <defaults>
</compile_context>

<pallas_src>
import functools
import math

import jax
import jax.numpy as jnp
from jax.experimental import pallas as pl
from jax.experimental.pallas import tpu as pltpu


# ---------------------------------------------------------------------------
# Compiler params
# ---------------------------------------------------------------------------
def _query_vmem_limit():
    cap = 128 * 1024 * 1024
    try:
        cap = int(pltpu.get_tpu_info().vmem_capacity_bytes)
    except Exception:
        pass
    # Leave headroom for double buffers / compiler scratch (48 MiB fits v7x's
    # 64 MiB physical VMEM with margin; well under 128 MiB on v5e/v6e).
    return min((cap * 3) // 4, 48 * 1024 * 1024)


_VMEM_LIMIT = _query_vmem_limit()
_TILE_M = 256  # output rows per grid step (tiled, double-buffered by Pallas)


def _cp(dimension_semantics):
    return pltpu.CompilerParams(
        dimension_semantics=dimension_semantics,
        vmem_limit_bytes=_VMEM_LIMIT,
    )


def _round_up(x, m):
    return ((x + m - 1) // m) * m


# ---------------------------------------------------------------------------
# Conv kernel: per-tap MXU dots + fused BN-affine / PReLU / residual epilogue
# ---------------------------------------------------------------------------
def _make_conv_kernel(n_taps, apply_prelu, has_residual):
    def kernel(x_ref, w_ref, scale_ref, shift_ref, alpha_ref, *rest):
        o_ref = rest[-1]
        # Accumulate the T kernel taps on the MXU (bf16 inputs, f32 accum).
        acc = jnp.dot(x_ref[0], w_ref[0], preferred_element_type=jnp.float32)
        for t in range(1, n_taps):
            acc = acc + jnp.dot(
                x_ref[t], w_ref[t], preferred_element_type=jnp.float32
            )
        # Fused epilogue: folded eval-BatchNorm affine, optional PReLU,
        # optional residual add (all ride free under the MXU).
        z = acc * scale_ref[...] + shift_ref[...]
        if apply_prelu:
            z = jnp.where(z >= 0, z, alpha_ref[...] * z)
        if has_residual:
            z = z + rest[0][...]
        o_ref[...] = z

    return kernel


@functools.lru_cache(maxsize=None)
def _conv_call(n_taps, m_pad, tile_m, cin, cout, apply_prelu, has_residual):
    """Build (and cache) the tiled conv-matmul pallas_call for one config."""
    kernel = _make_conv_kernel(n_taps, apply_prelu, has_residual)
    in_specs = [
        # activations: tiled over M, all taps per step
        pl.BlockSpec((n_taps, tile_m, cin), lambda i: (0, i, 0)),
        # weights: VMEM-resident (constant index_map -> no re-DMA per step)
        pl.BlockSpec((n_taps, cin, cout), lambda i: (0, 0, 0)),
        pl.BlockSpec((1, cout), lambda i: (0, 0)),  # scale (folded BN gamma)
        pl.BlockSpec((1, cout), lambda i: (0, 0)),  # shift (folded BN beta)
        pl.BlockSpec((1, cout), lambda i: (0, 0)),  # PReLU alpha
    ]
    if has_residual:
        in_specs.append(pl.BlockSpec((tile_m, cout), lambda i: (i, 0)))
    return jax.jit(
        pl.pallas_call(
            kernel,
            out_shape=jax.ShapeDtypeStruct((m_pad, cout), jnp.float32),
            grid=(m_pad // tile_m,),
            in_specs=in_specs,
            out_specs=pl.BlockSpec((tile_m, cout), lambda i: (i, 0)),
            compiler_params=_cp(("parallel",)),
        )
    )


def _stage_taps(x, kh, kw, stride, pre_scale=None, pre_shift=None):
    """NHWC f32 -> (T, M, Cin') bf16 tap slabs (one (M, Cin) slab per kernel
    tap; no 9x-wide concatenated im2col matrix).  The optional per-channel
    affine (the folded pre-conv BatchNorm) is applied BEFORE zero padding so
    the fold is exact at the borders, exactly like PyTorch's BN -> Conv."""
    B, H, W, cin = x.shape
    if pre_scale is not None:
        x = x * pre_scale.reshape(1, 1, 1, -1) + pre_shift.reshape(1, 1, 1, -1)
    x = x.astype(jnp.bfloat16)
    pad = (kh - 1) // 2
    if pad:
        x = jnp.pad(x, ((0, 0), (pad, pad), (pad, pad), (0, 0)))
    ho = (H + 2 * pad - kh) // stride + 1
    wo = (W + 2 * pad - kw) // stride + 1
    slabs = []
    for ky in range(kh):
        for kx in range(kw):
            s = x[:, ky:ky + stride * ho:stride, kx:kx + stride * wo:stride, :]
            slabs.append(s.reshape(B * ho * wo, cin))
    taps = jnp.stack(slabs, axis=0)  # (T, M, Cin)
    if cin < 8:  # RGB stem: pad contraction dim for MXU friendliness
        taps = jnp.pad(taps, ((0, 0), (0, 0), (0, 8 - cin)))
    return taps, ho, wo


def conv2d_fused(x, w_taps, *, stride, scale=None, shift=None, prelu_alpha=None,
                 residual=None, pre_scale=None, pre_shift=None):
    """Conv2d(pad=(k-1)//2, bias=False) with fused epilogue:
         y = [PReLU]( conv(x) * scale + shift ) [+ residual]
       plus an optional exact pre-conv BatchNorm fold (pre_scale/pre_shift)."""
    B = x.shape[0]
    T, cin_p, cout = w_taps.shape
    kh = kw = int(round(math.sqrt(T)))  # square kernels only (1x1 / 3x3)
    taps, ho, wo = _stage_taps(x, kh, kw, stride, pre_scale, pre_shift)
    M = B * ho * wo
    tile_m = _TILE_M if M > _TILE_M else _round_up(M, 8)
    m_pad = _round_up(M, tile_m)
    if m_pad != M:
        taps = jnp.pad(taps, ((0, 0), (0, m_pad - M), (0, 0)))

    one = jnp.ones((1, cout), jnp.float32)
    zero = jnp.zeros((1, cout), jnp.float32)
    scale = one if scale is None else scale
    shift = zero if shift is None else shift
    apply_prelu = prelu_alpha is not None
    alpha = prelu_alpha if apply_prelu else one

    args = [taps, w_taps, scale, shift, alpha]
    if residual is not None:
        res = residual.reshape(M, cout)
        if m_pad != M:
            res = jnp.pad(res, ((0, m_pad - M), (0, 0)))
        args.append(res)

    out = _conv_call(T, m_pad, tile_m, cin_p, cout, apply_prelu,
                     residual is not None)(*args)
    if m_pad != M:
        out = out[:M]
    return out.reshape(B, ho, wo, cout)


# ---------------------------------------------------------------------------
# AdaptiveAvgPool2d((1,1)) + EqualLinear fused kernel
# ---------------------------------------------------------------------------
def _pool_linear_kernel(x_ref, w_ref, b_ref, o_ref):
    pooled = jnp.mean(x_ref[...], axis=1)  # global average pool -> (B, C)
    o_ref[...] = (
        jnp.dot(pooled, w_ref[...], preferred_element_type=jnp.float32)
        + b_ref[...]
    )


def pool_and_linear(x, w, b):
    B, H, W, C = x.shape
    N = w.shape[1]
    x3 = x.reshape(B, H * W, C)
    return pl.pallas_call(
        _pool_linear_kernel,
        out_shape=jax.ShapeDtypeStruct((B, N), jnp.float32),
        grid=(1,),
        in_specs=[
            pl.BlockSpec((B, H * W, C), lambda i: (0, 0, 0)),
            pl.BlockSpec((C, N), lambda i: (0, 0)),
            pl.BlockSpec((1, N), lambda i: (0, 0)),
        ],
        out_specs=pl.BlockSpec((B, N), lambda i: (0, 0)),
        compiler_params=_cp(("arbitrary",)),
    )(x3, w, b)


# ---------------------------------------------------------------------------
# IR-50 structure
# ---------------------------------------------------------------------------
def get_blocks(num_layers):
    if num_layers == 50:
        cfg = [(64, 64, 3), (64, 128, 4), (128, 256, 14), (256, 512, 3)]
    elif num_layers == 100:
        cfg = [(64, 64, 3), (64, 128, 13), (128, 256, 30), (256, 512, 3)]
    elif num_layers == 152:
        cfg = [(64, 64, 3), (64, 128, 8), (128, 256, 36), (256, 512, 3)]
    else:
        raise ValueError("num_layers should be 50, 100 or 152")
    units = []
    for in_c, depth, n in cfg:
        units.append((in_c, depth, 2))
        units.extend([(depth, depth, 1)] * (n - 1))
    return tuple(units)


def bottleneck_ir(x, p, stride, has_conv_shortcut):
    """bottleneck_IR: out = BN2(conv2(PReLU(conv1(BN1(x))))) + shortcut(x).
    BN1 is folded into conv1's patch staging; BN2 / shortcut-BN / PReLU /
    residual-add are fused into the conv epilogues."""
    if has_conv_shortcut:
        sc = conv2d_fused(x, p["sc_w"], stride=stride,
                          scale=p["sc_scale"], shift=p["sc_shift"])
    else:
        # MaxPool2d(kernel=1, stride): pure subsampling.
        sc = x[:, ::stride, ::stride, :] if stride > 1 else x
    r = conv2d_fused(x, p["w1"], stride=1, prelu_alpha=p["prelu"],
                     pre_scale=p["bn1_scale"], pre_shift=p["bn1_shift"])
    return conv2d_fused(r, p["w2"], stride=stride,
                        scale=p["bn2_scale"], shift=p["bn2_shift"], residual=sc)


# ---------------------------------------------------------------------------
# Deterministic synthetic parameters
# ---------------------------------------------------------------------------
def _make_conv_weight(key, kh, kw, cin, cout):
    std = math.sqrt(2.0 / (kh * kw * cin))
    return std * jax.random.normal(key, (kh, kw, cin, cout), jnp.float32)


def _prep_conv_weight(w):
    """(KH,KW,Cin,Cout) f32 -> tap-stacked (KH*KW, Cin', Cout) bf16."""
    kh, kw, cin, cout = w.shape
    wt = w.reshape(kh * kw, cin, cout)
    if cin < 8:
        wt = jnp.pad(wt, ((0, 0), (0, 8 - cin), (0, 0)))
    return wt.astype(jnp.bfloat16)


def _make_bn_fold(key, c, eps=1e-5):
    """Eval-mode BatchNorm2d -> per-channel (scale, shift) as (1, C)."""
    k1, k2, k3 = jax.random.split(key, 3)
    gamma = 1.0 + 0.1 * jax.random.normal(k1, (c,), jnp.float32)
    beta = 0.1 * jax.random.normal(k2, (c,), jnp.float32)
    running_mean = 0.1 * jax.random.normal(k3, (c,), jnp.float32)
    running_var = jnp.ones((c,), jnp.float32)
    scale = gamma / jnp.sqrt(running_var + eps)
    shift = beta - running_mean * scale
    return scale.reshape(1, c), shift.reshape(1, c)


def init_params(key, num_layers=50):
    params = {}
    key, k = jax.random.split(key)
    params["input_w"] = _prep_conv_weight(_make_conv_weight(k, 3, 3, 3, 64))
    key, k = jax.random.split(key)
    params["input_bn_scale"], params["input_bn_shift"] = _make_bn_fold(k, 64)
    params["input_prelu"] = 0.25 * jnp.ones((1, 64), jnp.float32)

    body = []
    for in_c, depth, stride in get_blocks(num_layers):
        p = {}
        key, k1, k2, k3, k4 = jax.random.split(key, 5)
        p["bn1_scale"], p["bn1_shift"] = _make_bn_fold(k1, in_c)
        p["w1"] = _prep_conv_weight(_make_conv_weight(k2, 3, 3, in_c, depth))
        p["prelu"] = 0.25 * jnp.ones((1, depth), jnp.float32)
        p["w2"] = _prep_conv_weight(_make_conv_weight(k3, 3, 3, depth, depth))
        p["bn2_scale"], p["bn2_shift"] = _make_bn_fold(k4, depth)
        if in_c != depth:
            key, ks1, ks2 = jax.random.split(key, 3)
            p["sc_w"] = _prep_conv_weight(_make_conv_weight(ks1, 1, 1, in_c, depth))
            p["sc_scale"], p["sc_shift"] = _make_bn_fold(ks2, depth)
        body.append(p)
    params["body"] = body

    # EqualLinear(512, 512, lr_mul=1): weight = randn / lr_mul, bias = 0,
    # scale = (1/sqrt(in_dim)) * lr_mul.  Stored as (in, out) for y = x @ W.
    lr_mul = 1.0
    key, k = jax.random.split(key)
    params["linear_w"] = jax.random.normal(k, (512, 512), jnp.float32) / lr_mul
    params["linear_b"] = jnp.zeros((1, 512), jnp.float32)
    params["linear_scale"] = 1.0 / math.sqrt(512) * lr_mul
    params["lr_mul"] = lr_mul
    return params


# ---------------------------------------------------------------------------
# Forward pass
# ---------------------------------------------------------------------------
def backbone_encoder_forward(params, x_nchw, num_layers, style_count):
    x = jnp.transpose(x_nchw, (0, 2, 3, 1)).astype(jnp.float32)  # NCHW -> NHWC

    # input_layer: Conv2d(3,64,3,1,1,bias=False) -> BN(64) -> PReLU(64)
    # (single fused Pallas call: conv + folded BN + PReLU epilogue)
    x = conv2d_fused(x, params["input_w"], stride=1,
                     scale=params["input_bn_scale"],
                     shift=params["input_bn_shift"],
                     prelu_alpha=params["input_prelu"])

    # body: 24 bottleneck_IR units (IR-50)
    for (in_c, depth, stride), p in zip(get_blocks(num_layers), params["body"]):
        x = bottleneck_ir(x, p, stride, has_conv_shortcut=(in_c != depth))

    # output_pool + view(-1, 512) + EqualLinear (single fused Pallas call)
    w = params["linear_w"] * params["linear_scale"]
    b = params["linear_b"] * params["lr_mul"]
    y = pool_and_linear(x, w, b)  # (B, 512)

    # x.repeat(style_count, 1, 1).permute(1, 0, 2) -> (B, style_count, 512)
    return jnp.transpose(
        jnp.broadcast_to(y[None], (style_count, y.shape[0], y.shape[1])),
        (1, 0, 2),
    )


if __name__ == "__main__":
    stylegan_size = 16  # small synthetic opts.stylegan_size -> style_count = 6
    log_size = int(math.log(stylegan_size, 2))
    style_count = 2 * log_size - 2

    key = jax.random.PRNGKey(0)
    pkey, xkey = jax.random.split(key)
    params = init_params(pkey, num_layers=50)

    # Input: NCHW like PyTorch; 3 channels required by the input conv.
    x = jax.random.normal(xkey, (2, 3, 16, 16), jnp.float32)

    out = backbone_encoder_forward(params, x, 50, style_count)
    out = jax.block_until_ready(out)

    assert out.shape == (2, style_count, 512), out.shape
    assert bool(jnp.all(jnp.isfinite(out)))
    print("KERNEL_OK")
</pallas_src>

<mosaic_0001>
module attributes {stable_mosaic.version = 11 : i64} {
  func.func @kernel(%arg0: i32, %arg1: memref<9x256x8xbf16, #tpu.memory_space<vmem>>, %arg2: memref<9x8x64xbf16, #tpu.memory_space<vmem>>, %arg3: memref<1x64xf32, #tpu.memory_space<vmem>>, %arg4: memref<1x64xf32, #tpu.memory_space<vmem>>, %arg5: memref<1x64xf32, #tpu.memory_space<vmem>>, %arg6: memref<256x64xf32, #tpu.memory_space<vmem>>) attributes {dimension_semantics = [#tpu.dimension_semantics<parallel>], iteration_bounds = array<i64: 2>, scalar_prefetch = 0 : i64, scratch_operands = 0 : i64, tpu.core_type = #tpu.core_type<tc>, window_params = [{transform_indices = @transform_0, window_bounds = array<i64: 9, 256, 8>}, {pipeline_mode = #tpu.pipeline_mode<synchronous>, transform_indices = @transform_1, window_bounds = array<i64: 9, 8, 64>}, {pipeline_mode = #tpu.pipeline_mode<synchronous>, transform_indices = @transform_2, window_bounds = array<i64: 1, 64>}, {pipeline_mode = #tpu.pipeline_mode<synchronous>, transform_indices = @transform_3, window_bounds = array<i64: 1, 64>}, {pipeline_mode = #tpu.pipeline_mode<synchronous>, transform_indices = @transform_4, window_bounds = array<i64: 1, 64>}, {transform_indices = @transform_5, window_bounds = array<i64: 256, 64>}]} {
    %c0 = arith.constant 0 : index
    %c0_0 = arith.constant 0 : index
    %c0_1 = arith.constant 0 : index
    %0 = vector.load %arg1[%c0, %c0_0, %c0_1] : memref<9x256x8xbf16, #tpu.memory_space<vmem>>, vector<1x256x8xbf16>
    %1 = vector.shape_cast %0 : vector<1x256x8xbf16> to vector<256x8xbf16>
    %c0_2 = arith.constant 0 : index
    %c0_3 = arith.constant 0 : index
    %c0_4 = arith.constant 0 : index
    %2 = vector.load %arg2[%c0_2, %c0_3, %c0_4] : memref<9x8x64xbf16, #tpu.memory_space<vmem>>, vector<1x8x64xbf16>
    %3 = vector.shape_cast %2 : vector<1x8x64xbf16> to vector<8x64xbf16>
    %cst = arith.constant dense<0.000000e+00> : vector<256x64xf32>
    %4 = tpu.matmul %1, %3, %cst {dimension_numbers = #tpu.dot_dimension_numbers<[1], [0], [0], [1], [0, 0, 1, 1], [], []>} : vector<256x8xbf16>, vector<8x64xbf16>, vector<256x64xf32> -> vector<256x64xf32>
    %c1 = arith.constant 1 : index
    %c0_5 = arith.constant 0 : index
    %c0_6 = arith.constant 0 : index
    %5 = vector.load %arg1[%c1, %c0_5, %c0_6] : memref<9x256x8xbf16, #tpu.memory_space<vmem>>, vector<1x256x8xbf16>
    %6 = vector.shape_cast %5 : vector<1x256x8xbf16> to vector<256x8xbf16>
    %c1_7 = arith.constant 1 : index
    %c0_8 = arith.constant 0 : index
    %c0_9 = arith.constant 0 : index
    %7 = vector.load %arg2[%c1_7, %c0_8, %c0_9] : memref<9x8x64xbf16, #tpu.memory_space<vmem>>, vector<1x8x64xbf16>
    %8 = vector.shape_cast %7 : vector<1x8x64xbf16> to vector<8x64xbf16>
    %cst_10 = arith.constant dense<0.000000e+00> : vector<256x64xf32>
    %9 = tpu.matmul %6, %8, %cst_10 {dimension_numbers = #tpu.dot_dimension_numbers<[1], [0], [0], [1], [0, 0, 1, 1], [], []>} : vector<256x8xbf16>, vector<8x64xbf16>, vector<256x64xf32> -> vector<256x64xf32>
    %10 = arith.addf %4, %9 : vector<256x64xf32>
    %c2 = arith.constant 2 : index
    %c0_11 = arith.constant 0 : index
    %c0_12 = arith.constant 0 : index
    %11 = vector.load %arg1[%c2, %c0_11, %c0_12] : memref<9x256x8xbf16, #tpu.memory_space<vmem>>, vector<1x256x8xbf16>
    %12 = vector.shape_cast %11 : vector<1x256x8xbf16> to vector<256x8xbf16>
    %c2_13 = arith.constant 2 : index
    %c0_14 = arith.constant 0 : index
    %c0_15 = arith.constant 0 : index
    %13 = vector.load %arg2[%c2_13, %c0_14, %c0_15] : memref<9x8x64xbf16, #tpu.memory_space<vmem>>, vector<1x8x64xbf16>
    %14 = vector.shape_cast %13 : vector<1x8x64xbf16> to vector<8x64xbf16>
    %cst_16 = arith.constant dense<0.000000e+00> : vector<256x64xf32>
    %15 = tpu.matmul %12, %14, %cst_16 {dimension_numbers = #tpu.dot_dimension_numbers<[1], [0], [0], [1], [0, 0, 1, 1], [], []>} : vector<256x8xbf16>, vector<8x64xbf16>, vector<256x64xf32> -> vector<256x64xf32>
    %16 = arith.addf %10, %15 : vector<256x64xf32>
    %c3 = arith.constant 3 : index
    %c0_17 = arith.constant 0 : index
    %c0_18 = arith.constant 0 : index
    %17 = vector.load %arg1[%c3, %c0_17, %c0_18] : memref<9x256x8xbf16, #tpu.memory_space<vmem>>, vector<1x256x8xbf16>
    %18 = vector.shape_cast %17 : vector<1x256x8xbf16> to vector<256x8xbf16>
    %c3_19 = arith.constant 3 : index
    %c0_20 = arith.constant 0 : index
    %c0_21 = arith.constant 0 : index
    %19 = vector.load %arg2[%c3_19, %c0_20, %c0_21] : memref<9x8x64xbf16, #tpu.memory_space<vmem>>, vector<1x8x64xbf16>
    %20 = vector.shape_cast %19 : vector<1x8x64xbf16> to vector<8x64xbf16>
    %cst_22 = arith.constant dense<0.000000e+00> : vector<256x64xf32>
    %21 = tpu.matmul %18, %20, %cst_22 {dimension_numbers = #tpu.dot_dimension_numbers<[1], [0], [0], [1], [0, 0, 1, 1], [], []>} : vector<256x8xbf16>, vector<8x64xbf16>, vector<256x64xf32> -> vector<256x64xf32>
    %22 = arith.addf %16, %21 : vector<256x64xf32>
    %c4 = arith.constant 4 : index
    %c0_23 = arith.constant 0 : index
    %c0_24 = arith.constant 0 : index
    %23 = vector.load %arg1[%c4, %c0_23, %c0_24] : memref<9x256x8xbf16, #tpu.memory_space<vmem>>, vector<1x256x8xbf16>
    %24 = vector.shape_cast %23 : vector<1x256x8xbf16> to vector<256x8xbf16>
    %c4_25 = arith.constant 4 : index
    %c0_26 = arith.constant 0 : index
    %c0_27 = arith.constant 0 : index
    %25 = vector.load %arg2[%c4_25, %c0_26, %c0_27] : memref<9x8x64xbf16, #tpu.memory_space<vmem>>, vector<1x8x64xbf16>
    %26 = vector.shape_cast %25 : vector<1x8x64xbf16> to vector<8x64xbf16>
    %cst_28 = arith.constant dense<0.000000e+00> : vector<256x64xf32>
    %27 = tpu.matmul %24, %26, %cst_28 {dimension_numbers = #tpu.dot_dimension_numbers<[1], [0], [0], [1], [0, 0, 1, 1], [], []>} : vector<256x8xbf16>, vector<8x64xbf16>, vector<256x64xf32> -> vector<256x64xf32>
    %28 = arith.addf %22, %27 : vector<256x64xf32>
    %c5 = arith.constant 5 : index
    %c0_29 = arith.constant 0 : index
    %c0_30 = arith.constant 0 : index
    %29 = vector.load %arg1[%c5, %c0_29, %c0_30] : memref<9x256x8xbf16, #tpu.memory_space<vmem>>, vector<1x256x8xbf16>
    %30 = vector.shape_cast %29 : vector<1x256x8xbf16> to vector<256x8xbf16>
    %c5_31 = arith.constant 5 : index
    %c0_32 = arith.constant 0 : index
    %c0_33 = arith.constant 0 : index
    %31 = vector.load %arg2[%c5_31, %c0_32, %c0_33] : memref<9x8x64xbf16, #tpu.memory_space<vmem>>, vector<1x8x64xbf16>
    %32 = vector.shape_cast %31 : vector<1x8x64xbf16> to vector<8x64xbf16>
    %cst_34 = arith.constant dense<0.000000e+00> : vector<256x64xf32>
    %33 = tpu.matmul %30, %32, %cst_34 {dimension_numbers = #tpu.dot_dimension_numbers<[1], [0], [0], [1], [0, 0, 1, 1], [], []>} : vector<256x8xbf16>, vector<8x64xbf16>, vector<256x64xf32> -> vector<256x64xf32>
    %34 = arith.addf %28, %33 : vector<256x64xf32>
    %c6 = arith.constant 6 : index
    %c0_35 = arith.constant 0 : index
    %c0_36 = arith.constant 0 : index
    %35 = vector.load %arg1[%c6, %c0_35, %c0_36] : memref<9x256x8xbf16, #tpu.memory_space<vmem>>, vector<1x256x8xbf16>
    %36 = vector.shape_cast %35 : vector<1x256x8xbf16> to vector<256x8xbf16>
    %c6_37 = arith.constant 6 : index
    %c0_38 = arith.constant 0 : index
    %c0_39 = arith.constant 0 : index
    %37 = vector.load %arg2[%c6_37, %c0_38, %c0_39] : memref<9x8x64xbf16, #tpu.memory_space<vmem>>, vector<1x8x64xbf16>
    %38 = vector.shape_cast %37 : vector<1x8x64xbf16> to vector<8x64xbf16>
    %cst_40 = arith.constant dense<0.000000e+00> : vector<256x64xf32>
    %39 = tpu.matmul %36, %38, %cst_40 {dimension_numbers = #tpu.dot_dimension_numbers<[1], [0], [0], [1], [0, 0, 1, 1], [], []>} : vector<256x8xbf16>, vector<8x64xbf16>, vector<256x64xf32> -> vector<256x64xf32>
    %40 = arith.addf %34, %39 : vector<256x64xf32>
    %c7 = arith.constant 7 : index
    %c0_41 = arith.constant 0 : index
    %c0_42 = arith.constant 0 : index
    %41 = vector.load %arg1[%c7, %c0_41, %c0_42] : memref<9x256x8xbf16, #tpu.memory_space<vmem>>, vector<1x256x8xbf16>
    %42 = vector.shape_cast %41 : vector<1x256x8xbf16> to vector<256x8xbf16>
    %c7_43 = arith.constant 7 : index
    %c0_44 = arith.constant 0 : index
    %c0_45 = arith.constant 0 : index
    %43 = vector.load %arg2[%c7_43, %c0_44, %c0_45] : memref<9x8x64xbf16, #tpu.memory_space<vmem>>, vector<1x8x64xbf16>
    %44 = vector.shape_cast %43 : vector<1x8x64xbf16> to vector<8x64xbf16>
    %cst_46 = arith.constant dense<0.000000e+00> : vector<256x64xf32>
    %45 = tpu.matmul %42, %44, %cst_46 {dimension_numbers = #tpu.dot_dimension_numbers<[1], [0], [0], [1], [0, 0, 1, 1], [], []>} : vector<256x8xbf16>, vector<8x64xbf16>, vector<256x64xf32> -> vector<256x64xf32>
    %46 = arith.addf %40, %45 : vector<256x64xf32>
    %c8 = arith.constant 8 : index
    %c0_47 = arith.constant 0 : index
    %c0_48 = arith.constant 0 : index
    %47 = vector.load %arg1[%c8, %c0_47, %c0_48] : memref<9x256x8xbf16, #tpu.memory_space<vmem>>, vector<1x256x8xbf16>
    %48 = vector.shape_cast %47 : vector<1x256x8xbf16> to vector<256x8xbf16>
    %c8_49 = arith.constant 8 : index
    %c0_50 = arith.constant 0 : index
    %c0_51 = arith.constant 0 : index
    %49 = vector.load %arg2[%c8_49, %c0_50, %c0_51] : memref<9x8x64xbf16, #tpu.memory_space<vmem>>, vector<1x8x64xbf16>
    %50 = vector.shape_cast %49 : vector<1x8x64xbf16> to vector<8x64xbf16>
    %cst_52 = arith.constant dense<0.000000e+00> : vector<256x64xf32>
    %51 = tpu.matmul %48, %50, %cst_52 {dimension_numbers = #tpu.dot_dimension_numbers<[1], [0], [0], [1], [0, 0, 1, 1], [], []>} : vector<256x8xbf16>, vector<8x64xbf16>, vector<256x64xf32> -> vector<256x64xf32>
    %52 = arith.addf %46, %51 : vector<256x64xf32>
    %c0_53 = arith.constant 0 : index
    %c0_54 = arith.constant 0 : index
    %53 = vector.load %arg3[%c0_53, %c0_54] : memref<1x64xf32, #tpu.memory_space<vmem>>, vector<1x64xf32>
    %54 = vector.broadcast %53 : vector<1x64xf32> to vector<256x64xf32>
    %55 = arith.mulf %52, %54 : vector<256x64xf32>
    %c0_55 = arith.constant 0 : index
    %c0_56 = arith.constant 0 : index
    %56 = vector.load %arg4[%c0_55, %c0_56] : memref<1x64xf32, #tpu.memory_space<vmem>>, vector<1x64xf32>
    %57 = vector.broadcast %56 : vector<1x64xf32> to vector<256x64xf32>
    %58 = arith.addf %55, %57 : vector<256x64xf32>
    %cst_57 = arith.constant 0.000000e+00 : f32
    %59 = vector.broadcast %cst_57 : f32 to vector<256x64xf32>
    %60 = arith.cmpf oge, %58, %59 : vector<256x64xf32>
    %c0_58 = arith.constant 0 : index
    %c0_59 = arith.constant 0 : index
    %61 = vector.load %arg5[%c0_58, %c0_59] : memref<1x64xf32, #tpu.memory_space<vmem>>, vector<1x64xf32>
    %62 = vector.broadcast %61 : vector<1x64xf32> to vector<256x64xf32>
    %63 = arith.mulf %62, %58 : vector<256x64xf32>
    %64 = arith.select %60, %58, %63 : vector<256x64xi1>, vector<256x64xf32>
    %c0_60 = arith.constant 0 : index
    %c0_61 = arith.constant 0 : index
    %65 = vector.load %arg6[%c0_60, %c0_61] : memref<256x64xf32, #tpu.memory_space<vmem>>, vector<256x64xf32>
    tpu.vector_store %arg6[%c0_60, %c0_61], %64 {strides = array<i32>} : memref<256x64xf32, #tpu.memory_space<vmem>>, vector<256x64xf32>,
    return
  }
  func.func @transform_0(%arg0: i32) -> (i32, i32, i32) {
    %c0_i32 = arith.constant 0 : i32
    %c0_i32_0 = arith.constant 0 : i32
    %c0_i32_1 = arith.constant 0 : i32
    return %c0_i32, %arg0, %c0_i32_0 : i32, i32, i32
  }
  func.func @transform_1(%arg0: i32) -> (i32, i32, i32) {
    %c0_i32 = arith.constant 0 : i32
    %c0_i32_0 = arith.constant 0 : i32
    %c0_i32_1 = arith.constant 0 : i32
    %c0_i32_2 = arith.constant 0 : i32
    return %c0_i32, %c0_i32_0, %c0_i32_1 : i32, i32, i32
  }
  func.func @transform_2(%arg0: i32) -> (i32, i32) {
    %c0_i32 = arith.constant 0 : i32
    %c0_i32_0 = arith.constant 0 : i32
    %c0_i32_1 = arith.constant 0 : i32
    return %c0_i32, %c0_i32_0 : i32, i32
  }
  func.func @transform_3(%arg0: i32) -> (i32, i32) {
    %c0_i32 = arith.constant 0 : i32
    %c0_i32_0 = arith.constant 0 : i32
    %c0_i32_1 = arith.constant 0 : i32
    return %c0_i32, %c0_i32_0 : i32, i32
  }
  func.func @transform_4(%arg0: i32) -> (i32, i32) {
    %c0_i32 = arith.constant 0 : i32
    %c0_i32_0 = arith.constant 0 : i32
    %c0_i32_1 = arith.constant 0 : i32
    return %c0_i32, %c0_i32_0 : i32, i32
  }
  func.func @transform_5(%arg0: i32) -> (i32, i32) {
    %c0_i32 = arith.constant 0 : i32
    %c0_i32_0 = arith.constant 0 : i32
    return %arg0, %c0_i32 : i32, i32
  }
}

</mosaic_0001>

<llo_original>
// kernel: tpu_custom_call.1
$region0: #{tpu_custom_call.1}
  #allocation0 [shape = 'u32[]', space=smem, size = 0x4, offset = 0x4, fixed_abs, tag = 'smem constant byte address 0x4 - core index']
  #allocation1 [shape = 'u32[144,128]{1,0:T(1,128)}', space=vmem, size = 0x12000, scoped, tag = 'internal scratch']
  %s0 = inlined_call_operand.vmem [shape: bf16[9,512,8], index: 0, kind: input, shape index: {}]
  %s1 = inlined_call_operand.vmem [shape: bf16[9,8,64], index: 1, kind: input, shape index: {}]
  %s2 = inlined_call_operand.vmem [shape: f32[1,64], index: 2, kind: input, shape index: {}]
  %s3 = inlined_call_operand.vmem [shape: f32[1,64], index: 3, kind: input, shape index: {}]
  %s4 = inlined_call_operand.vmem [shape: f32[1,64], index: 4, kind: input, shape index: {}]
  %s5 = inlined_call_operand.vmem [shape: f32[512,64], index: 5, kind: output, shape index: {}]
  %s6 = sld [smem:[#allocation0]]
  $region94: #{tpu_custom_call.1} parent=0
    _
  %s8 = ssub.s32 1, %s6
  %s9 = scalar_select 0, %s8, %s6
  $region1: #{tpu_custom_call.1} parent=0
    #allocation2 [shape = 'u8[1179648]{0}', space=vmem, size = 0x120000, scoped, tag = 'input window, operand 0']
    loop: start=0, step=1, limit=4
    $region2: #{tpu_custom_call.1} parent=1 // loop_pre_header
      _
    $region3: #{tpu_custom_call.1} parent=1 // loop_header
      %s11 = sphi 0, %s15
      %p12 = scmp.ge.s32.totalorder %s11, 4
      %s21 = sphi 0, %s23
      %s24 = sphi 0, %s21
      %s25 = sphi 0, %s24
      %s41 = sphi 0, %s25
      %s45 = sphi 0, %s45
      %s47 = sphi 0, %s45
      %s48 = sphi 0, %s47
      %s62 = sphi 0, %s48
      %s66 = sphi 0, %s66
      %s68 = sphi 0, %s66
      %s69 = sphi 0, %s68
      %s83 = sphi 0, %s69
      %s87 = sphi 0, %s87
      %s89 = sphi 0, %s87
      %s90 = sphi 0, %s89
      %s104 = sphi 0, %s90
      %s108 = sphi 0, %s108
      %s110 = sphi 0, %s108
      %s111 = sphi 0, %s110
      %s125 = sphi 0, %s111
      %s131 = sphi 0, %s133
      %s134 = sphi 0, %s131
      %s135 = sphi 0, %s134
      %s151 = sphi 0, %s135
    $region4: #{tpu_custom_call.1} parent=1 // loop_header_branch
      %14 = sbr.rel (%p12) target = $region8
    $region5: #{tpu_custom_call.1} parent=1 // loop_body
      %s16 = ssub.s32 %s11, 1
      %s17 = ssub.s32 %s11, 2
      %s18 = sadd.s32 %s11, 1
      %s19 = ssub.s32 %s11, %s18
      %p20 = scmp.eq.s32.totalorder %s19, 0
      %s22 = sadd.s32 %s21, 1
      %s23 = scalar_select %p20, %s21, %s22
      %p26 = pneg %p20
      %p27 = scmp.eq.s32.totalorder %s11, 1
      %p28 = por %p26, %p27
      %p29 = scmp.ne.s32.totalorder %s21, %s24
      %p30 = scmp.eq.s32.totalorder %s11, 0
      %p31 = por %p29, %p30
      %p32 = scmp.ne.s32.totalorder %s21, %s24
      %p33 = scmp.eq.s32.totalorder %s16, 1
      %p34 = por %p32, %p33
      %p35 = scmp.ne.s32.totalorder %s24, %s25
      %p36 = scmp.eq.s32.totalorder %s16, 0
      %p37 = por %p35, %p36
      %p38 = scmp.ne.s32.totalorder %s24, %s25
      %p39 = scmp.eq.s32.totalorder %s17, 1
      %p40 = por %p38, %p39
      %p42 = scmp.ne.s32.totalorder %s25, %s41
      %p43 = scmp.eq.s32.totalorder %s17, 0
      %p44 = por %p42, %p43
      %s46 = sadd.s32 %s45, 1
      %p49 = scmp.eq.s32.totalorder %s11, 1
      %p50 = scmp.ne.s32.totalorder %s45, %s47
      %p51 = scmp.eq.s32.totalorder %s11, 0
      %p52 = por %p50, %p51
      %p53 = scmp.ne.s32.totalorder %s45, %s47
      %p54 = scmp.eq.s32.totalorder %s16, 1
      %p55 = por %p53, %p54
      %p56 = scmp.ne.s32.totalorder %s47, %s48
      %p57 = scmp.eq.s32.totalorder %s16, 0
      %p58 = por %p56, %p57
      %p59 = scmp.ne.s32.totalorder %s47, %s48
      %p60 = scmp.eq.s32.totalorder %s17, 1
      %p61 = por %p59, %p60
      %p63 = scmp.ne.s32.totalorder %s48, %s62
      %p64 = scmp.eq.s32.totalorder %s17, 0
      %p65 = por %p63, %p64
      %s67 = sadd.s32 %s66, 1
      %p70 = scmp.eq.s32.totalorder %s11, 1
      %p71 = scmp.ne.s32.totalorder %s66, %s68
      %p72 = scmp.eq.s32.totalorder %s11, 0
      %p73 = por %p71, %p72
      %p74 = scmp.ne.s32.totalorder %s66, %s68
      %p75 = scmp.eq.s32.totalorder %s16, 1
      %p76 = por %p74, %p75
      %p77 = scmp.ne.s32.totalorder %s68, %s69
      %p78 = scmp.eq.s32.totalorder %s16, 0
      %p79 = por %p77, %p78
      %p80 = scmp.ne.s32.totalorder %s68, %s69
      %p81 = scmp.eq.s32.totalorder %s17, 1
      %p82 = por %p80, %p81
      %p84 = scmp.ne.s32.totalorder %s69, %s83
      %p85 = scmp.eq.s32.totalorder %s17, 0
      %p86 = por %p84, %p85
      %s88 = sadd.s32 %s87, 1
      %p91 = scmp.eq.s32.totalorder %s11, 1
      %p92 = scmp.ne.s32.totalorder %s87, %s89
      %p93 = scmp.eq.s32.totalorder %s11, 0
      %p94 = por %p92, %p93
      %p95 = scmp.ne.s32.totalorder %s87, %s89
      %p96 = scmp.eq.s32.totalorder %s16, 1
      %p97 = por %p95, %p96
      %p98 = scmp.ne.s32.totalorder %s89, %s90
      %p99 = scmp.eq.s32.totalorder %s16, 0
      %p100 = por %p98, %p99
      %p101 = scmp.ne.s32.totalorder %s89, %s90
      %p102 = scmp.eq.s32.totalorder %s17, 1
      %p103 = por %p101, %p102
      %p105 = scmp.ne.s32.totalorder %s90, %s104
      %p106 = scmp.eq.s32.totalorder %s17, 0
      %p107 = por %p105, %p106
      %s109 = sadd.s32 %s108, 1
      %p112 = scmp.eq.s32.totalorder %s11, 1
      %p113 = scmp.ne.s32.totalorder %s108, %s110
      %p114 = scmp.eq.s32.totalorder %s11, 0
      %p115 = por %p113, %p114
      %p116 = scmp.ne.s32.totalorder %s108, %s110
      %p117 = scmp.eq.s32.totalorder %s16, 1
      %p118 = por %p116, %p117
      %p119 = scmp.ne.s32.totalorder %s110, %s111
      %p120 = scmp.eq.s32.totalorder %s16, 0
      %p121 = por %p119, %p120
      %p122 = scmp.ne.s32.totalorder %s110, %s111
      %p123 = scmp.eq.s32.totalorder %s17, 1
      %p124 = por %p122, %p123
      %p126 = scmp.ne.s32.totalorder %s111, %s125
      %p127 = scmp.eq.s32.totalorder %s17, 0
      %p128 = por %p126, %p127
      %s129 = ssub.s32 %s11, %s18
      %p130 = scmp.eq.s32.totalorder %s129, 0
      %s132 = sadd.s32 %s131, 1
      %s133 = scalar_select %p130, %s131, %s132
      %p136 = pneg %p130
      %p137 = scmp.eq.s32.totalorder %s11, 1
      %p138 = por %p136, %p137
      %p139 = scmp.ne.s32.totalorder %s131, %s134
      %p140 = scmp.eq.s32.totalorder %s11, 0
      %p141 = por %p139, %p140
      %p142 = scmp.ne.s32.totalorder %s131, %s134
      %p143 = scmp.eq.s32.totalorder %s16, 1
      %p144 = por %p142, %p143
      %p145 = scmp.ne.s32.totalorder %s134, %s135
      %p146 = scmp.eq.s32.totalorder %s16, 0
      %p147 = por %p145, %p146
      %p148 = scmp.ne.s32.totalorder %s134, %s135
      %p149 = scmp.eq.s32.totalorder %s17, 1
      %p150 = por %p148, %p149
      %p152 = scmp.ne.s32.totalorder %s135, %s151
      %p153 = scmp.eq.s32.totalorder %s17, 0
      %p154 = por %p152, %p153
      %p155 = scmp.le.s32.totalorder 1, %s11
      %p156 = scmp.lt.s32.totalorder %s11, 3
      %p157 = pnand %p155, %p156
      %p158 = pneg %p157
      // Predicated region
      $region9: #{tpu_custom_call.1} parent=5 // pred_check
        _
      $region10: #{tpu_custom_call.1} parent=5 // pred_check_branch
        %160 = sbr.rel (%p157) target = $region12
      $region11: #{tpu_custom_call.1} parent=5 // pred_region
        %s161 = ssub.s32 %s11, 1
        // Predicated region
        $region13: #{tpu_custom_call.1} parent=11 // pred_check
          %p162 = pneg %p58
        $region14: #{tpu_custom_call.1} parent=11 // pred_check_branch
          %164 = sbr.rel (%p162) target = $region16
        $region15: #{tpu_custom_call.1} parent=11 // pred_region
          _
        $region16: #{tpu_custom_call.1} parent=11 // pred_fallthru
          _
        // Predicated region
        $region17: #{tpu_custom_call.1} parent=11 // pred_check
          %p165 = pneg %p79
        $region18: #{tpu_custom_call.1} parent=11 // pred_check_branch
          %167 = sbr.rel (%p165) target = $region20
        $region19: #{tpu_custom_call.1} parent=11 // pred_region
          _
        $region20: #{tpu_custom_call.1} parent=11 // pred_fallthru
          _
        // Predicated region
        $region21: #{tpu_custom_call.1} parent=11 // pred_check
          %p168 = pneg %p100
        $region22: #{tpu_custom_call.1} parent=11 // pred_check_branch
          %170 = sbr.rel (%p168) target = $region24
        $region23: #{tpu_custom_call.1} parent=11 // pred_region
          _
        $region24: #{tpu_custom_call.1} parent=11 // pred_fallthru
          _
        // Predicated region
        $region25: #{tpu_custom_call.1} parent=11 // pred_check
          %p171 = pneg %p121
        $region26: #{tpu_custom_call.1} parent=11 // pred_check_branch
          %173 = sbr.rel (%p171) target = $region28
        $region27: #{tpu_custom_call.1} parent=11 // pred_region
          _
        $region28: #{tpu_custom_call.1} parent=11 // pred_fallthru
          _
      $region12: #{tpu_custom_call.1} parent=5 // pred_fallthru
        _
      %p174 = scmp.lt.s32.totalorder %s11, 2
      // Predicated region
      $region29: #{tpu_custom_call.1} parent=5 // pred_check
        %p175 = pneg %p174
      $region30: #{tpu_custom_call.1} parent=5 // pred_check_branch
        %177 = sbr.rel (%p175) target = $region32
      $region31: #{tpu_custom_call.1} parent=5 // pred_region
        // Predicated region
        $region33: #{tpu_custom_call.1} parent=31 // pred_check
          %p178 = pneg %p31
        $region34: #{tpu_custom_call.1} parent=31 // pred_check_branch
          %180 = sbr.rel (%p178) target = $region36
        $region35: #{tpu_custom_call.1} parent=31 // pred_region
          %s181 = sand.u32 %s21, 1
          %s182 = sand.u32 %s21, 1
          %s183 = smul.addr %s182, 1152
          %s184 = scalar_lea.vmem [#allocation2], %s183
          %s185 = smul.u32 32, %s11
          %s186 = smul.addr %s185, 4
          %s187 = scalar_lea.vmem %s0, %s186
          // Predicated region
          $region37: #{tpu_custom_call.1} parent=35 // pred_check
            _
          $region38: #{tpu_custom_call.1} parent=35 // pred_check_branch
            %189 = sbr.rel (0) target = $region40
          $region39: #{tpu_custom_call.1} parent=35 // pred_region
            // Predicated region
            $region41: #{tpu_custom_call.1} parent=39 // pred_check
              _
            $region42: #{tpu_custom_call.1} parent=39 // pred_check_branch
              %191 = sbr.rel target = $region44
            $region43: #{tpu_custom_call.1} parent=39 // pred_region
              // Predicated region
              $region56: #{tpu_custom_call.1} parent=43 // pred_check
                _
              $region57: #{tpu_custom_call.1} parent=43 // pred_check_branch
                %780 = sbr.rel (0) target = $region59
              $region58: #{tpu_custom_call.1} parent=43 // pred_region
                loop: start=0, step=1, limit=1
                $region60: #{tpu_custom_call.1} parent=58 // loop_pre_header
                  _
                $region61: #{tpu_custom_call.1} parent=58 // loop_header
                  %s782 = sphi 0, %s786
                  %p783 = scmp.ge.s32.totalorder %s782, 1
                  %s787 = sphi %s187, %s187
                  %s788 = sphi %s184, %s184
                $region62: #{tpu_custom_call.1} parent=58 // loop_header_branch
                  %785 = sbr.rel (%p783) target = $region66
                $region63: #{tpu_custom_call.1} parent=58 // loop_body
                  _
                $region64: #{tpu_custom_call.1} parent=58 // loop_footer
                  %s786 = sadd.s32 1, %s782
                $region65: #{tpu_custom_call.1} parent=58 // loop_footer_branch
                  %781 = sbr.rel target = $region61
                $region66: #{tpu_custom_call.1} parent=58 // loop_exit
                  _
                loop: start=0, step=1, limit=1
                $region67: #{tpu_custom_call.1} parent=58 // loop_pre_header
                  _
                $region68: #{tpu_custom_call.1} parent=58 // loop_header
                  %s791 = sphi 0, %s795
                  %p792 = scmp.ge.s32.totalorder %s791, 1
                  %s796 = sphi %s187, %s187
                  %s797 = sphi %s184, %s184
                $region69: #{tpu_custom_call.1} parent=58 // loop_header_branch
                  %794 = sbr.rel (%p792) target = $region73
                $region70: #{tpu_custom_call.1} parent=58 // loop_body
                  %v798 = vld [vmem:[%s796] sm:$0xf]
                  %799 = vst [vmem:[%s797] sm:$0xf] %v798
                  %v800 = vld [vmem:[%s796 + $0x4] sm:$0xf]
                  %801 = vst [vmem:[%s797 + $0x4] sm:$0xf] %v800
                  %v802 = vld [vmem:[%s796 + $0x8] sm:$0xf]
                  %803 = vst [vmem:[%s797 + $0x8] sm:$0xf] %v802
                  %v804 = vld [vmem:[%s796 + $0xc] sm:$0xf]
                  %805 = vst [vmem:[%s797 + $0xc] sm:$0xf] %v804
                  %v806 = vld [vmem:[%s796 + $0x10] sm:$0xf]
                  %807 = vst [vmem:[%s797 + $0x10] sm:$0xf] %v806
                  %v808 = vld [vmem:[%s796 + $0x14] sm:$0xf]
                  %809 = vst [vmem:[%s797 + $0x14] sm:$0xf] %v808
                  %v810 = vld [vmem:[%s796 + $0x18] sm:$0xf]
                  %811 = vst [vmem:[%s797 + $0x18] sm:$0xf] %v810
                  %v812 = vld [vmem:[%s796 + $0x1c] sm:$0xf]
                  %813 = vst [vmem:[%s797 + $0x1c] sm:$0xf] %v812
                  %v814 = vld [vmem:[%s796 + $0x20] sm:$0xf]
                  %815 = vst [vmem:[%s797 + $0x20] sm:$0xf] %v814
                  %v816 = vld [vmem:[%s796 + $0x24] sm:$0xf]
                  %817 = vst [vmem:[%s797 + $0x24] sm:$0xf] %v816
                  %v818 = vld [vmem:[%s796 + $0x28] sm:$0xf]
                  %819 = vst [vmem:[%s797 + $0x28] sm:$0xf] %v818
                  %v820 = vld [vmem:[%s796 + $0x2c] sm:$0xf]
                  %821 = vst [vmem:[%s797 + $0x2c] sm:$0xf] %v820
                  %v822 = vld [vmem:[%s796 + $0x30] sm:$0xf]
                  %823 = vst [vmem:[%s797 + $0x30] sm:$0xf] %v822
                  %v824 = vld [vmem:[%s796 + $0x34] sm:$0xf]
                  %825 = vst [vmem:[%s797 + $0x34] sm:$0xf] %v824
                  %v826 = vld [vmem:[%s796 + $0x38] sm:$0xf]
                  %827 = vst [vmem:[%s797 + $0x38] sm:$0xf] %v826
                  %v828 = vld [vmem:[%s796 + $0x3c] sm:$0xf]
                  %829 = vst [vmem:[%s797 + $0x3c] sm:$0xf] %v828
                  %v830 = vld [vmem:[%s796 + $0x40] sm:$0xf]
                  %831 = vst [vmem:[%s797 + $0x40] sm:$0xf] %v830
                  %v832 = vld [vmem:[%s796 + $0x44] sm:$0xf]
                  %833 = vst [vmem:[%s797 + $0x44] sm:$0xf] %v832
                  %v834 = vld [vmem:[%s796 + $0x48] sm:$0xf]
                  %835 = vst [vmem:[%s797 + $0x48] sm:$0xf] %v834
                  %v836 = vld [vmem:[%s796 + $0x4c] sm:$0xf]
                  %837 = vst [vmem:[%s797 + $0x4c] sm:$0xf] %v836
                  %v838 = vld [vmem:[%s796 + $0x50] sm:$0xf]
                  %839 = vst [vmem:[%s797 + $0x50] sm:$0xf] %v838
                  %v840 = vld [vmem:[%s796 + $0x54] sm:$0xf]
                  %841 = vst [vmem:[%s797 + $0x54] sm:$0xf] %v840
                  %v842 = vld [vmem:[%s796 + $0x58] sm:$0xf]
                  %843 = vst [vmem:[%s797 + $0x58] sm:$0xf] %v842
                  %v844 = vld [vmem:[%s796 + $0x5c] sm:$0xf]
                  %845 = vst [vmem:[%s797 + $0x5c] sm:$0xf] %v844
                  %v846 = vld [vmem:[%s796 + $0x60] sm:$0xf]
                  %847 = vst [vmem:[%s797 + $0x60] sm:$0xf] %v846
                  %v848 = vld [vmem:[%s796 + $0x64] sm:$0xf]
                  %849 = vst [vmem:[%s797 + $0x64] sm:$0xf] %v848
                  %v850 = vld [vmem:[%s796 + $0x68] sm:$0xf]
                  %851 = vst [vmem:[%s797 + $0x68] sm:$0xf] %v850
                  %v852 = vld [vmem:[%s796 + $0x6c] sm:$0xf]
                  %853 = vst [vmem:[%s797 + $0x6c] sm:$0xf] %v852
                  %v854 = vld [vmem:[%s796 + $0x70] sm:$0xf]
                  %855 = vst [vmem:[%s797 + $0x70] sm:$0xf] %v854
                  %v856 = vld [vmem:[%s796 + $0x74] sm:$0xf]
                  %857 = vst [vmem:[%s797 + $0x74] sm:$0xf] %v856
                  %v858 = vld [vmem:[%s796 + $0x78] sm:$0xf]
                  %859 = vst [vmem:[%s797 + $0x78] sm:$0xf] %v858
                  %v860 = vld [vmem:[%s796 + $0x7c] sm:$0xf]
                  %861 = vst [vmem:[%s797 + $0x7c] sm:$0xf] %v860
                  %v862 = vld [vmem:[%s796 + $0x100] sm:$0xf]
                  %863 = vst [vmem:[%s797 + $0x80] sm:$0xf] %v862
                  %v864 = vld [vmem:[%s796 + $0x104] sm:$0xf]
                  %865 = vst [vmem:[%s797 + $0x84] sm:$0xf] %v864
                  %v866 = vld [vmem:[%s796 + $0x108] sm:$0xf]
                  %867 = vst [vmem:[%s797 + $0x88] sm:$0xf] %v866
                  %v868 = vld [vmem:[%s796 + $0x10c] sm:$0xf]
                  %869 = vst [vmem:[%s797 + $0x8c] sm:$0xf] %v868
                  %v870 = vld [vmem:[%s796 + $0x110] sm:$0xf]
                  %871 = vst [vmem:[%s797 + $0x90] sm:$0xf] %v870
                  %v872 = vld [vmem:[%s796 + $0x114] sm:$0xf]
                  %873 = vst [vmem:[%s797 + $0x94] sm:$0xf] %v872
                  %v874 = vld [vmem:[%s796 + $0x118] sm:$0xf]
                  %875 = vst [vmem:[%s797 + $0x98] sm:$0xf] %v874
                  %v876 = vld [vmem:[%s796 + $0x11c] sm:$0xf]
                  %877 = vst [vmem:[%s797 + $0x9c] sm:$0xf] %v876
                  %v878 = vld [vmem:[%s796 + $0x120] sm:$0xf]
                  %879 = vst [vmem:[%s797 + $0xa0] sm:$0xf] %v878
                  %v880 = vld [vmem:[%s796 + $0x124] sm:$0xf]
                  %881 = vst [vmem:[%s797 + $0xa4] sm:$0xf] %v880
                  %v882 = vld [vmem:[%s796 + $0x128] sm:$0xf]
                  %883 = vst [vmem:[%s797 + $0xa8] sm:$0xf] %v882
                  %v884 = vld [vmem:[%s796 + $0x12c] sm:$0xf]
                  %885 = vst [vmem:[%s797 + $0xac] sm:$0xf] %v884
                  %v886 = vld [vmem:[%s796 + $0x130] sm:$0xf]
                  %887 = vst [vmem:[%s797 + $0xb0] sm:$0xf] %v886
                  %v888 = vld [vmem:[%s796 + $0x134] sm:$0xf]
                  %889 = vst [vmem:[%s797 + $0xb4] sm:$0xf] %v888
                  %v890 = vld [vmem:[%s796 + $0x138] sm:$0xf]
                  %891 = vst [vmem:[%s797 + $0xb8] sm:$0xf] %v890
                  %v892 = vld [vmem:[%s796 + $0x13c] sm:$0xf]
                  %893 = vst [vmem:[%s797 + $0xbc] sm:$0xf] %v892
                  %v894 = vld [vmem:[%s796 + $0x140] sm:$0xf]
                  %895 = vst [vmem:[%s797 + $0xc0] sm:$0xf] %v894
                  %v896 = vld [vmem:[%s796 + $0x144] sm:$0xf]
                  %897 = vst [vmem:[%s797 + $0xc4] sm:$0xf] %v896
                  %v898 = vld [vmem:[%s796 + $0x148] sm:$0xf]
                  %899 = vst [vmem:[%s797 + $0xc8] sm:$0xf] %v898
                  %v900 = vld [vmem:[%s796 + $0x14c] sm:$0xf]
                  %901 = vst [vmem:[%s797 + $0xcc] sm:$0xf] %v900
                  %v902 = vld [vmem:[%s796 + $0x150] sm:$0xf]
                  %903 = vst [vmem:[%s797 + $0xd0] sm:$0xf] %v902
                  %v904 = vld [vmem:[%s796 + $0x154] sm:$0xf]
                  %905 = vst [vmem:[%s797 + $0xd4] sm:$0xf] %v904
                  %v906 = vld [vmem:[%s796 + $0x158] sm:$0xf]
                  %907 = vst [vmem:[%s797 + $0xd8] sm:$0xf] %v906
                  %v908 = vld [vmem:[%s796 + $0x15c] sm:$0xf]
                  %909 = vst [vmem:[%s797 + $0xdc] sm:$0xf] %v908
                  %v910 = vld [vmem:[%s796 + $0x160] sm:$0xf]
                  %911 = vst [vmem:[%s797 + $0xe0] sm:$0xf] %v910
                  %v912 = vld [vmem:[%s796 + $0x164] sm:$0xf]
                  %913 = vst [vmem:[%s797 + $0xe4] sm:$0xf] %v912
                  %v914 = vld [vmem:[%s796 + $0x168] sm:$0xf]
                  %915 = vst [vmem:[%s797 + $0xe8] sm:$0xf] %v914
                  %v916 = vld [vmem:[%s796 + $0x16c] sm:$0xf]
                  %917 = vst [vmem:[%s797 + $0xec] sm:$0xf] %v916
                  %v918 = vld [vmem:[%s796 + $0x170] sm:$0xf]
                  %919 = vst [vmem:[%s797 + $0xf0] sm:$0xf] %v918
                  %v920 = vld [vmem:[%s796 + $0x174] sm:$0xf]
                  %921 = vst [vmem:[%s797 + $0xf4] sm:$0xf] %v920
                  %v922 = vld [vmem:[%s796 + $0x178] sm:$0xf]
                  %923 = vst [vmem:[%s797 + $0xf8] sm:$0xf] %v922
                  %v924 = vld [vmem:[%s796 + $0x17c] sm:$0xf]
                  %925 = vst [vmem:[%s797 + $0xfc] sm:$0xf] %v924
                  %v926 = vld [vmem:[%s796 + $0x200] sm:$0xf]
                  %927 = vst [vmem:[%s797 + $0x100] sm:$0xf] %v926
                  %v928 = vld [vmem:[%s796 + $0x204] sm:$0xf]
                  %929 = vst [vmem:[%s797 + $0x104] sm:$0xf] %v928
                  %v930 = vld [vmem:[%s796 + $0x208] sm:$0xf]
                  %931 = vst [vmem:[%s797 + $0x108] sm:$0xf] %v930
                  %v932 = vld [vmem:[%s796 + $0x20c] sm:$0xf]
                  %933 = vst [vmem:[%s797 + $0x10c] sm:$0xf] %v932
                  %v934 = vld [vmem:[%s796 + $0x210] sm:$0xf]
                  %935 = vst [vmem:[%s797 + $0x110] sm:$0xf] %v934
                  %v936 = vld [vmem:[%s796 + $0x214] sm:$0xf]
                  %937 = vst [vmem:[%s797 + $0x114] sm:$0xf] %v936
                  %v938 = vld [vmem:[%s796 + $0x218] sm:$0xf]
                  %939 = vst [vmem:[%s797 + $0x118] sm:$0xf] %v938
                  %v940 = vld [vmem:[%s796 + $0x21c] sm:$0xf]
                  %941 = vst [vmem:[%s797 + $0x11c] sm:$0xf] %v940
                  %v942 = vld [vmem:[%s796 + $0x220] sm:$0xf]
                  %943 = vst [vmem:[%s797 + $0x120] sm:$0xf] %v942
                  %v944 = vld [vmem:[%s796 + $0x224] sm:$0xf]
                  %945 = vst [vmem:[%s797 + $0x124] sm:$0xf] %v944
                  %v946 = vld [vmem:[%s796 + $0x228] sm:$0xf]
                  %947 = vst [vmem:[%s797 + $0x128] sm:$0xf] %v946
                  %v948 = vld [vmem:[%s796 + $0x22c] sm:$0xf]
                  %949 = vst [vmem:[%s797 + $0x12c] sm:$0xf] %v948
                  %v950 = vld [vmem:[%s796 + $0x230] sm:$0xf]
                  %951 = vst [vmem:[%s797 + $0x130] sm:$0xf] %v950
                  %v952 = vld [vmem:[%s796 + $0x234] sm:$0xf]
                  %953 = vst [vmem:[%s797 + $0x134] sm:$0xf] %v952
                  %v954 = vld [vmem:[%s796 + $0x238] sm:$0xf]
                  %955 = vst [vmem:[%s797 + $0x138] sm:$0xf] %v954
                  %v956 = vld [vmem:[%s796 + $0x23c] sm:$0xf]
                  %957 = vst [vmem:[%s797 + $0x13c] sm:$0xf] %v956
                  %v958 = vld [vmem:[%s796 + $0x240] sm:$0xf]
                  %959 = vst [vmem:[%s797 + $0x140] sm:$0xf] %v958
                  %v960 = vld [vmem:[%s796 + $0x244] sm:$0xf]
                  %961 = vst [vmem:[%s797 + $0x144] sm:$0xf] %v960
                  %v962 = vld [vmem:[%s796 + $0x248] sm:$0xf]
                  %963 = vst [vmem:[%s797 + $0x148] sm:$0xf] %v962
                  %v964 = vld [vmem:[%s796 + $0x24c] sm:$0xf]
                  %965 = vst [vmem:[%s797 + $0x14c] sm:$0xf] %v964
                  %v966 = vld [vmem:[%s796 + $0x250] sm:$0xf]
                  %967 = vst [vmem:[%s797 + $0x150] sm:$0xf] %v966
                  %v968 = vld [vmem:[%s796 + $0x254] sm:$0xf]
                  %969 = vst [vmem:[%s797 + $0x154] sm:$0xf] %v968
                  %v970 = vld [vmem:[%s796 + $0x258] sm:$0xf]
                  %971 = vst [vmem:[%s797 + $0x158] sm:$0xf] %v970
                  %v972 = vld [vmem:[%s796 + $0x25c] sm:$0xf]
                  %973 = vst [vmem:[%s797 + $0x15c] sm:$0xf] %v972
                  %v974 = vld [vmem:[%s796 + $0x260] sm:$0xf]
                  %975 = vst [vmem:[%s797 + $0x160] sm:$0xf] %v974
                  %v976 = vld [vmem:[%s796 + $0x264] sm:$0xf]
                  %977 = vst [vmem:[%s797 + $0x164] sm:$0xf] %v976
                  %v978 = vld [vmem:[%s796 + $0x268] sm:$0xf]
                  %979 = vst [vmem:[%s797 + $0x168] sm:$0xf] %v978
                  %v980 = vld [vmem:[%s796 + $0x26c] sm:$0xf]
                  %981 = vst [vmem:[%s797 + $0x16c] sm:$0xf] %v980
                  %v982 = vld [vmem:[%s796 + $0x270] sm:$0xf]
                  %983 = vst [vmem:[%s797 + $0x170] sm:$0xf] %v982
                  %v984 = vld [vmem:[%s796 + $0x274] sm:$0xf]
                  %985 = vst [vmem:[%s797 + $0x174] sm:$0xf] %v984
                  %v986 = vld [vmem:[%s796 + $0x278] sm:$0xf]
                  %987 = vst [vmem:[%s797 + $0x178] sm:$0xf] %v986
                  %v988 = vld [vmem:[%s796 + $0x27c] sm:$0xf]
                  %989 = vst [vmem:[%s797 + $0x17c] sm:$0xf] %v988
                  %v990 = vld [vmem:[%s796 + $0x300] sm:$0xf]
                  %991 = vst [vmem:[%s797 + $0x180] sm:$0xf] %v990
                  %v992 = vld [vmem:[%s796 + $0x304] sm:$0xf]
                  %993 = vst [vmem:[%s797 + $0x184] sm:$0xf] %v992
                  %v994 = vld [vmem:[%s796 + $0x308] sm:$0xf]
                  %995 = vst [vmem:[%s797 + $0x188] sm:$0xf] %v994
                  %v996 = vld [vmem:[%s796 + $0x30c] sm:$0xf]
                  %997 = vst [vmem:[%s797 + $0x18c] sm:$0xf] %v996
                  %v998 = vld [vmem:[%s796 + $0x310] sm:$0xf]
                  %999 = vst [vmem:[%s797 + $0x190] sm:$0xf] %v998
                  %v1000 = vld [vmem:[%s796 + $0x314] sm:$0xf]
                  %1001 = vst [vmem:[%s797 + $0x194] sm:$0xf] %v1000
                  %v1002 = vld [vmem:[%s796 + $0x318] sm:$0xf]
                  %1003 = vst [vmem:[%s797 + $0x198] sm:$0xf] %v1002
                  %v1004 = vld [vmem:[%s796 + $0x31c] sm:$0xf]
                  %1005 = vst [vmem:[%s797 + $0x19c] sm:$0xf] %v1004
                  %v1006 = vld [vmem:[%s796 + $0x320] sm:$0xf]
                  %1007 = vst [vmem:[%s797 + $0x1a0] sm:$0xf] %v1006
                  %v1008 = vld [vmem:[%s796 + $0x324] sm:$0xf]
                  %1009 = vst [vmem:[%s797 + $0x1a4] sm:$0xf] %v1008
                  %v1010 = vld [vmem:[%s796 + $0x328] sm:$0xf]
                  %1011 = vst [vmem:[%s797 + $0x1a8] sm:$0xf] %v1010
                  %v1012 = vld [vmem:[%s796 + $0x32c] sm:$0xf]
                  %1013 = vst [vmem:[%s797 + $0x1ac] sm:$0xf] %v1012
                  %v1014 = vld [vmem:[%s796 + $0x330] sm:$0xf]
                  %1015 = vst [vmem:[%s797 + $0x1b0] sm:$0xf] %v1014
                  %v1016 = vld [vmem:[%s796 + $0x334] sm:$0xf]
                  %1017 = vst [vmem:[%s797 + $0x1b4] sm:$0xf] %v1016
                  %v1018 = vld [vmem:[%s796 + $0x338] sm:$0xf]
                  %1019 = vst [vmem:[%s797 + $0x1b8] sm:$0xf] %v1018
                  %v1020 = vld [vmem:[%s796 + $0x33c] sm:$0xf]
                  %1021 = vst [vmem:[%s797 + $0x1bc] sm:$0xf] %v1020
                  %v1022 = vld [vmem:[%s796 + $0x340] sm:$0xf]
                  %1023 = vst [vmem:[%s797 + $0x1c0] sm:$0xf] %v1022
                  %v1024 = vld [vmem:[%s796 + $0x344] sm:$0xf]
                  %1025 = vst [vmem:[%s797 + $0x1c4] sm:$0xf] %v1024
                  %v1026 = vld [vmem:[%s796 + $0x348] sm:$0xf]
                  %1027 = vst [vmem:[%s797 + $0x1c8] sm:$0xf] %v1026
                  %v1028 = vld [vmem:[%s796 + $0x34c] sm:$0xf]
                  %1029 = vst [vmem:[%s797 + $0x1cc] sm:$0xf] %v1028
                  %v1030 = vld [vmem:[%s796 + $0x350] sm:$0xf]
                  %1031 = vst [vmem:[%s797 + $0x1d0] sm:$0xf] %v1030
                  %v1032 = vld [vmem:[%s796 + $0x354] sm:$0xf]
                  %1033 = vst [vmem:[%s797 + $0x1d4] sm:$0xf] %v1032
                  %v1034 = vld [vmem:[%s796 + $0x358] sm:$0xf]
                  %1035 = vst [vmem:[%s797 + $0x1d8] sm:$0xf] %v1034
                  %v1036 = vld [vmem:[%s796 + $0x35c] sm:$0xf]
                  %1037 = vst [vmem:[%s797 + $0x1dc] sm:$0xf] %v1036
                  %v1038 = vld [vmem:[%s796 + $0x360] sm:$0xf]
                  %1039 = vst [vmem:[%s797 + $0x1e0] sm:$0xf] %v1038
                  %v1040 = vld [vmem:[%s796 + $0x364] sm:$0xf]
                  %1041 = vst [vmem:[%s797 + $0x1e4] sm:$0xf] %v1040
                  %v1042 = vld [vmem:[%s796 + $0x368] sm:$0xf]
                  %1043 = vst [vmem:[%s797 + $0x1e8] sm:$0xf] %v1042
                  %v1044 = vld [vmem:[%s796 + $0x36c] sm:$0xf]
                  %1045 = vst [vmem:[%s797 + $0x1ec] sm:$0xf] %v1044
                  %v1046 = vld [vmem:[%s796 + $0x370] sm:$0xf]
                  %1047 = vst [vmem:[%s797 + $0x1f0] sm:$0xf] %v1046
                  %v1048 = vld [vmem:[%s796 + $0x374] sm:$0xf]
                  %1049 = vst [vmem:[%s797 + $0x1f4] sm:$0xf] %v1048
                  %v1050 = vld [vmem:[%s796 + $0x378] sm:$0xf]
                  %1051 = vst [vmem:[%s797 + $0x1f8] sm:$0xf] %v1050
                  %v1052 = vld [vmem:[%s796 + $0x37c] sm:$0xf]
                  %1053 = vst [vmem:[%s797 + $0x1fc] sm:$0xf] %v1052
                  %v1054 = vld [vmem:[%s796 + $0x400] sm:$0xf]
                  %1055 = vst [vmem:[%s797 + $0x200] sm:$0xf] %v1054
                  %v1056 = vld [vmem:[%s796 + $0x404] sm:$0xf]
                  %1057 = vst [vmem:[%s797 + $0x204] sm:$0xf] %v1056
                  %v1058 = vld [vmem:[%s796 + $0x408] sm:$0xf]
                  %1059 = vst [vmem:[%s797 + $0x208] sm:$0xf] %v1058
                  %v1060 = vld [vmem:[%s796 + $0x40c] sm:$0xf]
                  %1061 = vst [vmem:[%s797 + $0x20c] sm:$0xf] %v1060
                  %v1062 = vld [vmem:[%s796 + $0x410] sm:$0xf]
                  %1063 = vst [vmem:[%s797 + $0x210] sm:$0xf] %v1062
                  %v1064 = vld [vmem:[%s796 + $0x414] sm:$0xf]
                  %1065 = vst [vmem:[%s797 + $0x214] sm:$0xf] %v1064
                  %v1066 = vld [vmem:[%s796 + $0x418] sm:$0xf]
                  %1067 = vst [vmem:[%s797 + $0x218] sm:$0xf] %v1066
                  %v1068 = vld [vmem:[%s796 + $0x41c] sm:$0xf]
                  %1069 = vst [vmem:[%s797 + $0x21c] sm:$0xf] %v1068
                  %v1070 = vld [vmem:[%s796 + $0x420] sm:$0xf]
                  %1071 = vst [vmem:[%s797 + $0x220] sm:$0xf] %v1070
                  %v1072 = vld [vmem:[%s796 + $0x424] sm:$0xf]
                  %1073 = vst [vmem:[%s797 + $0x224] sm:$0xf] %v1072
                  %v1074 = vld [vmem:[%s796 + $0x428] sm:$0xf]
                  %1075 = vst [vmem:[%s797 + $0x228] sm:$0xf] %v1074
                  %v1076 = vld [vmem:[%s796 + $0x42c] sm:$0xf]
                  %1077 = vst [vmem:[%s797 + $0x22c] sm:$0xf] %v1076
                  %v1078 = vld [vmem:[%s796 + $0x430] sm:$0xf]
                  %1079 = vst [vmem:[%s797 + $0x230] sm:$0xf] %v1078
                  %v1080 = vld [vmem:[%s796 + $0x434] sm:$0xf]
                  %1081 = vst [vmem:[%s797 + $0x234] sm:$0xf] %v1080
                  %v1082 = vld [vmem:[%s796 + $0x438] sm:$0xf]
                  %1083 = vst [vmem:[%s797 + $0x238] sm:$0xf] %v1082
                  %v1084 = vld [vmem:[%s796 + $0x43c] sm:$0xf]
                  %1085 = vst [vmem:[%s797 + $0x23c] sm:$0xf] %v1084
                  %v1086 = vld [vmem:[%s796 + $0x440] sm:$0xf]
                  %1087 = vst [vmem:[%s797 + $0x240] sm:$0xf] %v1086
                  %v1088 = vld [vmem:[%s796 + $0x444] sm:$0xf]
                  %1089 = vst [vmem:[%s797 + $0x244] sm:$0xf] %v1088
                  %v1090 = vld [vmem:[%s796 + $0x448] sm:$0xf]
                  %1091 = vst [vmem:[%s797 + $0x248] sm:$0xf] %v1090
                  %v1092 = vld [vmem:[%s796 + $0x44c] sm:$0xf]
                  %1093 = vst [vmem:[%s797 + $0x24c] sm:$0xf] %v1092
                  %v1094 = vld [vmem:[%s796 + $0x450] sm:$0xf]
                  %1095 = vst [vmem:[%s797 + $0x250] sm:$0xf] %v1094
                  %v1096 = vld [vmem:[%s796 + $0x454] sm:$0xf]
                  %1097 = vst [vmem:[%s797 + $0x254] sm:$0xf] %v1096
                  %v1098 = vld [vmem:[%s796 + $0x458] sm:$0xf]
                  %1099 = vst [vmem:[%s797 + $0x258] sm:$0xf] %v1098
                  %v1100 = vld [vmem:[%s796 + $0x45c] sm:$0xf]
                  %1101 = vst [vmem:[%s797 + $0x25c] sm:$0xf] %v1100
                  %v1102 = vld [vmem:[%s796 + $0x460] sm:$0xf]
                  %1103 = vst [vmem:[%s797 + $0x260] sm:$0xf] %v1102
                  %v1104 = vld [vmem:[%s796 + $0x464] sm:$0xf]
                  %1105 = vst [vmem:[%s797 + $0x264] sm:$0xf] %v1104
                  %v1106 = vld [vmem:[%s796 + $0x468] sm:$0xf]
                  %1107 = vst [vmem:[%s797 + $0x268] sm:$0xf] %v1106
                  %v1108 = vld [vmem:[%s796 + $0x46c] sm:$0xf]
                  %1109 = vst [vmem:[%s797 + $0x26c] sm:$0xf] %v1108
                  %v1110 = vld [vmem:[%s796 + $0x470] sm:$0xf]
                  %1111 = vst [vmem:[%s797 + $0x270] sm:$0xf] %v1110
                  %v1112 = vld [vmem:[%s796 + $0x474] sm:$0xf]
                  %1113 = vst [vmem:[%s797 + $0x274] sm:$0xf] %v1112
                  %v1114 = vld [vmem:[%s796 + $0x478] sm:$0xf]
                  %1115 = vst [vmem:[%s797 + $0x278] sm:$0xf] %v1114
                  %v1116 = vld [vmem:[%s796 + $0x47c] sm:$0xf]
                  %1117 = vst [vmem:[%s797 + $0x27c] sm:$0xf] %v1116
                  %v1118 = vld [vmem:[%s796 + $0x500] sm:$0xf]
                  %1119 = vst [vmem:[%s797 + $0x280] sm:$0xf] %v1118
                  %v1120 = vld [vmem:[%s796 + $0x504] sm:$0xf]
                  %1121 = vst [vmem:[%s797 + $0x284] sm:$0xf] %v1120
                  %v1122 = vld [vmem:[%s796 + $0x508] sm:$0xf]
                  %1123 = vst [vmem:[%s797 + $0x288] sm:$0xf] %v1122
                  %v1124 = vld [vmem:[%s796 + $0x50c] sm:$0xf]
                  %1125 = vst [vmem:[%s797 + $0x28c] sm:$0xf] %v1124
                  %v1126 = vld [vmem:[%s796 + $0x510] sm:$0xf]
                  %1127 = vst [vmem:[%s797 + $0x290] sm:$0xf] %v1126
                  %v1128 = vld [vmem:[%s796 + $0x514] sm:$0xf]
                  %1129 = vst [vmem:[%s797 + $0x294] sm:$0xf] %v1128
                  %v1130 = vld [vmem:[%s796 + $0x518] sm:$0xf]
                  %1131 = vst [vmem:[%s797 + $0x298] sm:$0xf] %v1130
                  %v1132 = vld [vmem:[%s796 + $0x51c] sm:$0xf]
                  %1133 = vst [vmem:[%s797 + $0x29c] sm:$0xf] %v1132
                  %v1134 = vld [vmem:[%s796 + $0x520] sm:$0xf]
                  %1135 = vst [vmem:[%s797 + $0x2a0] sm:$0xf] %v1134
                  %v1136 = vld [vmem:[%s796 + $0x524] sm:$0xf]
                  %1137 = vst [vmem:[%s797 + $0x2a4] sm:$0xf] %v1136
                  %v1138 = vld [vmem:[%s796 + $0x528] sm:$0xf]
                  %1139 = vst [vmem:[%s797 + $0x2a8] sm:$0xf] %v1138
                  %v1140 = vld [vmem:[%s796 + $0x52c] sm:$0xf]
                  %1141 = vst [vmem:[%s797 + $0x2ac] sm:$0xf] %v1140
                  %v1142 = vld [vmem:[%s796 + $0x530] sm:$0xf]
                  %1143 = vst [vmem:[%s797 + $0x2b0] sm:$0xf] %v1142
                  %v1144 = vld [vmem:[%s796 + $0x534] sm:$0xf]
                  %1145 = vst [vmem:[%s797 + $0x2b4] sm:$0xf] %v1144
                  %v1146 = vld [vmem:[%s796 + $0x538] sm:$0xf]
                  %1147 = vst [vmem:[%s797 + $0x2b8] sm:$0xf] %v1146
                  %v1148 = vld [vmem:[%s796 + $0x53c] sm:$0xf]
                  %1149 = vst [vmem:[%s797 + $0x2bc] sm:$0xf] %v1148
                  %v1150 = vld [vmem:[%s796 + $0x540] sm:$0xf]
                  %1151 = vst [vmem:[%s797 + $0x2c0] sm:$0xf] %v1150
                  %v1152 = vld [vmem:[%s796 + $0x544] sm:$0xf]
                  %1153 = vst [vmem:[%s797 + $0x2c4] sm:$0xf] %v1152
                  %v1154 = vld [vmem:[%s796 + $0x548] sm:$0xf]
                  %1155 = vst [vmem:[%s797 + $0x2c8] sm:$0xf] %v1154
                  %v1156 = vld [vmem:[%s796 + $0x54c] sm:$0xf]
                  %1157 = vst [vmem:[%s797 + $0x2cc] sm:$0xf] %v1156
                  %v1158 = vld [vmem:[%s796 + $0x550] sm:$0xf]
                  %1159 = vst [vmem:[%s797 + $0x2d0] sm:$0xf] %v1158
                  %v1160 = vld [vmem:[%s796 + $0x554] sm:$0xf]
                  %1161 = vst [vmem:[%s797 + $0x2d4] sm:$0xf] %v1160
                  %v1162 = vld [vmem:[%s796 + $0x558] sm:$0xf]
                  %1163 = vst [vmem:[%s797 + $0x2d8] sm:$0xf] %v1162
                  %v1164 = vld [vmem:[%s796 + $0x55c] sm:$0xf]
                  %1165 = vst [vmem:[%s797 + $0x2dc] sm:$0xf] %v1164
                  %v1166 = vld [vmem:[%s796 + $0x560] sm:$0xf]
                  %1167 = vst [vmem:[%s797 + $0x2e0] sm:$0xf] %v1166
                  %v1168 = vld [vmem:[%s796 + $0x564] sm:$0xf]
                  %1169 = vst [vmem:[%s797 + $0x2e4] sm:$0xf] %v1168
                  %v1170 = vld [vmem:[%s796 + $0x568] sm:$0xf]
                  %1171 = vst [vmem:[%s797 + $0x2e8] sm:$0xf] %v1170
                  %v1172 = vld [vmem:[%s796 + $0x56c] sm:$0xf]
                  %1173 = vst [vmem:[%s797 + $0x2ec] sm:$0xf] %v1172
                  %v1174 = vld [vmem:[%s796 + $0x570] sm:$0xf]
                  %1175 = vst [vmem:[%s797 + $0x2f0] sm:$0xf] %v1174
                  %v1176 = vld [vmem:[%s796 + $0x574] sm:$0xf]
                  %1177 = vst [vmem:[%s797 + $0x2f4] sm:$0xf] %v1176
                  %v1178 = vld [vmem:[%s796 + $0x578] sm:$0xf]
                  %1179 = vst [vmem:[%s797 + $0x2f8] sm:$0xf] %v1178
                  %v1180 = vld [vmem:[%s796 + $0x57c] sm:$0xf]
                  %1181 = vst [vmem:[%s797 + $0x2fc] sm:$0xf] %v1180
                  %v1182 = vld [vmem:[%s796 + $0x600] sm:$0xf]
                  %1183 = vst [vmem:[%s797 + $0x300] sm:$0xf] %v1182
                  %v1184 = vld [vmem:[%s796 + $0x604] sm:$0xf]
                  %1185 = vst [vmem:[%s797 + $0x304] sm:$0xf] %v1184
                  %v1186 = vld [vmem:[%s796 + $0x608] sm:$0xf]
                  %1187 = vst [vmem:[%s797 + $0x308] sm:$0xf] %v1186
                  %v1188 = vld [vmem:[%s796 + $0x60c] sm:$0xf]
                  %1189 = vst [vmem:[%s797 + $0x30c] sm:$0xf] %v1188
                  %v1190 = vld [vmem:[%s796 + $0x610] sm:$0xf]
                  %1191 = vst [vmem:[%s797 + $0x310] sm:$0xf] %v1190
                  %v1192 = vld [vmem:[%s796 + $0x614] sm:$0xf]
                  %1193 = vst [vmem:[%s797 + $0x314] sm:$0xf] %v1192
                  %v1194 = vld [vmem:[%s796 + $0x618] sm:$0xf]
                  %1195 = vst [vmem:[%s797 + $0x318] sm:$0xf] %v1194
                  %v1196 = vld [vmem:[%s796 + $0x61c] sm:$0xf]
                  %1197 = vst [vmem:[%s797 + $0x31c] sm:$0xf] %v1196
                  %v1198 = vld [vmem:[%s796 + $0x620] sm:$0xf]
                  %1199 = vst [vmem:[%s797 + $0x320] sm:$0xf] %v1198
                  %v1200 = vld [vmem:[%s796 + $0x624] sm:$0xf]
                  %1201 = vst [vmem:[%s797 + $0x324] sm:$0xf] %v1200
                  %v1202 = vld [vmem:[%s796 + $0x628] sm:$0xf]
                  %1203 = vst [vmem:[%s797 + $0x328] sm:$0xf] %v1202
                  %v1204 = vld [vmem:[%s796 + $0x62c] sm:$0xf]
                  %1205 = vst [vmem:[%s797 + $0x32c] sm:$0xf] %v1204
                  %v1206 = vld [vmem:[%s796 + $0x630] sm:$0xf]
                  %1207 = vst [vmem:[%s797 + $0x330] sm:$0xf] %v1206
                  %v1208 = vld [vmem:[%s796 + $0x634] sm:$0xf]
                  %1209 = vst [vmem:[%s797 + $0x334] sm:$0xf] %v1208
                  %v1210 = vld [vmem:[%s796 + $0x638] sm:$0xf]
                  %1211 = vst [vmem:[%s797 + $0x338] sm:$0xf] %v1210
                  %v1212 = vld [vmem:[%s796 + $0x63c] sm:$0xf]
                  %1213 = vst [vmem:[%s797 + $0x33c] sm:$0xf] %v1212
                  %v1214 = vld [vmem:[%s796 + $0x640] sm:$0xf]
                  %1215 = vst [vmem:[%s797 + $0x340] sm:$0xf] %v1214
                  %v1216 = vld [vmem:[%s796 + $0x644] sm:$0xf]
                  %1217 = vst [vmem:[%s797 + $0x344] sm:$0xf] %v1216
                  %v1218 = vld [vmem:[%s796 + $0x648] sm:$0xf]
                  %1219 = vst [vmem:[%s797 + $0x348] sm:$0xf] %v1218
                  %v1220 = vld [vmem:[%s796 + $0x64c] sm:$0xf]
                  %1221 = vst [vmem:[%s797 + $0x34c] sm:$0xf] %v1220
                  %v1222 = vld [vmem:[%s796 + $0x650] sm:$0xf]
                  %1223 = vst [vmem:[%s797 + $0x350] sm:$0xf] %v1222
                  %v1224 = vld [vmem:[%s796 + $0x654] sm:$0xf]
                  %1225 = vst [vmem:[%s797 + $0x354] sm:$0xf] %v1224
                  %v1226 = vld [vmem:[%s796 + $0x658] sm:$0xf]
                  %1227 = vst [vmem:[%s797 + $0x358] sm:$0xf] %v1226
                  %v1228 = vld [vmem:[%s796 + $0x65c] sm:$0xf]
                  %1229 = vst [vmem:[%s797 + $0x35c] sm:$0xf] %v1228
                  %v1230 = vld [vmem:[%s796 + $0x660] sm:$0xf]
                  %1231 = vst [vmem:[%s797 + $0x360] sm:$0xf] %v1230
                  %v1232 = vld [vmem:[%s796 + $0x664] sm:$0xf]
                  %1233 = vst [vmem:[%s797 + $0x364] sm:$0xf] %v1232
                  %v1234 = vld [vmem:[%s796 + $0x668] sm:$0xf]
                  %1235 = vst [vmem:[%s797 + $0x368] sm:$0xf] %v1234
                  %v1236 = vld [vmem:[%s796 + $0x66c] sm:$0xf]
                  %1237 = vst [vmem:[%s797 + $0x36c] sm:$0xf] %v1236
                  %v1238 = vld [vmem:[%s796 + $0x670] sm:$0xf]
                  %1239 = vst [vmem:[%s797 + $0x370] sm:$0xf] %v1238
                  %v1240 = vld [vmem:[%s796 + $0x674] sm:$0xf]
                  %1241 = vst [vmem:[%s797 + $0x374] sm:$0xf] %v1240
                  %v1242 = vld [vmem:[%s796 + $0x678] sm:$0xf]
                  %1243 = vst [vmem:[%s797 + $0x378] sm:$0xf] %v1242
                  %v1244 = vld [vmem:[%s796 + $0x67c] sm:$0xf]
                  %1245 = vst [vmem:[%s797 + $0x37c] sm:$0xf] %v1244
                  %v1246 = vld [vmem:[%s796 + $0x700] sm:$0xf]
                  %1247 = vst [vmem:[%s797 + $0x380] sm:$0xf] %v1246
                  %v1248 = vld [vmem:[%s796 + $0x704] sm:$0xf]
                  %1249 = vst [vmem:[%s797 + $0x384] sm:$0xf] %v1248
                  %v1250 = vld [vmem:[%s796 + $0x708] sm:$0xf]
                  %1251 = vst [vmem:[%s797 + $0x388] sm:$0xf] %v1250
                  %v1252 = vld [vmem:[%s796 + $0x70c] sm:$0xf]
                  %1253 = vst [vmem:[%s797 + $0x38c] sm:$0xf] %v1252
                  %v1254 = vld [vmem:[%s796 + $0x710] sm:$0xf]
                  %1255 = vst [vmem:[%s797 + $0x390] sm:$0xf] %v1254
                  %v1256 = vld [vmem:[%s796 + $0x714] sm:$0xf]
                  %1257 = vst [vmem:[%s797 + $0x394] sm:$0xf] %v1256
                  %v1258 = vld [vmem:[%s796 + $0x718] sm:$0xf]
                  %1259 = vst [vmem:[%s797 + $0x398] sm:$0xf] %v1258
                  %v1260 = vld [vmem:[%s796 + $0x71c] sm:$0xf]
                  %1261 = vst [vmem:[%s797 + $0x39c] sm:$0xf] %v1260
                  %v1262 = vld [vmem:[%s796 + $0x720] sm:$0xf]
                  %1263 = vst [vmem:[%s797 + $0x3a0] sm:$0xf] %v1262
                  %v1264 = vld [vmem:[%s796 + $0x724] sm:$0xf]
                  %1265 = vst [vmem:[%s797 + $0x3a4] sm:$0xf] %v1264
                  %v1266 = vld [vmem:[%s796 + $0x728] sm:$0xf]
                  %1267 = vst [vmem:[%s797 + $0x3a8] sm:$0xf] %v1266
                  %v1268 = vld [vmem:[%s796 + $0x72c] sm:$0xf]
                  %1269 = vst [vmem:[%s797 + $0x3ac] sm:$0xf] %v1268
                  %v1270 = vld [vmem:[%s796 + $0x730] sm:$0xf]
                  %1271 = vst [vmem:[%s797 + $0x3b0] sm:$0xf] %v1270
                  %v1272 = vld [vmem:[%s796 + $0x734] sm:$0xf]
                  %1273 = vst [vmem:[%s797 + $0x3b4] sm:$0xf] %v1272
                  %v1274 = vld [vmem:[%s796 + $0x738] sm:$0xf]
                  %1275 = vst [vmem:[%s797 + $0x3b8] sm:$0xf] %v1274
                  %v1276 = vld [vmem:[%s796 + $0x73c] sm:$0xf]
                  %1277 = vst [vmem:[%s797 + $0x3bc] sm:$0xf] %v1276
                  %v1278 = vld [vmem:[%s796 + $0x740] sm:$0xf]
                  %1279 = vst [vmem:[%s797 + $0x3c0] sm:$0xf] %v1278
                  %v1280 = vld [vmem:[%s796 + $0x744] sm:$0xf]
                  %1281 = vst [vmem:[%s797 + $0x3c4] sm:$0xf] %v1280
                  %v1282 = vld [vmem:[%s796 + $0x748] sm:$0xf]
                  %1283 = vst [vmem:[%s797 + $0x3c8] sm:$0xf] %v1282
                  %v1284 = vld [vmem:[%s796 + $0x74c] sm:$0xf]
                  %1285 = vst [vmem:[%s797 + $0x3cc] sm:$0xf] %v1284
                  %v1286 = vld [vmem:[%s796 + $0x750] sm:$0xf]
                  %1287 = vst [vmem:[%s797 + $0x3d0] sm:$0xf] %v1286
                  %v1288 = vld [vmem:[%s796 + $0x754] sm:$0xf]
                  %1289 = vst [vmem:[%s797 + $0x3d4] sm:$0xf] %v1288
                  %v1290 = vld [vmem:[%s796 + $0x758] sm:$0xf]
                  %1291 = vst [vmem:[%s797 + $0x3d8] sm:$0xf] %v1290
                  %v1292 = vld [vmem:[%s796 + $0x75c] sm:$0xf]
                  %1293 = vst [vmem:[%s797 + $0x3dc] sm:$0xf] %v1292
                  %v1294 = vld [vmem:[%s796 + $0x760] sm:$0xf]
                  %1295 = vst [vmem:[%s797 + $0x3e0] sm:$0xf] %v1294
                  %v1296 = vld [vmem:[%s796 + $0x764] sm:$0xf]
                  %1297 = vst [vmem:[%s797 + $0x3e4] sm:$0xf] %v1296
                  %v1298 = vld [vmem:[%s796 + $0x768] sm:$0xf]
                  %1299 = vst [vmem:[%s797 + $0x3e8] sm:$0xf] %v1298
                  %v1300 = vld [vmem:[%s796 + $0x76c] sm:$0xf]
                  %1301 = vst [vmem:[%s797 + $0x3ec] sm:$0xf] %v1300
                  %v1302 = vld [vmem:[%s796 + $0x770] sm:$0xf]
                  %1303 = vst [vmem:[%s797 + $0x3f0] sm:$0xf] %v1302
                  %v1304 = vld [vmem:[%s796 + $0x774] sm:$0xf]
                  %1305 = vst [vmem:[%s797 + $0x3f4] sm:$0xf] %v1304
                  %v1306 = vld [vmem:[%s796 + $0x778] sm:$0xf]
                  %1307 = vst [vmem:[%s797 + $0x3f8] sm:$0xf] %v1306
                  %v1308 = vld [vmem:[%s796 + $0x77c] sm:$0xf]
                  %1309 = vst [vmem:[%s797 + $0x3fc] sm:$0xf] %v1308
                  %v1310 = vld [vmem:[%s796 + $0x800] sm:$0xf]
                  %1311 = vst [vmem:[%s797 + $0x400] sm:$0xf] %v1310
                  %v1312 = vld [vmem:[%s796 + $0x804] sm:$0xf]
                  %1313 = vst [vmem:[%s797 + $0x404] sm:$0xf] %v1312
                  %v1314 = vld [vmem:[%s796 + $0x808] sm:$0xf]
                  %1315 = vst [vmem:[%s797 + $0x408] sm:$0xf] %v1314
                  %v1316 = vld [vmem:[%s796 + $0x80c] sm:$0xf]
                  %1317 = vst [vmem:[%s797 + $0x40c] sm:$0xf] %v1316
                  %v1318 = vld [vmem:[%s796 + $0x810] sm:$0xf]
                  %1319 = vst [vmem:[%s797 + $0x410] sm:$0xf] %v1318
                  %v1320 = vld [vmem:[%s796 + $0x814] sm:$0xf]
                  %1321 = vst [vmem:[%s797 + $0x414] sm:$0xf] %v1320
                  %v1322 = vld [vmem:[%s796 + $0x818] sm:$0xf]
                  %1323 = vst [vmem:[%s797 + $0x418] sm:$0xf] %v1322
                  %v1324 = vld [vmem:[%s796 + $0x81c] sm:$0xf]
                  %1325 = vst [vmem:[%s797 + $0x41c] sm:$0xf] %v1324
                  %v1326 = vld [vmem:[%s796 + $0x820] sm:$0xf]
                  %1327 = vst [vmem:[%s797 + $0x420] sm:$0xf] %v1326
                  %v1328 = vld [vmem:[%s796 + $0x824] sm:$0xf]
                  %1329 = vst [vmem:[%s797 + $0x424] sm:$0xf] %v1328
                  %v1330 = vld [vmem:[%s796 + $0x828] sm:$0xf]
                  %1331 = vst [vmem:[%s797 + $0x428] sm:$0xf] %v1330
                  %v1332 = vld [vmem:[%s796 + $0x82c] sm:$0xf]
                  %1333 = vst [vmem:[%s797 + $0x42c] sm:$0xf] %v1332
                  %v1334 = vld [vmem:[%s796 + $0x830] sm:$0xf]
                  %1335 = vst [vmem:[%s797 + $0x430] sm:$0xf] %v1334
                  %v1336 = vld [vmem:[%s796 + $0x834] sm:$0xf]
                  %1337 = vst [vmem:[%s797 + $0x434] sm:$0xf] %v1336
                  %v1338 = vld [vmem:[%s796 + $0x838] sm:$0xf]
                  %1339 = vst [vmem:[%s797 + $0x438] sm:$0xf] %v1338
                  %v1340 = vld [vmem:[%s796 + $0x83c] sm:$0xf]
                  %1341 = vst [vmem:[%s797 + $0x43c] sm:$0xf] %v1340
                  %v1342 = vld [vmem:[%s796 + $0x840] sm:$0xf]
                  %1343 = vst [vmem:[%s797 + $0x440] sm:$0xf] %v1342
                  %v1344 = vld [vmem:[%s796 + $0x844] sm:$0xf]
                  %1345 = vst [vmem:[%s797 + $0x444] sm:$0xf] %v1344
                  %v1346 = vld [vmem:[%s796 + $0x848] sm:$0xf]
                  %1347 = vst [vmem:[%s797 + $0x448] sm:$0xf] %v1346
                  %v1348 = vld [vmem:[%s796 + $0x84c] sm:$0xf]
                  %1349 = vst [vmem:[%s797 + $0x44c] sm:$0xf] %v1348
                  %v1350 = vld [vmem:[%s796 + $0x850] sm:$0xf]
                  %1351 = vst [vmem:[%s797 + $0x450] sm:$0xf] %v1350
                  %v1352 = vld [vmem:[%s796 + $0x854] sm:$0xf]
                  %1353 = vst [vmem:[%s797 + $0x454] sm:$0xf] %v1352
                  %v1354 = vld [vmem:[%s796 + $0x858] sm:$0xf]
                  %1355 = vst [vmem:[%s797 + $0x458] sm:$0xf] %v1354
                  %v1356 = vld [vmem:[%s796 + $0x85c] sm:$0xf]
                  %1357 = vst [vmem:[%s797 + $0x45c] sm:$0xf] %v1356
                  %v1358 = vld [vmem:[%s796 + $0x860] sm:$0xf]
                  %1359 = vst [vmem:[%s797 + $0x460] sm:$0xf] %v1358
                  %v1360 = vld [vmem:[%s796 + $0x864] sm:$0xf]
                  %1361 = vst [vmem:[%s797 + $0x464] sm:$0xf] %v1360
                  %v1362 = vld [vmem:[%s796 + $0x868] sm:$0xf]
                  %1363 = vst [vmem:[%s797 + $0x468] sm:$0xf] %v1362
                  %v1364 = vld [vmem:[%s796 + $0x86c] sm:$0xf]
                  %1365 = vst [vmem:[%s797 + $0x46c] sm:$0xf] %v1364
                  %v1366 = vld [vmem:[%s796 + $0x870] sm:$0xf]
                  %1367 = vst [vmem:[%s797 + $0x470] sm:$0xf] %v1366
                  %v1368 = vld [vmem:[%s796 + $0x874] sm:$0xf]
                  %1369 = vst [vmem:[%s797 + $0x474] sm:$0xf] %v1368
                  %v1370 = vld [vmem:[%s796 + $0x878] sm:$0xf]
                  %1371 = vst [vmem:[%s797 + $0x478] sm:$0xf] %v1370
                  %v1372 = vld [vmem:[%s796 + $0x87c] sm:$0xf]
                  %1373 = vst [vmem:[%s797 + $0x47c] sm:$0xf] %v1372
                $region71: #{tpu_custom_call.1} parent=58 // loop_footer
                  %s795 = sadd.s32 1, %s791
                $region72: #{tpu_custom_call.1} parent=58 // loop_footer_branch
                  %790 = sbr.rel target = $region68
                $region73: #{tpu_custom_call.1} parent=58 // loop_exit
                  _
              $region59: #{tpu_custom_call.1} parent=43 // pred_fallthru
                _
            $region44: #{tpu_custom_call.1} parent=39 // pred_fallthru
              _
            // Predicated region
            $region45: #{tpu_custom_call.1} parent=39 // pred_check
              _
            $region46: #{tpu_custom_call.1} parent=39 // pred_check_branch
              %193 = sbr.rel (0) target = $region48
            $region47: #{tpu_custom_call.1} parent=39 // pred_region
              loop: start=0, step=1, limit=1
              $region49: #{tpu_custom_call.1} parent=47 // loop_pre_header
                _
              $region50: #{tpu_custom_call.1} parent=47 // loop_header
                %s196 = sphi 0, %s200
                %p197 = scmp.ge.s32.totalorder %s196, 1
                %s201 = sphi %s187, %s187
                %s202 = sphi %s184, %s184
              $region51: #{tpu_custom_call.1} parent=47 // loop_header_branch
                %199 = sbr.rel (%p197) target = $region55
              $region52: #{tpu_custom_call.1} parent=47 // loop_body
                %v203 = vld [vmem:[%s201] sm:$0xf]
                %204 = vst [vmem:[%s202] sm:$0xf] %v203
                %v205 = vld [vmem:[%s201 + $0x4] sm:$0xf]
                %206 = vst [vmem:[%s202 + $0x4] sm:$0xf] %v205
                %v207 = vld [vmem:[%s201 + $0x8] sm:$0xf]
                %208 = vst [vmem:[%s202 + $0x8] sm:$0xf] %v207
                %v209 = vld [vmem:[%s201 + $0xc] sm:$0xf]
                %210 = vst [vmem:[%s202 + $0xc] sm:$0xf] %v209
                %v211 = vld [vmem:[%s201 + $0x10] sm:$0xf]
                %212 = vst [vmem:[%s202 + $0x10] sm:$0xf] %v211
                %v213 = vld [vmem:[%s201 + $0x14] sm:$0xf]
                %214 = vst [vmem:[%s202 + $0x14] sm:$0xf] %v213
                %v215 = vld [vmem:[%s201 + $0x18] sm:$0xf]
                %216 = vst [vmem:[%s202 + $0x18] sm:$0xf] %v215
                %v217 = vld [vmem:[%s201 + $0x1c] sm:$0xf]
                %218 = vst [vmem:[%s202 + $0x1c] sm:$0xf] %v217
                %v219 = vld [vmem:[%s201 + $0x20] sm:$0xf]
                %220 = vst [vmem:[%s202 + $0x20] sm:$0xf] %v219
                %v221 = vld [vmem:[%s201 + $0x24] sm:$0xf]
                %222 = vst [vmem:[%s202 + $0x24] sm:$0xf] %v221
                %v223 = vld [vmem:[%s201 + $0x28] sm:$0xf]
                %224 = vst [vmem:[%s202 + $0x28] sm:$0xf] %v223
                %v225 = vld [vmem:[%s201 + $0x2c] sm:$0xf]
                %226 = vst [vmem:[%s202 + $0x2c] sm:$0xf] %v225
                %v227 = vld [vmem:[%s201 + $0x30] sm:$0xf]
                %228 = vst [vmem:[%s202 + $0x30] sm:$0xf] %v227
                %v229 = vld [vmem:[%s201 + $0x34] sm:$0xf]
                %230 = vst [vmem:[%s202 + $0x34] sm:$0xf] %v229
                %v231 = vld [vmem:[%s201 + $0x38] sm:$0xf]
                %232 = vst [vmem:[%s202 + $0x38] sm:$0xf] %v231
                %v233 = vld [vmem:[%s201 + $0x3c] sm:$0xf]
                %234 = vst [vmem:[%s202 + $0x3c] sm:$0xf] %v233
                %v235 = vld [vmem:[%s201 + $0x40] sm:$0xf]
                %236 = vst [vmem:[%s202 + $0x40] sm:$0xf] %v235
                %v237 = vld [vmem:[%s201 + $0x44] sm:$0xf]
                %238 = vst [vmem:[%s202 + $0x44] sm:$0xf] %v237
                %v239 = vld [vmem:[%s201 + $0x48] sm:$0xf]
                %240 = vst [vmem:[%s202 + $0x48] sm:$0xf] %v239
                %v241 = vld [vmem:[%s201 + $0x4c] sm:$0xf]
                %242 = vst [vmem:[%s202 + $0x4c] sm:$0xf] %v241
                %v243 = vld [vmem:[%s201 + $0x50] sm:$0xf]
                %244 = vst [vmem:[%s202 + $0x50] sm:$0xf] %v243
                %v245 = vld [vmem:[%s201 + $0x54] sm:$0xf]
                %246 = vst [vmem:[%s202 + $0x54] sm:$0xf] %v245
                %v247 = vld [vmem:[%s201 + $0x58] sm:$0xf]
                %248 = vst [vmem:[%s202 + $0x58] sm:$0xf] %v247
                %v249 = vld [vmem:[%s201 + $0x5c] sm:$0xf]
                %250 = vst [vmem:[%s202 + $0x5c] sm:$0xf] %v249
                %v251 = vld [vmem:[%s201 + $0x60] sm:$0xf]
                %252 = vst [vmem:[%s202 + $0x60] sm:$0xf] %v251
                %v253 = vld [vmem:[%s201 + $0x64] sm:$0xf]
                %254 = vst [vmem:[%s202 + $0x64] sm:$0xf] %v253
                %v255 = vld [vmem:[%s201 + $0x68] sm:$0xf]
                %256 = vst [vmem:[%s202 + $0x68] sm:$0xf] %v255
                %v257 = vld [vmem:[%s201 + $0x6c] sm:$0xf]
                %258 = vst [vmem:[%s202 + $0x6c] sm:$0xf] %v257
                %v259 = vld [vmem:[%s201 + $0x70] sm:$0xf]
                %260 = vst [vmem:[%s202 + $0x70] sm:$0xf] %v259
                %v261 = vld [vmem:[%s201 + $0x74] sm:$0xf]
                %262 = vst [vmem:[%s202 + $0x74] sm:$0xf] %v261
                %v263 = vld [vmem:[%s201 + $0x78] sm:$0xf]
                %264 = vst [vmem:[%s202 + $0x78] sm:$0xf] %v263
                %v265 = vld [vmem:[%s201 + $0x7c] sm:$0xf]
                %266 = vst [vmem:[%s202 + $0x7c] sm:$0xf] %v265
                %v267 = vld [vmem:[%s201 + $0x100] sm:$0xf]
                %268 = vst [vmem:[%s202 + $0x80] sm:$0xf] %v267
                %v269 = vld [vmem:[%s201 + $0x104] sm:$0xf]
                %270 = vst [vmem:[%s202 + $0x84] sm:$0xf] %v269
                %v271 = vld [vmem:[%s201 + $0x108] sm:$0xf]
                %272 = vst [vmem:[%s202 + $0x88] sm:$0xf] %v271
                %v273 = vld [vmem:[%s201 + $0x10c] sm:$0xf]
                %274 = vst [vmem:[%s202 + $0x8c] sm:$0xf] %v273
                %v275 = vld [vmem:[%s201 + $0x110] sm:$0xf]
                %276 = vst [vmem:[%s202 + $0x90] sm:$0xf] %v275
                %v277 = vld [vmem:[%s201 + $0x114] sm:$0xf]
                %278 = vst [vmem:[%s202 + $0x94] sm:$0xf] %v277
                %v279 = vld [vmem:[%s201 + $0x118] sm:$0xf]
                %280 = vst [vmem:[%s202 + $0x98] sm:$0xf] %v279
                %v281 = vld [vmem:[%s201 + $0x11c] sm:$0xf]
                %282 = vst [vmem:[%s202 + $0x9c] sm:$0xf] %v281
                %v283 = vld [vmem:[%s201 + $0x120] sm:$0xf]
                %284 = vst [vmem:[%s202 + $0xa0] sm:$0xf] %v283
                %v285 = vld [vmem:[%s201 + $0x124] sm:$0xf]
                %286 = vst [vmem:[%s202 + $0xa4] sm:$0xf] %v285
                %v287 = vld [vmem:[%s201 + $0x128] sm:$0xf]
                %288 = vst [vmem:[%s202 + $0xa8] sm:$0xf] %v287
                %v289 = vld [vmem:[%s201 + $0x12c] sm:$0xf]
                %290 = vst [vmem:[%s202 + $0xac] sm:$0xf] %v289
                %v291 = vld [vmem:[%s201 + $0x130] sm:$0xf]
                %292 = vst [vmem:[%s202 + $0xb0] sm:$0xf] %v291
                %v293 = vld [vmem:[%s201 + $0x134] sm:$0xf]
                %294 = vst [vmem:[%s202 + $0xb4] sm:$0xf] %v293
                %v295 = vld [vmem:[%s201 + $0x138] sm:$0xf]
                %296 = vst [vmem:[%s202 + $0xb8] sm:$0xf] %v295
                %v297 = vld [vmem:[%s201 + $0x13c] sm:$0xf]
                %298 = vst [vmem:[%s202 + $0xbc] sm:$0xf] %v297
                %v299 = vld [vmem:[%s201 + $0x140] sm:$0xf]
                %300 = vst [vmem:[%s202 + $0xc0] sm:$0xf] %v299
                %v301 = vld [vmem:[%s201 + $0x144] sm:$0xf]
                %302 = vst [vmem:[%s202 + $0xc4] sm:$0xf] %v301
                %v303 = vld [vmem:[%s201 + $0x148] sm:$0xf]
                %304 = vst [vmem:[%s202 + $0xc8] sm:$0xf] %v303
                %v305 = vld [vmem:[%s201 + $0x14c] sm:$0xf]
                %306 = vst [vmem:[%s202 + $0xcc] sm:$0xf] %v305
                %v307 = vld [vmem:[%s201 + $0x150] sm:$0xf]
                %308 = vst [vmem:[%s202 + $0xd0] sm:$0xf] %v307
                %v309 = vld [vmem:[%s201 + $0x154] sm:$0xf]
                %310 = vst [vmem:[%s202 + $0xd4] sm:$0xf] %v309
                %v311 = vld [vmem:[%s201 + $0x158] sm:$0xf]
                %312 = vst [vmem:[%s202 + $0xd8] sm:$0xf] %v311
                %v313 = vld [vmem:[%s201 + $0x15c] sm:$0xf]
                %314 = vst [vmem:[%s202 + $0xdc] sm:$0xf] %v313
                %v315 = vld [vmem:[%s201 + $0x160] sm:$0xf]
                %316 = vst [vmem:[%s202 + $0xe0] sm:$0xf] %v315
                %v317 = vld [vmem:[%s201 + $0x164] sm:$0xf]
                %318 = vst [vmem:[%s202 + $0xe4] sm:$0xf] %v317
                %v319 = vld [vmem:[%s201 + $0x168] sm:$0xf]
                %320 = vst [vmem:[%s202 + $0xe8] sm:$0xf] %v319
                %v321 = vld [vmem:[%s201 + $0x16c] sm:$0xf]
                %322 = vst [vmem:[%s202 + $0xec] sm:$0xf] %v321
                %v323 = vld [vmem:[%s201 + $0x170] sm:$0xf]
                %324 = vst [vmem:[%s202 + $0xf0] sm:$0xf] %v323
                %v325 = vld [vmem:[%s201 + $0x174] sm:$0xf]
                %326 = vst [vmem:[%s202 + $0xf4] sm:$0xf] %v325
                %v327 = vld [vmem:[%s201 + $0x178] sm:$0xf]
                %328 = vst [vmem:[%s202 + $0xf8] sm:$0xf] %v327
                %v329 = vld [vmem:[%s201 + $0x17c] sm:$0xf]
                %330 = vst [vmem:[%s202 + $0xfc] sm:$0xf] %v329
                %v331 = vld [vmem:[%s201 + $0x200] sm:$0xf]
                %332 = vst [vmem:[%s202 + $0x100] sm:$0xf] %v331
                %v333 = vld [vmem:[%s201 + $0x204] sm:$0xf]
                %334 = vst [vmem:[%s202 + $0x104] sm:$0xf] %v333
                %v335 = vld [vmem:[%s201 + $0x208] sm:$0xf]
                %336 = vst [vmem:[%s202 + $0x108] sm:$0xf] %v335
                %v337 = vld [vmem:[%s201 + $0x20c] sm:$0xf]
                %338 = vst [vmem:[%s202 + $0x10c] sm:$0xf] %v337
                %v339 = vld [vmem:[%s201 + $0x210] sm:$0xf]
                %340 = vst [vmem:[%s202 + $0x110] sm:$0xf] %v339
                %v341 = vld [vmem:[%s201 + $0x214] sm:$0xf]
                %342 = vst [vmem:[%s202 + $0x114] sm:$0xf] %v341
                %v343 = vld [vmem:[%s201 + $0x218] sm:$0xf]
                %344 = vst [vmem:[%s202 + $0x118] sm:$0xf] %v343
                %v345 = vld [vmem:[%s201 + $0x21c] sm:$0xf]
                %346 = vst [vmem:[%s202 + $0x11c] sm:$0xf] %v345
                %v347 = vld [vmem:[%s201 + $0x220] sm:$0xf]
                %348 = vst [vmem:[%s202 + $0x120] sm:$0xf] %v347
                %v349 = vld [vmem:[%s201 + $0x224] sm:$0xf]
                %350 = vst [vmem:[%s202 + $0x124] sm:$0xf] %v349
                %v351 = vld [vmem:[%s201 + $0x228] sm:$0xf]
                %352 = vst [vmem:[%s202 + $0x128] sm:$0xf] %v351
                %v353 = vld [vmem:[%s201 + $0x22c] sm:$0xf]
                %354 = vst [vmem:[%s202 + $0x12c] sm:$0xf] %v353
                %v355 = vld [vmem:[%s201 + $0x230] sm:$0xf]
                %356 = vst [vmem:[%s202 + $0x130] sm:$0xf] %v355
                %v357 = vld [vmem:[%s201 + $0x234] sm:$0xf]
                %358 = vst [vmem:[%s202 + $0x134] sm:$0xf] %v357
                %v359 = vld [vmem:[%s201 + $0x238] sm:$0xf]
                %360 = vst [vmem:[%s202 + $0x138] sm:$0xf] %v359
                %v361 = vld [vmem:[%s201 + $0x23c] sm:$0xf]
                %362 = vst [vmem:[%s202 + $0x13c] sm:$0xf] %v361
                %v363 = vld [vmem:[%s201 + $0x240] sm:$0xf]
                %364 = vst [vmem:[%s202 + $0x140] sm:$0xf] %v363
                %v365 = vld [vmem:[%s201 + $0x244] sm:$0xf]
                %366 = vst [vmem:[%s202 + $0x144] sm:$0xf] %v365
                %v367 = vld [vmem:[%s201 + $0x248] sm:$0xf]
                %368 = vst [vmem:[%s202 + $0x148] sm:$0xf] %v367
                %v369 = vld [vmem:[%s201 + $0x24c] sm:$0xf]
                %370 = vst [vmem:[%s202 + $0x14c] sm:$0xf] %v369
                %v371 = vld [vmem:[%s201 + $0x250] sm:$0xf]
                %372 = vst [vmem:[%s202 + $0x150] sm:$0xf] %v371
                %v373 = vld [vmem:[%s201 + $0x254] sm:$0xf]
                %374 = vst [vmem:[%s202 + $0x154] sm:$0xf] %v373
                %v375 = vld [vmem:[%s201 + $0x258] sm:$0xf]
                %376 = vst [vmem:[%s202 + $0x158] sm:$0xf] %v375
                %v377 = vld [vmem:[%s201 + $0x25c] sm:$0xf]
                %378 = vst [vmem:[%s202 + $0x15c] sm:$0xf] %v377
                %v379 = vld [vmem:[%s201 + $0x260] sm:$0xf]
                %380 = vst [vmem:[%s202 + $0x160] sm:$0xf] %v379
                %v381 = vld [vmem:[%s201 + $0x264] sm:$0xf]
                %382 = vst [vmem:[%s202 + $0x164] sm:$0xf] %v381
                %v383 = vld [vmem:[%s201 + $0x268] sm:$0xf]
                %384 = vst [vmem:[%s202 + $0x168] sm:$0xf] %v383
                %v385 = vld [vmem:[%s201 + $0x26c] sm:$0xf]
                %386 = vst [vmem:[%s202 + $0x16c] sm:$0xf] %v385
                %v387 = vld [vmem:[%s201 + $0x270] sm:$0xf]
                %388 = vst [vmem:[%s202 + $0x170] sm:$0xf] %v387
                %v389 = vld [vmem:[%s201 + $0x274] sm:$0xf]
                %390 = vst [vmem:[%s202 + $0x174] sm:$0xf] %v389
                %v391 = vld [vmem:[%s201 + $0x278] sm:$0xf]
                %392 = vst [vmem:[%s202 + $0x178] sm:$0xf] %v391
                %v393 = vld [vmem:[%s201 + $0x27c] sm:$0xf]
                %394 = vst [vmem:[%s202 + $0x17c] sm:$0xf] %v393
                %v395 = vld [vmem:[%s201 + $0x300] sm:$0xf]
                %396 = vst [vmem:[%s202 + $0x180] sm:$0xf] %v395
                %v397 = vld [vmem:[%s201 + $0x304] sm:$0xf]
                %398 = vst [vmem:[%s202 + $0x184] sm:$0xf] %v397
                %v399 = vld [vmem:[%s201 + $0x308] sm:$0xf]
                %400 = vst [vmem:[%s202 + $0x188] sm:$0xf] %v399
                %v401 = vld [vmem:[%s201 + $0x30c] sm:$0xf]
                %402 = vst [vmem:[%s202 + $0x18c] sm:$0xf] %v401
                %v403 = vld [vmem:[%s201 + $0x310] sm:$0xf]
                %404 = vst [vmem:[%s202 + $0x190] sm:$0xf] %v403
                %v405 = vld [vmem:[%s201 + $0x314] sm:$0xf]
                %406 = vst [vmem:[%s202 + $0x194] sm:$0xf] %v405
                %v407 = vld [vmem:[%s201 + $0x318] sm:$0xf]
                %408 = vst [vmem:[%s202 + $0x198] sm:$0xf] %v407
                %v409 = vld [vmem:[%s201 + $0x31c] sm:$0xf]
                %410 = vst [vmem:[%s202 + $0x19c] sm:$0xf] %v409
                %v411 = vld [vmem:[%s201 + $0x320] sm:$0xf]
                %412 = vst [vmem:[%s202 + $0x1a0] sm:$0xf] %v411
                %v413 = vld [vmem:[%s201 + $0x324] sm:$0xf]
                %414 = vst [vmem:[%s202 + $0x1a4] sm:$0xf] %v413
                %v415 = vld [vmem:[%s201 + $0x328] sm:$0xf]
                %416 = vst [vmem:[%s202 + $0x1a8] sm:$0xf] %v415
                %v417 = vld [vmem:[%s201 + $0x32c] sm:$0xf]
                %418 = vst [vmem:[%s202 + $0x1ac] sm:$0xf] %v417
                %v419 = vld [vmem:[%s201 + $0x330] sm:$0xf]
                %420 = vst [vmem:[%s202 + $0x1b0] sm:$0xf] %v419
                %v421 = vld [vmem:[%s201 + $0x334] sm:$0xf]
                %422 = vst [vmem:[%s202 + $0x1b4] sm:$0xf] %v421
                %v423 = vld [vmem:[%s201 + $0x338] sm:$0xf]
                %424 = vst [vmem:[%s202 + $0x1b8] sm:$0xf] %v423
                %v425 = vld [vmem:[%s201 + $0x33c] sm:$0xf]
                %426 = vst [vmem:[%s202 + $0x1bc] sm:$0xf] %v425
                %v427 = vld [vmem:[%s201 + $0x340] sm:$0xf]
                %428 = vst [vmem:[%s202 + $0x1c0] sm:$0xf] %v427
                %v429 = vld [vmem:[%s201 + $0x344] sm:$0xf]
                %430 = vst [vmem:[%s202 + $0x1c4] sm:$0xf] %v429
                %v431 = vld [vmem:[%s201 + $0x348] sm:$0xf]
                %432 = vst [vmem:[%s202 + $0x1c8] sm:$0xf] %v431
                %v433 = vld [vmem:[%s201 + $0x34c] sm:$0xf]
                %434 = vst [vmem:[%s202 + $0x1cc] sm:$0xf] %v433
                %v435 = vld [vmem:[%s201 + $0x350] sm:$0xf]
                %436 = vst [vmem:[%s202 + $0x1d0] sm:$0xf] %v435
                %v437 = vld [vmem:[%s201 + $0x354] sm:$0xf]
                %438 = vst [vmem:[%s202 + $0x1d4] sm:$0xf] %v437
                %v439 = vld [vmem:[%s201 + $0x358] sm:$0xf]
                %440 = vst [vmem:[%s202 + $0x1d8] sm:$0xf] %v439
                %v441 = vld [vmem:[%s201 + $0x35c] sm:$0xf]
                %442 = vst [vmem:[%s202 + $0x1dc] sm:$0xf] %v441
                %v443 = vld [vmem:[%s201 + $0x360] sm:$0xf]
                %444 = vst [vmem:[%s202 + $0x1e0] sm:$0xf] %v443
                %v445 = vld [vmem:[%s201 + $0x364] sm:$0xf]
                %446 = vst [vmem:[%s202 + $0x1e4] sm:$0xf] %v445
                %v447 = vld [vmem:[%s201 + $0x368] sm:$0xf]
                %448 = vst [vmem:[%s202 + $0x1e8] sm:$0xf] %v447
                %v449 = vld [vmem:[%s201 + $0x36c] sm:$0xf]
                %450 = vst [vmem:[%s202 + $0x1ec] sm:$0xf] %v449
                %v451 = vld [vmem:[%s201 + $0x370] sm:$0xf]
                %452 = vst [vmem:[%s202 + $0x1f0] sm:$0xf] %v451
                %v453 = vld [vmem:[%s201 + $0x374] sm:$0xf]
                %454 = vst [vmem:[%s202 + $0x1f4] sm:$0xf] %v453
                %v455 = vld [vmem:[%s201 + $0x378] sm:$0xf]
                %456 = vst [vmem:[%s202 + $0x1f8] sm:$0xf] %v455
                %v457 = vld [vmem:[%s201 + $0x37c] sm:$0xf]
                %458 = vst [vmem:[%s202 + $0x1fc] sm:$0xf] %v457
                %v459 = vld [vmem:[%s201 + $0x400] sm:$0xf]
                %460 = vst [vmem:[%s202 + $0x200] sm:$0xf] %v459
                %v461 = vld [vmem:[%s201 + $0x404] sm:$0xf]
                %462 = vst [vmem:[%s202 + $0x204] sm:$0xf] %v461
                %v463 = vld [vmem:[%s201 + $0x408] sm:$0xf]
                %464 = vst [vmem:[%s202 + $0x208] sm:$0xf] %v463
                %v465 = vld [vmem:[%s201 + $0x40c] sm:$0xf]
                %466 = vst [vmem:[%s202 + $0x20c] sm:$0xf] %v465
                %v467 = vld [vmem:[%s201 + $0x410] sm:$0xf]
                %468 = vst [vmem:[%s202 + $0x210] sm:$0xf] %v467
                %v469 = vld [vmem:[%s201 + $0x414] sm:$0xf]
                %470 = vst [vmem:[%s202 + $0x214] sm:$0xf] %v469
                %v471 = vld [vmem:[%s201 + $0x418] sm:$0xf]
                %472 = vst [vmem:[%s202 + $0x218] sm:$0xf] %v471
                %v473 = vld [vmem:[%s201 + $0x41c] sm:$0xf]
                %474 = vst [vmem:[%s202 + $0x21c] sm:$0xf] %v473
                %v475 = vld [vmem:[%s201 + $0x420] sm:$0xf]
                %476 = vst [vmem:[%s202 + $0x220] sm:$0xf] %v475
                %v477 = vld [vmem:[%s201 + $0x424] sm:$0xf]
                %478 = vst [vmem:[%s202 + $0x224] sm:$0xf] %v477
                %v479 = vld [vmem:[%s201 + $0x428] sm:$0xf]
                %480 = vst [vmem:[%s202 + $0x228] sm:$0xf] %v479
                %v481 = vld [vmem:[%s201 + $0x42c] sm:$0xf]
                %482 = vst [vmem:[%s202 + $0x22c] sm:$0xf] %v481
                %v483 = vld [vmem:[%s201 + $0x430] sm:$0xf]
                %484 = vst [vmem:[%s202 + $0x230] sm:$0xf] %v483
                %v485 = vld [vmem:[%s201 + $0x434] sm:$0xf]
                %486 = vst [vmem:[%s202 + $0x234] sm:$0xf] %v485
                %v487 = vld [vmem:[%s201 + $0x438] sm:$0xf]
                %488 = vst [vmem:[%s202 + $0x238] sm:$0xf] %v487
                %v489 = vld [vmem:[%s201 + $0x43c] sm:$0xf]
                %490 = vst [vmem:[%s202 + $0x23c] sm:$0xf] %v489
                %v491 = vld [vmem:[%s201 + $0x440] sm:$0xf]
                %492 = vst [vmem:[%s202 + $0x240] sm:$0xf] %v491
                %v493 = vld [vmem:[%s201 + $0x444] sm:$0xf]
                %494 = vst [vmem:[%s202 + $0x244] sm:$0xf] %v493
                %v495 = vld [vmem:[%s201 + $0x448] sm:$0xf]
                %496 = vst [vmem:[%s202 + $0x248] sm:$0xf] %v495
                %v497 = vld [vmem:[%s201 + $0x44c] sm:$0xf]
                %498 = vst [vmem:[%s202 + $0x24c] sm:$0xf] %v497
                %v499 = vld [vmem:[%s201 + $0x450] sm:$0xf]
                %500 = vst [vmem:[%s202 + $0x250] sm:$0xf] %v499
                %v501 = vld [vmem:[%s201 + $0x454] sm:$0xf]
                %502 = vst [vmem:[%s202 + $0x254] sm:$0xf] %v501
                %v503 = vld [vmem:[%s201 + $0x458] sm:$0xf]
                %504 = vst [vmem:[%s202 + $0x258] sm:$0xf] %v503
                %v505 = vld [vmem:[%s201 + $0x45c] sm:$0xf]
                %506 = vst [vmem:[%s202 + $0x25c] sm:$0xf] %v505
                %v507 = vld [vmem:[%s201 + $0x460] sm:$0xf]
                %508 = vst [vmem:[%s202 + $0x260] sm:$0xf] %v507
                %v509 = vld [vmem:[%s201 + $0x464] sm:$0xf]
                %510 = vst [vmem:[%s202 + $0x264] sm:$0xf] %v509
                %v511 = vld [vmem:[%s201 + $0x468] sm:$0xf]
                %512 = vst [vmem:[%s202 + $0x268] sm:$0xf] %v511
                %v513 = vld [vmem:[%s201 + $0x46c] sm:$0xf]
                %514 = vst [vmem:[%s202 + $0x26c] sm:$0xf] %v513
                %v515 = vld [vmem:[%s201 + $0x470] sm:$0xf]
                %516 = vst [vmem:[%s202 + $0x270] sm:$0xf] %v515
                %v517 = vld [vmem:[%s201 + $0x474] sm:$0xf]
                %518 = vst [vmem:[%s202 + $0x274] sm:$0xf] %v517
                %v519 = vld [vmem:[%s201 + $0x478] sm:$0xf]
                %520 = vst [vmem:[%s202 + $0x278] sm:$0xf] %v519
                %v521 = vld [vmem:[%s201 + $0x47c] sm:$0xf]
                %522 = vst [vmem:[%s202 + $0x27c] sm:$0xf] %v521
                %v523 = vld [vmem:[%s201 + $0x500] sm:$0xf]
                %524 = vst [vmem:[%s202 + $0x280] sm:$0xf] %v523
                %v525 = vld [vmem:[%s201 + $0x504] sm:$0xf]
                %526 = vst [vmem:[%s202 + $0x284] sm:$0xf] %v525
                %v527 = vld [vmem:[%s201 + $0x508] sm:$0xf]
                %528 = vst [vmem:[%s202 + $0x288] sm:$0xf] %v527
                %v529 = vld [vmem:[%s201 + $0x50c] sm:$0xf]
                %530 = vst [vmem:[%s202 + $0x28c] sm:$0xf] %v529
                %v531 = vld [vmem:[%s201 + $0x510] sm:$0xf]
                %532 = vst [vmem:[%s202 + $0x290] sm:$0xf] %v531
                %v533 = vld [vmem:[%s201 + $0x514] sm:$0xf]
                %534 = vst [vmem:[%s202 + $0x294] sm:$0xf] %v533
                %v535 = vld [vmem:[%s201 + $0x518] sm:$0xf]
                %536 = vst [vmem:[%s202 + $0x298] sm:$0xf] %v535
                %v537 = vld [vmem:[%s201 + $0x51c] sm:$0xf]
                %538 = vst [vmem:[%s202 + $0x29c] sm:$0xf] %v537
                %v539 = vld [vmem:[%s201 + $0x520] sm:$0xf]
                %540 = vst [vmem:[%s202 + $0x2a0] sm:$0xf] %v539
                %v541 = vld [vmem:[%s201 + $0x524] sm:$0xf]
                %542 = vst [vmem:[%s202 + $0x2a4] sm:$0xf] %v541
                %v543 = vld [vmem:[%s201 + $0x528] sm:$0xf]
                %544 = vst [vmem:[%s202 + $0x2a8] sm:$0xf] %v543
                %v545 = vld [vmem:[%s201 + $0x52c] sm:$0xf]
                %546 = vst [vmem:[%s202 + $0x2ac] sm:$0xf] %v545
                %v547 = vld [vmem:[%s201 + $0x530] sm:$0xf]
                %548 = vst [vmem:[%s202 + $0x2b0] sm:$0xf] %v547
                %v549 = vld [vmem:[%s201 + $0x534] sm:$0xf]
                %550 = vst [vmem:[%s202 + $0x2b4] sm:$0xf] %v549
                %v551 = vld [vmem:[%s201 + $0x538] sm:$0xf]
                %552 = vst [vmem:[%s202 + $0x2b8] sm:$0xf] %v551
                %v553 = vld [vmem:[%s201 + $0x53c] sm:$0xf]
                %554 = vst [vmem:[%s202 + $0x2bc] sm:$0xf] %v553
                %v555 = vld [vmem:[%s201 + $0x540] sm:$0xf]
                %556 = vst [vmem:[%s202 + $0x2c0] sm:$0xf] %v555
                %v557 = vld [vmem:[%s201 + $0x544] sm:$0xf]
                %558 = vst [vmem:[%s202 + $0x2c4] sm:$0xf] %v557
                %v559 = vld [vmem:[%s201 + $0x548] sm:$0xf]
                %560 = vst [vmem:[%s202 + $0x2c8] sm:$0xf] %v559
                %v561 = vld [vmem:[%s201 + $0x54c] sm:$0xf]
                %562 = vst [vmem:[%s202 + $0x2cc] sm:$0xf] %v561
                %v563 = vld [vmem:[%s201 + $0x550] sm:$0xf]
                %564 = vst [vmem:[%s202 + $0x2d0] sm:$0xf] %v563
                %v565 = vld [vmem:[%s201 + $0x554] sm:$0xf]
                %566 = vst [vmem:[%s202 + $0x2d4] sm:$0xf] %v565
                %v567 = vld [vmem:[%s201 + $0x558] sm:$0xf]
                %568 = vst [vmem:[%s202 + $0x2d8] sm:$0xf] %v567
                %v569 = vld [vmem:[%s201 + $0x55c] sm:$0xf]
                %570 = vst [vmem:[%s202 + $0x2dc] sm:$0xf] %v569
                %v571 = vld [vmem:[%s201 + $0x560] sm:$0xf]
                %572 = vst [vmem:[%s202 + $0x2e0] sm:$0xf] %v571
                %v573 = vld [vmem:[%s201 + $0x564] sm:$0xf]
                %574 = vst [vmem:[%s202 + $0x2e4] sm:$0xf] %v573
                %v575 = vld [vmem:[%s201 + $0x568] sm:$0xf]
                %576 = vst [vmem:[%s202 + $0x2e8] sm:$0xf] %v575
                %v577 = vld [vmem:[%s201 + $0x56c] sm:$0xf]
                %578 = vst [vmem:[%s202 + $0x2ec] sm:$0xf] %v577
                %v579 = vld [vmem:[%s201 + $0x570] sm:$0xf]
                %580 = vst [vmem:[%s202 + $0x2f0] sm:$0xf] %v579
                %v581 = vld [vmem:[%s201 + $0x574] sm:$0xf]
                %582 = vst [vmem:[%s202 + $0x2f4] sm:$0xf] %v581
                %v583 = vld [vmem:[%s201 + $0x578] sm:$0xf]
                %584 = vst [vmem:[%s202 + $0x2f8] sm:$0xf] %v583
                %v585 = vld [vmem:[%s201 + $0x57c] sm:$0xf]
                %586 = vst [vmem:[%s202 + $0x2fc] sm:$0xf] %v585
                %v587 = vld [vmem:[%s201 + $0x600] sm:$0xf]
                %588 = vst [vmem:[%s202 + $0x300] sm:$0xf] %v587
                %v589 = vld [vmem:[%s201 + $0x604] sm:$0xf]
                %590 = vst [vmem:[%s202 + $0x304] sm:$0xf] %v589
                %v591 = vld [vmem:[%s201 + $0x608] sm:$0xf]
                %592 = vst [vmem:[%s202 + $0x308] sm:$0xf] %v591
                %v593 = vld [vmem:[%s201 + $0x60c] sm:$0xf]
                %594 = vst [vmem:[%s202 + $0x30c] sm:$0xf] %v593
                %v595 = vld [vmem:[%s201 + $0x610] sm:$0xf]
                %596 = vst [vmem:[%s202 + $0x310] sm:$0xf] %v595
                %v597 = vld [vmem:[%s201 + $0x614] sm:$0xf]
                %598 = vst [vmem:[%s202 + $0x314] sm:$0xf] %v597
                %v599 = vld [vmem:[%s201 + $0x618] sm:$0xf]
                %600 = vst [vmem:[%s202 + $0x318] sm:$0xf] %v599
                %v601 = vld [vmem:[%s201 + $0x61c] sm:$0xf]
                %602 = vst [vmem:[%s202 + $0x31c] sm:$0xf] %v601
                %v603 = vld [vmem:[%s201 + $0x620] sm:$0xf]
                %604 = vst [vmem:[%s202 + $0x320] sm:$0xf] %v603
                %v605 = vld [vmem:[%s201 + $0x624] sm:$0xf]
                %606 = vst [vmem:[%s202 + $0x324] sm:$0xf] %v605
                %v607 = vld [vmem:[%s201 + $0x628] sm:$0xf]
                %608 = vst [vmem:[%s202 + $0x328] sm:$0xf] %v607
                %v609 = vld [vmem:[%s201 + $0x62c] sm:$0xf]
                %610 = vst [vmem:[%s202 + $0x32c] sm:$0xf] %v609
                %v611 = vld [vmem:[%s201 + $0x630] sm:$0xf]
                %612 = vst [vmem:[%s202 + $0x330] sm:$0xf] %v611
                %v613 = vld [vmem:[%s201 + $0x634] sm:$0xf]
                %614 = vst [vmem:[%s202 + $0x334] sm:$0xf] %v613
                %v615 = vld [vmem:[%s201 + $0x638] sm:$0xf]
                %616 = vst [vmem:[%s202 + $0x338] sm:$0xf] %v615
                %v617 = vld [vmem:[%s201 + $0x63c] sm:$0xf]
                %618 = vst [vmem:[%s202 + $0x33c] sm:$0xf] %v617
                %v619 = vld [vmem:[%s201 + $0x640] sm:$0xf]
                %620 = vst [vmem:[%s202 + $0x340] sm:$0xf] %v619
                %v621 = vld [vmem:[%s201 + $0x644] sm:$0xf]
                %622 = vst [vmem:[%s202 + $0x344] sm:$0xf] %v621
                %v623 = vld [vmem:[%s201 + $0x648] sm:$0xf]
                %624 = vst [vmem:[%s202 + $0x348] sm:$0xf] %v623
                %v625 = vld [vmem:[%s201 + $0x64c] sm:$0xf]
                %626 = vst [vmem:[%s202 + $0x34c] sm:$0xf] %v625
                %v627 = vld [vmem:[%s201 + $0x650] sm:$0xf]
                %628 = vst [vmem:[%s202 + $0x350] sm:$0xf] %v627
                %v629 = vld [vmem:[%s201 + $0x654] sm:$0xf]
                %630 = vst [vmem:[%s202 + $0x354] sm:$0xf] %v629
                %v631 = vld [vmem:[%s201 + $0x658] sm:$0xf]
                %632 = vst [vmem:[%s202 + $0x358] sm:$0xf] %v631
                %v633 = vld [vmem:[%s201 + $0x65c] sm:$0xf]
                %634 = vst [vmem:[%s202 + $0x35c] sm:$0xf] %v633
                %v635 = vld [vmem:[%s201 + $0x660] sm:$0xf]
                %636 = vst [vmem:[%s202 + $0x360] sm:$0xf] %v635
                %v637 = vld [vmem:[%s201 + $0x664] sm:$0xf]
                %638 = vst [vmem:[%s202 + $0x364] sm:$0xf] %v637
                %v639 = vld [vmem:[%s201 + $0x668] sm:$0xf]
                %640 = vst [vmem:[%s202 + $0x368] sm:$0xf] %v639
                %v641 = vld [vmem:[%s201 + $0x66c] sm:$0xf]
                %642 = vst [vmem:[%s202 + $0x36c] sm:$0xf] %v641
                %v643 = vld [vmem:[%s201 + $0x670] sm:$0xf]
                %644 = vst [vmem:[%s202 + $0x370] sm:$0xf] %v643
                %v645 = vld [vmem:[%s201 + $0x674] sm:$0xf]
                %646 = vst [vmem:[%s202 + $0x374] sm:$0xf] %v645
                %v647 = vld [vmem:[%s201 + $0x678] sm:$0xf]
                %648 = vst [vmem:[%s202 + $0x378] sm:$0xf] %v647
                %v649 = vld [vmem:[%s201 + $0x67c] sm:$0xf]
                %650 = vst [vmem:[%s202 + $0x37c] sm:$0xf] %v649
                %v651 = vld [vmem:[%s201 + $0x700] sm:$0xf]
                %652 = vst [vmem:[%s202 + $0x380] sm:$0xf] %v651
                %v653 = vld [vmem:[%s201 + $0x704] sm:$0xf]
                %654 = vst [vmem:[%s202 + $0x384] sm:$0xf] %v653
                %v655 = vld [vmem:[%s201 + $0x708] sm:$0xf]
                %656 = vst [vmem:[%s202 + $0x388] sm:$0xf] %v655
                %v657 = vld [vmem:[%s201 + $0x70c] sm:$0xf]
                %658 = vst [vmem:[%s202 + $0x38c] sm:$0xf] %v657
                %v659 = vld [vmem:[%s201 + $0x710] sm:$0xf]
                %660 = vst [vmem:[%s202 + $0x390] sm:$0xf] %v659
                %v661 = vld [vmem:[%s201 + $0x714] sm:$0xf]
                %662 = vst [vmem:[%s202 + $0x394] sm:$0xf] %v661
                %v663 = vld [vmem:[%s201 + $0x718] sm:$0xf]
                %664 = vst [vmem:[%s202 + $0x398] sm:$0xf] %v663
                %v665 = vld [vmem:[%s201 + $0x71c] sm:$0xf]
                %666 = vst [vmem:[%s202 + $0x39c] sm:$0xf] %v665
                %v667 = vld [vmem:[%s201 + $0x720] sm:$0xf]
                %668 = vst [vmem:[%s202 + $0x3a0] sm:$0xf] %v667
                %v669 = vld [vmem:[%s201 + $0x724] sm:$0xf]
                %670 = vst [vmem:[%s202 + $0x3a4] sm:$0xf] %v669
                %v671 = vld [vmem:[%s201 + $0x728] sm:$0xf]
                %672 = vst [vmem:[%s202 + $0x3a8] sm:$0xf] %v671
                %v673 = vld [vmem:[%s201 + $0x72c] sm:$0xf]
                %674 = vst [vmem:[%s202 + $0x3ac] sm:$0xf] %v673
                %v675 = vld [vmem:[%s201 + $0x730] sm:$0xf]
                %676 = vst [vmem:[%s202 + $0x3b0] sm:$0xf] %v675
                %v677 = vld [vmem:[%s201 + $0x734] sm:$0xf]
                %678 = vst [vmem:[%s202 + $0x3b4] sm:$0xf] %v677
                %v679 = vld [vmem:[%s201 + $0x738] sm:$0xf]
                %680 = vst [vmem:[%s202 + $0x3b8] sm:$0xf] %v679
                %v681 = vld [vmem:[%s201 + $0x73c] sm:$0xf]
                %682 = vst [vmem:[%s202 + $0x3bc] sm:$0xf] %v681
                %v683 = vld [vmem:[%s201 + $0x740] sm:$0xf]
                %684 = vst [vmem:[%s202 + $0x3c0] sm:$0xf] %v683
                %v685 = vld [vmem:[%s201 + $0x744] sm:$0xf]
                %686 = vst [vmem:[%s202 + $0x3c4] sm:$0xf] %v685
                %v687 = vld [vmem:[%s201 + $0x748] sm:$0xf]
                %688 = vst [vmem:[%s202 + $0x3c8] sm:$0xf] %v687
                %v689 = vld [vmem:[%s201 + $0x74c] sm:$0xf]
                %690 = vst [vmem:[%s202 + $0x3cc] sm:$0xf] %v689
                %v691 = vld [vmem:[%s201 + $0x750] sm:$0xf]
                %692 = vst [vmem:[%s202 + $0x3d0] sm:$0xf] %v691
                %v693 = vld [vmem:[%s201 + $0x754] sm:$0xf]
                %694 = vst [vmem:[%s202 + $0x3d4] sm:$0xf] %v693
                %v695 = vld [vmem:[%s201 + $0x758] sm:$0xf]
                %696 = vst [vmem:[%s202 + $0x3d8] sm:$0xf] %v695
                %v697 = vld [vmem:[%s201 + $0x75c] sm:$0xf]
                %698 = vst [vmem:[%s202 + $0x3dc] sm:$0xf] %v697
                %v699 = vld [vmem:[%s201 + $0x760] sm:$0xf]
                %700 = vst [vmem:[%s202 + $0x3e0] sm:$0xf] %v699
                %v701 = vld [vmem:[%s201 + $0x764] sm:$0xf]
                %702 = vst [vmem:[%s202 + $0x3e4] sm:$0xf] %v701
                %v703 = vld [vmem:[%s201 + $0x768] sm:$0xf]
                %704 = vst [vmem:[%s202 + $0x3e8] sm:$0xf] %v703
                %v705 = vld [vmem:[%s201 + $0x76c] sm:$0xf]
                %706 = vst [vmem:[%s202 + $0x3ec] sm:$0xf] %v705
                %v707 = vld [vmem:[%s201 + $0x770] sm:$0xf]
                %708 = vst [vmem:[%s202 + $0x3f0] sm:$0xf] %v707
                %v709 = vld [vmem:[%s201 + $0x774] sm:$0xf]
                %710 = vst [vmem:[%s202 + $0x3f4] sm:$0xf] %v709
                %v711 = vld [vmem:[%s201 + $0x778] sm:$0xf]
                %712 = vst [vmem:[%s202 + $0x3f8] sm:$0xf] %v711
                %v713 = vld [vmem:[%s201 + $0x77c] sm:$0xf]
                %714 = vst [vmem:[%s202 + $0x3fc] sm:$0xf] %v713
                %v715 = vld [vmem:[%s201 + $0x800] sm:$0xf]
                %716 = vst [vmem:[%s202 + $0x400] sm:$0xf] %v715
                %v717 = vld [vmem:[%s201 + $0x804] sm:$0xf]
                %718 = vst [vmem:[%s202 + $0x404] sm:$0xf] %v717
                %v719 = vld [vmem:[%s201 + $0x808] sm:$0xf]
                %720 = vst [vmem:[%s202 + $0x408] sm:$0xf] %v719
                %v721 = vld [vmem:[%s201 + $0x80c] sm:$0xf]
                %722 = vst [vmem:[%s202 + $0x40c] sm:$0xf] %v721
                %v723 = vld [vmem:[%s201 + $0x810] sm:$0xf]
                %724 = vst [vmem:[%s202 + $0x410] sm:$0xf] %v723
                %v725 = vld [vmem:[%s201 + $0x814] sm:$0xf]
                %726 = vst [vmem:[%s202 + $0x414] sm:$0xf] %v725
                %v727 = vld [vmem:[%s201 + $0x818] sm:$0xf]
                %728 = vst [vmem:[%s202 + $0x418] sm:$0xf] %v727
                %v729 = vld [vmem:[%s201 + $0x81c] sm:$0xf]
                %730 = vst [vmem:[%s202 + $0x41c] sm:$0xf] %v729
                %v731 = vld [vmem:[%s201 + $0x820] sm:$0xf]
                %732 = vst [vmem:[%s202 + $0x420] sm:$0xf] %v731
                %v733 = vld [vmem:[%s201 + $0x824] sm:$0xf]
                %734 = vst [vmem:[%s202 + $0x424] sm:$0xf] %v733
                %v735 = vld [vmem:[%s201 + $0x828] sm:$0xf]
                %736 = vst [vmem:[%s202 + $0x428] sm:$0xf] %v735
                %v737 = vld [vmem:[%s201 + $0x82c] sm:$0xf]
                %738 = vst [vmem:[%s202 + $0x42c] sm:$0xf] %v737
                %v739 = vld [vmem:[%s201 + $0x830] sm:$0xf]
                %740 = vst [vmem:[%s202 + $0x430] sm:$0xf] %v739
                %v741 = vld [vmem:[%s201 + $0x834] sm:$0xf]
                %742 = vst [vmem:[%s202 + $0x434] sm:$0xf] %v741
                %v743 = vld [vmem:[%s201 + $0x838] sm:$0xf]
                %744 = vst [vmem:[%s202 + $0x438] sm:$0xf] %v743
                %v745 = vld [vmem:[%s201 + $0x83c] sm:$0xf]
                %746 = vst [vmem:[%s202 + $0x43c] sm:$0xf] %v745
                %v747 = vld [vmem:[%s201 + $0x840] sm:$0xf]
                %748 = vst [vmem:[%s202 + $0x440] sm:$0xf] %v747
                %v749 = vld [vmem:[%s201 + $0x844] sm:$0xf]
                %750 = vst [vmem:[%s202 + $0x444] sm:$0xf] %v749
                %v751 = vld [vmem:[%s201 + $0x848] sm:$0xf]
                %752 = vst [vmem:[%s202 + $0x448] sm:$0xf] %v751
                %v753 = vld [vmem:[%s201 + $0x84c] sm:$0xf]
                %754 = vst [vmem:[%s202 + $0x44c] sm:$0xf] %v753
                %v755 = vld [vmem:[%s201 + $0x850] sm:$0xf]
                %756 = vst [vmem:[%s202 + $0x450] sm:$0xf] %v755
                %v757 = vld [vmem:[%s201 + $0x854] sm:$0xf]
                %758 = vst [vmem:[%s202 + $0x454] sm:$0xf] %v757
                %v759 = vld [vmem:[%s201 + $0x858] sm:$0xf]
                %760 = vst [vmem:[%s202 + $0x458] sm:$0xf] %v759
                %v761 = vld [vmem:[%s201 + $0x85c] sm:$0xf]
                %762 = vst [vmem:[%s202 + $0x45c] sm:$0xf] %v761
                %v763 = vld [vmem:[%s201 + $0x860] sm:$0xf]
                %764 = vst [vmem:[%s202 + $0x460] sm:$0xf] %v763
                %v765 = vld [vmem:[%s201 + $0x864] sm:$0xf]
                %766 = vst [vmem:[%s202 + $0x464] sm:$0xf] %v765
                %v767 = vld [vmem:[%s201 + $0x868] sm:$0xf]
                %768 = vst [vmem:[%s202 + $0x468] sm:$0xf] %v767
                %v769 = vld [vmem:[%s201 + $0x86c] sm:$0xf]
                %770 = vst [vmem:[%s202 + $0x46c] sm:$0xf] %v769
                %v771 = vld [vmem:[%s201 + $0x870] sm:$0xf]
                %772 = vst [vmem:[%s202 + $0x470] sm:$0xf] %v771
                %v773 = vld [vmem:[%s201 + $0x874] sm:$0xf]
                %774 = vst [vmem:[%s202 + $0x474] sm:$0xf] %v773
                %v775 = vld [vmem:[%s201 + $0x878] sm:$0xf]
                %776 = vst [vmem:[%s202 + $0x478] sm:$0xf] %v775
                %v777 = vld [vmem:[%s201 + $0x87c] sm:$0xf]
                %778 = vst [vmem:[%s202 + $0x47c] sm:$0xf] %v777
              $region53: #{tpu_custom_call.1} parent=47 // loop_footer
                %s200 = sadd.s32 1, %s196
              $region54: #{tpu_custom_call.1} parent=47 // loop_footer_branch
                %195 = sbr.rel target = $region50
              $region55: #{tpu_custom_call.1} parent=47 // loop_exit
                _
            $region48: #{tpu_custom_call.1} parent=39 // pred_fallthru
              _
          $region40: #{tpu_custom_call.1} parent=35 // pred_fallthru
            _
          %1374 = vnop
        $region36: #{tpu_custom_call.1} parent=31 // pred_fallthru
          _
      $region32: #{tpu_custom_call.1} parent=5 // pred_fallthru
        _
      %p1375 = scmp.le.s32.totalorder 1, %s11
      %p1376 = scmp.lt.s32.totalorder %s11, 3
      %p1377 = pnand %p1375, %p1376
      %p1378 = pneg %p1377
      // Predicated region
      $region74: #{tpu_custom_call.1} parent=5 // pred_check
        _
      $region75: #{tpu_custom_call.1} parent=5 // pred_check_branch
        %1380 = sbr.rel (%p1377) target = $region77
      $region76: #{tpu_custom_call.1} parent=5 // pred_region
        %s1381 = ssub.s32 %s11, 1
        %s1382 = sand.u32 %s24, 1
        %s1383 = sand.u32 %s24, 1
        %s1384 = smul.addr %s1383, 1152
        %s1385 = scalar_lea.vmem [#allocation2], %s1384
        // Predicated region
        $region78: #{tpu_custom_call.1} parent=76 // pred_check
          %p1386 = pneg %p37
        $region79: #{tpu_custom_call.1} parent=76 // pred_check_branch
          %1388 = sbr.rel (%p1386) target = $region81
        $region80: #{tpu_custom_call.1} parent=76 // pred_region
          _
        $region81: #{tpu_custom_call.1} parent=76 // pred_fallthru
          _
        %s1389 = sand.u32 %s24, 1
        %s1390 = sand.u32 %s24, 1
        %s1391 = smul.addr %s1390, 1152
        %s1392 = scalar_lea.vmem [#allocation2], %s1391
        %p1393 = pneg %p37
        %p1394 = pneg %p34
        %p1395 = pneg %p58
        %p1396 = pneg %p55
        %p1397 = pneg %p79
        %p1398 = pneg %p76
        %p1399 = pneg %p100
        %p1400 = pneg %p97
        %p1401 = pneg %p121
        %p1402 = pneg %p118
        %p1403 = pneg %p147
        %p1404 = pneg %p144
        %s1405 = smul.u32 32, %s16
        %p1406 = scmp.lt.s32.totalorder %s1405, 63
        %s1407 = scalar_select %p1406, %s1405, 63
        %s1408 = smul.addr %s1407, 8
        %s1409 = scalar_lea.vmem %s5, %s1408
        %s1410 = smul.u32 32, %s16
        %s1411 = smul.u32 32, %s16
        %p1412 = scmp.lt.s32.totalorder %s1411, 63
        %s1413 = scalar_select %p1412, %s1411, 63
        %s1414 = smul.addr %s1413, 8
        %s1415 = scalar_lea.vmem %s5, %s1414
        %s1416 = smul.u32 32, %s16
        %v1418 = vld [vmem:[%s1385] sm:$0xf]
        %v1419 = vld [vmem:[%s1385 + $0x4] sm:$0xf]
        %v1420 = vld [vmem:[%s1385 + $0x8] sm:$0xf]
        %v1421 = vld [vmem:[%s1385 + $0xc] sm:$0xf]
        %v1422 = vld [vmem:[%s1385 + $0x10] sm:$0xf]
        %v1423 = vld [vmem:[%s1385 + $0x14] sm:$0xf]
        %v1424 = vld [vmem:[%s1385 + $0x18] sm:$0xf]
        %v1425 = vld [vmem:[%s1385 + $0x1c] sm:$0xf]
        %v1426 = vld [vmem:[%s1385 + $0x20] sm:$0xf]
        %v1427 = vld [vmem:[%s1385 + $0x24] sm:$0xf]
        %v1428 = vld [vmem:[%s1385 + $0x28] sm:$0xf]
        %v1429 = vld [vmem:[%s1385 + $0x2c] sm:$0xf]
        %v1430 = vld [vmem:[%s1385 + $0x30] sm:$0xf]
        %v1431 = vld [vmem:[%s1385 + $0x34] sm:$0xf]
        %v1432 = vld [vmem:[%s1385 + $0x38] sm:$0xf]
        %v1433 = vld [vmem:[%s1385 + $0x3c] sm:$0xf]
        %v1434 = vld [vmem:[%s1385 + $0x40] sm:$0xf]
        %v1435 = vld [vmem:[%s1385 + $0x44] sm:$0xf]
        %v1436 = vld [vmem:[%s1385 + $0x48] sm:$0xf]
        %v1437 = vld [vmem:[%s1385 + $0x4c] sm:$0xf]
        %v1438 = vld [vmem:[%s1385 + $0x50] sm:$0xf]
        %v1439 = vld [vmem:[%s1385 + $0x54] sm:$0xf]
        %v1440 = vld [vmem:[%s1385 + $0x58] sm:$0xf]
        %v1441 = vld [vmem:[%s1385 + $0x5c] sm:$0xf]
        %v1442 = vld [vmem:[%s1385 + $0x60] sm:$0xf]
        %v1443 = vld [vmem:[%s1385 + $0x64] sm:$0xf]
        %v1444 = vld [vmem:[%s1385 + $0x68] sm:$0xf]
        %v1445 = vld [vmem:[%s1385 + $0x6c] sm:$0xf]
        %v1446 = vld [vmem:[%s1385 + $0x70] sm:$0xf]
        %v1447 = vld [vmem:[%s1385 + $0x74] sm:$0xf]
        %v1448 = vld [vmem:[%s1385 + $0x78] sm:$0xf]
        %v1449 = vld [vmem:[%s1385 + $0x7c] sm:$0xf]
        %v1450 = vld [vmem:[%s1] sm:$0xf]
        %s1451 = scalar_lea.vmem %s1385, 128 [#allocation2]
        %v1452 = vld [vmem:[%s1451] sm:$0xf]
        %v1453 = vld [vmem:[%s1451 + $0x4] sm:$0xf]
        %v1454 = vld [vmem:[%s1451 + $0x8] sm:$0xf]
        %v1455 = vld [vmem:[%s1451 + $0xc] sm:$0xf]
        %v1456 = vld [vmem:[%s1451 + $0x10] sm:$0xf]
        %v1457 = vld [vmem:[%s1451 + $0x14] sm:$0xf]
        %v1458 = vld [vmem:[%s1451 + $0x18] sm:$0xf]
        %v1459 = vld [vmem:[%s1451 + $0x1c] sm:$0xf]
        %v1460 = vld [vmem:[%s1451 + $0x20] sm:$0xf]
        %v1461 = vld [vmem:[%s1451 + $0x24] sm:$0xf]
        %v1462 = vld [vmem:[%s1451 + $0x28] sm:$0xf]
        %v1463 = vld [vmem:[%s1451 + $0x2c] sm:$0xf]
        %v1464 = vld [vmem:[%s1451 + $0x30] sm:$0xf]
        %v1465 = vld [vmem:[%s1451 + $0x34] sm:$0xf]
        %v1466 = vld [vmem:[%s1451 + $0x38] sm:$0xf]
        %v1467 = vld [vmem:[%s1451 + $0x3c] sm:$0xf]
        %v1468 = vld [vmem:[%s1451 + $0x40] sm:$0xf]
        %v1469 = vld [vmem:[%s1451 + $0x44] sm:$0xf]
        %v1470 = vld [vmem:[%s1451 + $0x48] sm:$0xf]
        %v1471 = vld [vmem:[%s1451 + $0x4c] sm:$0xf]
        %v1472 = vld [vmem:[%s1451 + $0x50] sm:$0xf]
        %v1473 = vld [vmem:[%s1451 + $0x54] sm:$0xf]
        %v1474 = vld [vmem:[%s1451 + $0x58] sm:$0xf]
        %v1475 = vld [vmem:[%s1451 + $0x5c] sm:$0xf]
        %v1476 = vld [vmem:[%s1451 + $0x60] sm:$0xf]
        %v1477 = vld [vmem:[%s1451 + $0x64] sm:$0xf]
        %v1478 = vld [vmem:[%s1451 + $0x68] sm:$0xf]
        %v1479 = vld [vmem:[%s1451 + $0x6c] sm:$0xf]
        %v1480 = vld [vmem:[%s1451 + $0x70] sm:$0xf]
        %v1481 = vld [vmem:[%s1451 + $0x74] sm:$0xf]
        %v1482 = vld [vmem:[%s1451 + $0x78] sm:$0xf]
        %v1483 = vld [vmem:[%s1451 + $0x7c] sm:$0xf]
        %s1484 = scalar_lea.vmem %s1, 4
        %v1485 = vld [vmem:[%s1484] sm:$0xf]
        %v1518 = vunpack.c.l.b16 %v1452
        %v1519 = vunpack.c.l.b16 %v1453
        %v1520 = vunpack.c.l.b16 %v1454
        %v1521 = vunpack.c.l.b16 %v1455
        %v1522 = vunpack.c.l.b16 %v1456
        %v1523 = vunpack.c.l.b16 %v1457
        %v1524 = vunpack.c.l.b16 %v1458
        %v1525 = vunpack.c.l.b16 %v1459
        %v1526 = vunpack.c.l.b16 %v1460
        %v1527 = vunpack.c.l.b16 %v1461
        %v1528 = vunpack.c.l.b16 %v1462
        %v1529 = vunpack.c.l.b16 %v1463
        %v1530 = vunpack.c.l.b16 %v1464
        %v1531 = vunpack.c.l.b16 %v1465
        %v1532 = vunpack.c.l.b16 %v1466
        %v1533 = vunpack.c.l.b16 %v1467
        %v1534 = vunpack.c.l.b16 %v1468
        %v1535 = vunpack.c.l.b16 %v1469
        %v1536 = vunpack.c.l.b16 %v1470
        %v1537 = vunpack.c.l.b16 %v1471
        %v1538 = vunpack.c.l.b16 %v1472
        %v1539 = vunpack.c.l.b16 %v1473
        %v1540 = vunpack.c.l.b16 %v1474
        %v1541 = vunpack.c.l.b16 %v1475
        %v1542 = vunpack.c.l.b16 %v1476
        %v1543 = vunpack.c.l.b16 %v1477
        %v1544 = vunpack.c.l.b16 %v1478
        %v1545 = vunpack.c.l.b16 %v1479
        %v1546 = vunpack.c.l.b16 %v1480
        %v1547 = vunpack.c.l.b16 %v1481
        %v1548 = vunpack.c.l.b16 %v1482
        %v1549 = vunpack.c.l.b16 %v1483
        %v1550 = vpack.c.b16 %v1519, %v1518
        %v1551 = vpack.c.b16 %v1521, %v1520
        %v1552 = vpack.c.b16 %v1523, %v1522
        %v1553 = vpack.c.b16 %v1525, %v1524
        %v1554 = vpack.c.b16 %v1527, %v1526
        %v1555 = vpack.c.b16 %v1529, %v1528
        %v1556 = vpack.c.b16 %v1531, %v1530
        %v1557 = vpack.c.b16 %v1533, %v1532
        %v1558 = vpack.c.b16 %v1535, %v1534
        %v1559 = vpack.c.b16 %v1537, %v1536
        %v1560 = vpack.c.b16 %v1539, %v1538
        %v1561 = vpack.c.b16 %v1541, %v1540
        %v1562 = vpack.c.b16 %v1543, %v1542
        %v1563 = vpack.c.b16 %v1545, %v1544
        %v1564 = vpack.c.b16 %v1547, %v1546
        %v1565 = vpack.c.b16 %v1549, %v1548
        %vm1566 = vcmask 64512
        %v1568 = vsel %vm1566, %v1550, 0
        %v1571 = vsel %vm1566, %v1551, 0
        %v1574 = vsel %vm1566, %v1552, 0
        %v1577 = vsel %vm1566, %v1553, 0
        %v1580 = vsel %vm1566, %v1554, 0
        %v1583 = vsel %vm1566, %v1555, 0
        %v1586 = vsel %vm1566, %v1556, 0
        %v1589 = vsel %vm1566, %v1557, 0
        %v1592 = vsel %vm1566, %v1558, 0
        %v1595 = vsel %vm1566, %v1559, 0
        %v1598 = vsel %vm1566, %v1560, 0
        %v1601 = vsel %vm1566, %v1561, 0
        %v1604 = vsel %vm1566, %v1562, 0
        %v1607 = vsel %vm1566, %v1563, 0
        %v1610 = vsel %vm1566, %v1564, 0
        %v1613 = vsel %vm1566, %v1565, 0
        %vm1615 = vcmask 1043456
        %v1617 = vsel %vm1615, %v1485, 0
        %1619 = vmatprep.subr.bf16.mxu0 0
        %1620 = vmatpush1.bf16.msra.mxu0 %v1617
        %1621 = vmatprep.subr.bf16.mxu0 0
        %1622 = vmatpush1.bf16.msra.mxu0 0
        %1623 = vmatprep.subr.bf16.mxu0 0
        %1624 = vmatpush1.bf16.msra.mxu0 0
        %1625 = vmatprep.subr.bf16.mxu0 0
        %1626 = vmatpush1.bf16.msra.mxu0 0
        %1627 = vmatprep.subr.bf16.mxu0 0
        %1628 = vmatpush1.bf16.msra.mxu0 0
        %1629 = vmatprep.subr.bf16.mxu0 0
        %1630 = vmatpush1.bf16.msra.mxu0 0
        %1631 = vmatprep.subr.bf16.mxu0 0
        %1632 = vmatpush1.bf16.msra.mxu0 0
        %1633 = vmatprep.subr.bf16.mxu0 0
        %1634 = vmatpush1.bf16.msra.mxu0 0
        %1635 = vmatprep.subr.bf16.mxu0 0
        %1636 = vmatpush1.bf16.msra.mxu0 0
        %1637 = vmatprep.subr.bf16.mxu0 0
        %1638 = vmatpush1.bf16.msra.mxu0 0
        %1639 = vmatprep.subr.bf16.mxu0 0
        %1640 = vmatpush1.bf16.msra.mxu0 0
        %1641 = vmatprep.subr.bf16.mxu0 0
        %1642 = vmatpush1.bf16.msra.mxu0 0
        %1643 = vmatprep.subr.bf16.mxu0 0
        %1644 = vmatpush1.bf16.msra.mxu0 0
        %1645 = vmatprep.subr.bf16.mxu0 0
        %1646 = vmatpush1.bf16.msra.mxu0 0
        %1647 = vmatprep.subr.bf16.mxu0 0
        %1648 = vmatpush1.bf16.msra.mxu0 0
        %1649 = vmatprep.subr.bf16.mxu0 0
        %1650 = vmatpush1.bf16.msra.mxu0 0
        %1651 = vmatprep.mubr.bf16.mxu0 0
        %1652 = vmatmul.mubr.bf16.gmra.mrb[0].mxu0 %v1568
        %v1653 = vpop.f32.mrb[0].mxu0
        %v1654 = vadd.f32 0.0, %v1653
        %v1655 = vpop.f32.mrb[0].mxu0
        %v1656 = vpop.f32.mrb[0].mxu0
        %v1657 = vadd.f32 0.0, %v1656
        %v1658 = vpop.f32.mrb[0].mxu0
        %1659 = vmatprep.mubr.bf16.mxu0 0
        %1660 = vmatmul.mubr.bf16.gmra.mrb[0].mxu0 %v1571
        %v1661 = vpop.f32.mrb[0].mxu0
        %v1662 = vadd.f32 0.0, %v1661
        %v1663 = vpop.f32.mrb[0].mxu0
        %v1664 = vpop.f32.mrb[0].mxu0
        %v1665 = vadd.f32 0.0, %v1664
        %v1666 = vpop.f32.mrb[0].mxu0
        %1667 = vmatprep.mubr.bf16.mxu0 0
        %1668 = vmatmul.mubr.bf16.gmra.mrb[0].mxu0 %v1574
        %v1669 = vpop.f32.mrb[0].mxu0
        %v1670 = vadd.f32 0.0, %v1669
        %v1671 = vpop.f32.mrb[0].mxu0
        %v1672 = vpop.f32.mrb[0].mxu0
        %v1673 = vadd.f32 0.0, %v1672
        %v1674 = vpop.f32.mrb[0].mxu0
        %1675 = vmatprep.mubr.bf16.mxu0 0
        %1676 = vmatmul.mubr.bf16.gmra.mrb[0].mxu0 %v1577
        %v1677 = vpop.f32.mrb[0].mxu0
        %v1678 = vadd.f32 0.0, %v1677
        %v1679 = vpop.f32.mrb[0].mxu0
        %v1680 = vpop.f32.mrb[0].mxu0
        %v1681 = vadd.f32 0.0, %v1680
        %v1682 = vpop.f32.mrb[0].mxu0
        %1683 = vmatprep.mubr.bf16.mxu0 0
        %1684 = vmatmul.mubr.bf16.gmra.mrb[0].mxu0 %v1580
        %v1685 = vpop.f32.mrb[0].mxu0
        %v1686 = vadd.f32 0.0, %v1685
        %v1687 = vpop.f32.mrb[0].mxu0
        %v1688 = vpop.f32.mrb[0].mxu0
        %v1689 = vadd.f32 0.0, %v1688
        %v1690 = vpop.f32.mrb[0].mxu0
        %1691 = vmatprep.mubr.bf16.mxu0 0
        %1692 = vmatmul.mubr.bf16.gmra.mrb[0].mxu0 %v1583
        %v1693 = vpop.f32.mrb[0].mxu0
        %v1694 = vadd.f32 0.0, %v1693
        %v1695 = vpop.f32.mrb[0].mxu0
        %v1696 = vpop.f32.mrb[0].mxu0
        %v1697 = vadd.f32 0.0, %v1696
        %v1698 = vpop.f32.mrb[0].mxu0
        %1699 = vmatprep.mubr.bf16.mxu0 0
        %1700 = vmatmul.mubr.bf16.gmra.mrb[0].mxu0 %v1586
        %v1701 = vpop.f32.mrb[0].mxu0
        %v1702 = vadd.f32 0.0, %v1701
        %v1703 = vpop.f32.mrb[0].mxu0
        %v1704 = vpop.f32.mrb[0].mxu0
        %v1705 = vadd.f32 0.0, %v1704
        %v1706 = vpop.f32.mrb[0].mxu0
        %1707 = vmatprep.mubr.bf16.mxu0 0
        %1708 = vmatmul.mubr.bf16.gmra.mrb[0].mxu0 %v1589
        %v1709 = vpop.f32.mrb[0].mxu0
        %v1710 = vadd.f32 0.0, %v1709
        %v1711 = vpop.f32.mrb[0].mxu0
        %v1712 = vpop.f32.mrb[0].mxu0
        %v1713 = vadd.f32 0.0, %v1712
        %v1714 = vpop.f32.mrb[0].mxu0
        %1715 = vmatprep.mubr.bf16.mxu0 0
        %1716 = vmatmul.mubr.bf16.gmra.mrb[0].mxu0 %v1592
        %v1717 = vpop.f32.mrb[0].mxu0
        %v1718 = vadd.f32 0.0, %v1717
        %v1719 = vpop.f32.mrb[0].mxu0
        %v1720 = vpop.f32.mrb[0].mxu0
        %v1721 = vadd.f32 0.0, %v1720
        %v1722 = vpop.f32.mrb[0].mxu0
        %1723 = vmatprep.mubr.bf16.mxu0 0
        %1724 = vmatmul.mubr.bf16.gmra.mrb[0].mxu0 %v1595
        %v1725 = vpop.f32.mrb[0].mxu0
        %v1726 = vadd.f32 0.0, %v1725
        %v1727 = vpop.f32.mrb[0].mxu0
        %v1728 = vpop.f32.mrb[0].mxu0
        %v1729 = vadd.f32 0.0, %v1728
        %v1730 = vpop.f32.mrb[0].mxu0
        %1731 = vmatprep.mubr.bf16.mxu0 0
        %1732 = vmatmul.mubr.bf16.gmra.mrb[0].mxu0 %v1598
        %v1733 = vpop.f32.mrb[0].mxu0
        %v1734 = vadd.f32 0.0, %v1733
        %v1735 = vpop.f32.mrb[0].mxu0
        %v1736 = vpop.f32.mrb[0].mxu0
        %v1737 = vadd.f32 0.0, %v1736
        %v1738 = vpop.f32.mrb[0].mxu0
        %1739 = vmatprep.mubr.bf16.mxu0 0
        %1740 = vmatmul.mubr.bf16.gmra.mrb[0].mxu0 %v1601
        %v1741 = vpop.f32.mrb[0].mxu0
        %v1742 = vadd.f32 0.0, %v1741
        %v1743 = vpop.f32.mrb[0].mxu0
        %v1744 = vpop.f32.mrb[0].mxu0
        %v1745 = vadd.f32 0.0, %v1744
        %v1746 = vpop.f32.mrb[0].mxu0
        %1747 = vmatprep.mubr.bf16.mxu0 0
        %1748 = vmatmul.mubr.bf16.gmra.mrb[0].mxu0 %v1604
        %v1749 = vpop.f32.mrb[0].mxu0
        %v1750 = vadd.f32 0.0, %v1749
        %v1751 = vpop.f32.mrb[0].mxu0
        %v1752 = vpop.f32.mrb[0].mxu0
        %v1753 = vadd.f32 0.0, %v1752
        %v1754 = vpop.f32.mrb[0].mxu0
        %1755 = vmatprep.mubr.bf16.mxu0 0
        %1756 = vmatmul.mubr.bf16.gmra.mrb[0].mxu0 %v1607
        %v1757 = vpop.f32.mrb[0].mxu0
        %v1758 = vadd.f32 0.0, %v1757
        %v1759 = vpop.f32.mrb[0].mxu0
        %v1760 = vpop.f32.mrb[0].mxu0
        %v1761 = vadd.f32 0.0, %v1760
        %v1762 = vpop.f32.mrb[0].mxu0
        %1763 = vmatprep.mubr.bf16.mxu0 0
        %1764 = vmatmul.mubr.bf16.gmra.mrb[0].mxu0 %v1610
        %v1765 = vpop.f32.mrb[0].mxu0
        %v1766 = vadd.f32 0.0, %v1765
        %v1767 = vpop.f32.mrb[0].mxu0
        %v1768 = vpop.f32.mrb[0].mxu0
        %v1769 = vadd.f32 0.0, %v1768
        %v1770 = vpop.f32.mrb[0].mxu0
        %1771 = vmatprep.mubr.bf16.mxu0 0
        %1772 = vmatmul.mubr.bf16.gmra.mrb[0].mxu0 %v1613
        %v1773 = vpop.f32.mrb[0].mxu0
        %v1774 = vadd.f32 0.0, %v1773
        %v1775 = vpop.f32.mrb[0].mxu0
        %v1776 = vpop.f32.mrb[0].mxu0
        %v1777 = vadd.f32 0.0, %v1776
        %v1778 = vpop.f32.mrb[0].mxu0
        %1779 = vdwg.mxu0
        %v1812 = vunpack.c.l.b16 %v1418
        %v1813 = vunpack.c.l.b16 %v1419
        %v1814 = vunpack.c.l.b16 %v1420
        %v1815 = vunpack.c.l.b16 %v1421
        %v1816 = vunpack.c.l.b16 %v1422
        %v1817 = vunpack.c.l.b16 %v1423
        %v1818 = vunpack.c.l.b16 %v1424
        %v1819 = vunpack.c.l.b16 %v1425
        %v1820 = vunpack.c.l.b16 %v1426
        %v1821 = vunpack.c.l.b16 %v1427
        %v1822 = vunpack.c.l.b16 %v1428
        %v1823 = vunpack.c.l.b16 %v1429
        %v1824 = vunpack.c.l.b16 %v1430
        %v1825 = vunpack.c.l.b16 %v1431
        %v1826 = vunpack.c.l.b16 %v1432
        %v1827 = vunpack.c.l.b16 %v1433
        %v1828 = vunpack.c.l.b16 %v1434
        %v1829 = vunpack.c.l.b16 %v1435
        %v1830 = vunpack.c.l.b16 %v1436
        %v1831 = vunpack.c.l.b16 %v1437
        %v1832 = vunpack.c.l.b16 %v1438
        %v1833 = vunpack.c.l.b16 %v1439
        %v1834 = vunpack.c.l.b16 %v1440
        %v1835 = vunpack.c.l.b16 %v1441
        %v1836 = vunpack.c.l.b16 %v1442
        %v1837 = vunpack.c.l.b16 %v1443
        %v1838 = vunpack.c.l.b16 %v1444
        %v1839 = vunpack.c.l.b16 %v1445
        %v1840 = vunpack.c.l.b16 %v1446
        %v1841 = vunpack.c.l.b16 %v1447
        %v1842 = vunpack.c.l.b16 %v1448
        %v1843 = vunpack.c.l.b16 %v1449
        %v1844 = vpack.c.b16 %v1813, %v1812
        %v1845 = vpack.c.b16 %v1815, %v1814
        %v1846 = vpack.c.b16 %v1817, %v1816
        %v1847 = vpack.c.b16 %v1819, %v1818
        %v1848 = vpack.c.b16 %v1821, %v1820
        %v1849 = vpack.c.b16 %v1823, %v1822
        %v1850 = vpack.c.b16 %v1825, %v1824
        %v1851 = vpack.c.b16 %v1827, %v1826
        %v1852 = vpack.c.b16 %v1829, %v1828
        %v1853 = vpack.c.b16 %v1831, %v1830
        %v1854 = vpack.c.b16 %v1833, %v1832
        %v1855 = vpack.c.b16 %v1835, %v1834
        %v1856 = vpack.c.b16 %v1837, %v1836
        %v1857 = vpack.c.b16 %v1839, %v1838
        %v1858 = vpack.c.b16 %v1841, %v1840
        %v1859 = vpack.c.b16 %v1843, %v1842
        %v1861 = vsel %vm1566, %v1844, 0
        %v1864 = vsel %vm1566, %v1845, 0
        %v1867 = vsel %vm1566, %v1846, 0
        %v1870 = vsel %vm1566, %v1847, 0
        %v1873 = vsel %vm1566, %v1848, 0
        %v1876 = vsel %vm1566, %v1849, 0
        %v1879 = vsel %vm1566, %v1850, 0
        %v1882 = vsel %vm1566, %v1851, 0
        %v1885 = vsel %vm1566, %v1852, 0
        %v1888 = vsel %vm1566, %v1853, 0
        %v1891 = vsel %vm1566, %v1854, 0
        %v1894 = vsel %vm1566, %v1855, 0
        %v1897 = vsel %vm1566, %v1856, 0
        %v1900 = vsel %vm1566, %v1857, 0
        %v1903 = vsel %vm1566, %v1858, 0
        %v1906 = vsel %vm1566, %v1859, 0
        %v1909 = vsel %vm1615, %v1450, 0
        %1911 = vmatprep.subr.bf16.mxu0 0
        %1912 = vmatpush1.bf16.msra.mxu0 %v1909
        %1913 = vmatprep.subr.bf16.mxu0 0
        %1914 = vmatpush1.bf16.msra.mxu0 0
        %1915 = vmatprep.subr.bf16.mxu0 0
        %1916 = vmatpush1.bf16.msra.mxu0 0
        %1917 = vmatprep.subr.bf16.mxu0 0
        %1918 = vmatpush1.bf16.msra.mxu0 0
        %1919 = vmatprep.subr.bf16.mxu0 0
        %1920 = vmatpush1.bf16.msra.mxu0 0
        %1921 = vmatprep.subr.bf16.mxu0 0
        %1922 = vmatpush1.bf16.msra.mxu0 0
        %1923 = vmatprep.subr.bf16.mxu0 0
        %1924 = vmatpush1.bf16.msra.mxu0 0
        %1925 = vmatprep.subr.bf16.mxu0 0
        %1926 = vmatpush1.bf16.msra.mxu0 0
        %1927 = vmatprep.subr.bf16.mxu0 0
        %1928 = vmatpush1.bf16.msra.mxu0 0
        %1929 = vmatprep.subr.bf16.mxu0 0
        %1930 = vmatpush1.bf16.msra.mxu0 0
        %1931 = vmatprep.subr.bf16.mxu0 0
        %1932 = vmatpush1.bf16.msra.mxu0 0
        %1933 = vmatprep.subr.bf16.mxu0 0
        %1934 = vmatpush1.bf16.msra.mxu0 0
        %1935 = vmatprep.subr.bf16.mxu0 0
        %1936 = vmatpush1.bf16.msra.mxu0 0
        %1937 = vmatprep.subr.bf16.mxu0 0
        %1938 = vmatpush1.bf16.msra.mxu0 0
        %1939 = vmatprep.subr.bf16.mxu0 0
        %1940 = vmatpush1.bf16.msra.mxu0 0
        %1941 = vmatprep.subr.bf16.mxu0 0
        %1942 = vmatpush1.bf16.msra.mxu0 0
        %1943 = vmatprep.mubr.bf16.mxu0 0
        %1944 = vmatmul.mubr.bf16.gmra.mrb[0].mxu0 %v1861
        %v1945 = vpop.f32.mrb[0].mxu0
        %v1946 = vadd.f32 %v1654, %v1945
        %v1947 = vpop.f32.mrb[0].mxu0
        %v1948 = vpop.f32.mrb[0].mxu0
        %v1949 = vadd.f32 %v1657, %v1948
        %v1950 = vpop.f32.mrb[0].mxu0
        %1951 = vmatprep.mubr.bf16.mxu0 0
        %1952 = vmatmul.mubr.bf16.gmra.mrb[0].mxu0 %v1864
        %v1953 = vpop.f32.mrb[0].mxu0
        %v1954 = vadd.f32 %v1662, %v1953
        %v1955 = vpop.f32.mrb[0].mxu0
        %v1956 = vpop.f32.mrb[0].mxu0
        %v1957 = vadd.f32 %v1665, %v1956
        %v1958 = vpop.f32.mrb[0].mxu0
        %1959 = vmatprep.mubr.bf16.mxu0 0
        %1960 = vmatmul.mubr.bf16.gmra.mrb[0].mxu0 %v1867
        %v1961 = vpop.f32.mrb[0].mxu0
        %v1962 = vadd.f32 %v1670, %v1961
        %v1963 = vpop.f32.mrb[0].mxu0
        %v1964 = vpop.f32.mrb[0].mxu0
        %v1965 = vadd.f32 %v1673, %v1964
        %v1966 = vpop.f32.mrb[0].mxu0
        %1967 = vmatprep.mubr.bf16.mxu0 0
        %1968 = vmatmul.mubr.bf16.gmra.mrb[0].mxu0 %v1870
        %v1969 = vpop.f32.mrb[0].mxu0
        %v1970 = vadd.f32 %v1678, %v1969
        %v1971 = vpop.f32.mrb[0].mxu0
        %v1972 = vpop.f32.mrb[0].mxu0
        %v1973 = vadd.f32 %v1681, %v1972
        %v1974 = vpop.f32.mrb[0].mxu0
        %1975 = vmatprep.mubr.bf16.mxu0 0
        %1976 = vmatmul.mubr.bf16.gmra.mrb[0].mxu0 %v1873
        %v1977 = vpop.f32.mrb[0].mxu0
        %v1978 = vadd.f32 %v1686, %v1977
        %v1979 = vpop.f32.mrb[0].mxu0
        %v1980 = vpop.f32.mrb[0].mxu0
        %v1981 = vadd.f32 %v1689, %v1980
        %v1982 = vpop.f32.mrb[0].mxu0
        %1983 = vmatprep.mubr.bf16.mxu0 0
        %1984 = vmatmul.mubr.bf16.gmra.mrb[0].mxu0 %v1876
        %v1985 = vpop.f32.mrb[0].mxu0
        %v1986 = vadd.f32 %v1694, %v1985
        %v1987 = vpop.f32.mrb[0].mxu0
        %v1988 = vpop.f32.mrb[0].mxu0
        %v1989 = vadd.f32 %v1697, %v1988
        %v1990 = vpop.f32.mrb[0].mxu0
        %1991 = vmatprep.mubr.bf16.mxu0 0
        %1992 = vmatmul.mubr.bf16.gmra.mrb[0].mxu0 %v1879
        %v1993 = vpop.f32.mrb[0].mxu0
        %v1994 = vadd.f32 %v1702, %v1993
        %v1995 = vpop.f32.mrb[0].mxu0
        %v1996 = vpop.f32.mrb[0].mxu0
        %v1997 = vadd.f32 %v1705, %v1996
        %v1998 = vpop.f32.mrb[0].mxu0
        %1999 = vmatprep.mubr.bf16.mxu0 0
        %2000 = vmatmul.mubr.bf16.gmra.mrb[0].mxu0 %v1882
        %v2001 = vpop.f32.mrb[0].mxu0
        %v2002 = vadd.f32 %v1710, %v2001
        %v2003 = vpop.f32.mrb[0].mxu0
        %v2004 = vpop.f32.mrb[0].mxu0
        %v2005 = vadd.f32 %v1713, %v2004
        %v2006 = vpop.f32.mrb[0].mxu0
        %2007 = vmatprep.mubr.bf16.mxu0 0
        %2008 = vmatmul.mubr.bf16.gmra.mrb[0].mxu0 %v1885
        %v2009 = vpop.f32.mrb[0].mxu0
        %v2010 = vadd.f32 %v1718, %v2009
        %v2011 = vpop.f32.mrb[0].mxu0
        %v2012 = vpop.f32.mrb[0].mxu0
        %v2013 = vadd.f32 %v1721, %v2012
        %v2014 = vpop.f32.mrb[0].mxu0
        %2015 = vmatprep.mubr.bf16.mxu0 0
        %2016 = vmatmul.mubr.bf16.gmra.mrb[0].mxu0 %v1888
        %v2017 = vpop.f32.mrb[0].mxu0
        %v2018 = vadd.f32 %v1726, %v2017
        %v2019 = vpop.f32.mrb[0].mxu0
        %v2020 = vpop.f32.mrb[0].mxu0
        %v2021 = vadd.f32 %v1729, %v2020
        %v2022 = vpop.f32.mrb[0].mxu0
        %2023 = vmatprep.mubr.bf16.mxu0 0
        %2024 = vmatmul.mubr.bf16.gmra.mrb[0].mxu0 %v1891
        %v2025 = vpop.f32.mrb[0].mxu0
        %v2026 = vadd.f32 %v1734, %v2025
        %v2027 = vpop.f32.mrb[0].mxu0
        %v2028 = vpop.f32.mrb[0].mxu0
        %v2029 = vadd.f32 %v1737, %v2028
        %v2030 = vpop.f32.mrb[0].mxu0
        %2031 = vmatprep.mubr.bf16.mxu0 0
        %2032 = vmatmul.mubr.bf16.gmra.mrb[0].mxu0 %v1894
        %v2033 = vpop.f32.mrb[0].mxu0
        %v2034 = vadd.f32 %v1742, %v2033
        %v2035 = vpop.f32.mrb[0].mxu0
        %v2036 = vpop.f32.mrb[0].mxu0
        %v2037 = vadd.f32 %v1745, %v2036
        %v2038 = vpop.f32.mrb[0].mxu0
        %2039 = vmatprep.mubr.bf16.mxu0 0
        %2040 = vmatmul.mubr.bf16.gmra.mrb[0].mxu0 %v1897
        %v2041 = vpop.f32.mrb[0].mxu0
        %v2042 = vadd.f32 %v1750, %v2041
        %v2043 = vpop.f32.mrb[0].mxu0
        %v2044 = vpop.f32.mrb[0].mxu0
        %v2045 = vadd.f32 %v1753, %v2044
        %v2046 = vpop.f32.mrb[0].mxu0
        %2047 = vmatprep.mubr.bf16.mxu0 0
        %2048 = vmatmul.mubr.bf16.gmra.mrb[0].mxu0 %v1900
        %v2049 = vpop.f32.mrb[0].mxu0
        %v2050 = vadd.f32 %v1758, %v2049
        %v2051 = vpop.f32.mrb[0].mxu0
        %v2052 = vpop.f32.mrb[0].mxu0
        %v2053 = vadd.f32 %v1761, %v2052
        %v2054 = vpop.f32.mrb[0].mxu0
        %2055 = vmatprep.mubr.bf16.mxu0 0
        %2056 = vmatmul.mubr.bf16.gmra.mrb[0].mxu0 %v1903
        %v2057 = vpop.f32.mrb[0].mxu0
        %v2058 = vadd.f32 %v1766, %v2057
        %v2059 = vpop.f32.mrb[0].mxu0
        %v2060 = vpop.f32.mrb[0].mxu0
        %v2061 = vadd.f32 %v1769, %v2060
        %v2062 = vpop.f32.mrb[0].mxu0
        %2063 = vmatprep.mubr.bf16.mxu0 0
        %2064 = vmatmul.mubr.bf16.gmra.mrb[0].mxu0 %v1906
        %v2065 = vpop.f32.mrb[0].mxu0
        %v2066 = vadd.f32 %v1774, %v2065
        %v2067 = vpop.f32.mrb[0].mxu0
        %v2068 = vpop.f32.mrb[0].mxu0
        %v2069 = vadd.f32 %v1777, %v2068
        %v2070 = vpop.f32.mrb[0].mxu0
        %2071 = vdwg.mxu0
        %s2072 = scalar_lea.vmem %s1385, 256 [#allocation2]
        %v2073 = vld [vmem:[%s2072] sm:$0xf]
        %v2074 = vld [vmem:[%s2072 + $0x4] sm:$0xf]
        %v2075 = vld [vmem:[%s2072 + $0x8] sm:$0xf]
        %v2076 = vld [vmem:[%s2072 + $0xc] sm:$0xf]
        %v2077 = vld [vmem:[%s2072 + $0x10] sm:$0xf]
        %v2078 = vld [vmem:[%s2072 + $0x14] sm:$0xf]
        %v2079 = vld [vmem:[%s2072 + $0x18] sm:$0xf]
        %v2080 = vld [vmem:[%s2072 + $0x1c] sm:$0xf]
        %v2081 = vld [vmem:[%s2072 + $0x20] sm:$0xf]
        %v2082 = vld [vmem:[%s2072 + $0x24] sm:$0xf]
        %v2083 = vld [vmem:[%s2072 + $0x28] sm:$0xf]
        %v2084 = vld [vmem:[%s2072 + $0x2c] sm:$0xf]
        %v2085 = vld [vmem:[%s2072 + $0x30] sm:$0xf]
        %v2086 = vld [vmem:[%s2072 + $0x34] sm:$0xf]
        %v2087 = vld [vmem:[%s2072 + $0x38] sm:$0xf]
        %v2088 = vld [vmem:[%s2072 + $0x3c] sm:$0xf]
        %v2089 = vld [vmem:[%s2072 + $0x40] sm:$0xf]
        %v2090 = vld [vmem:[%s2072 + $0x44] sm:$0xf]
        %v2091 = vld [vmem:[%s2072 + $0x48] sm:$0xf]
        %v2092 = vld [vmem:[%s2072 + $0x4c] sm:$0xf]
        %v2093 = vld [vmem:[%s2072 + $0x50] sm:$0xf]
        %v2094 = vld [vmem:[%s2072 + $0x54] sm:$0xf]
        %v2095 = vld [vmem:[%s2072 + $0x58] sm:$0xf]
        %v2096 = vld [vmem:[%s2072 + $0x5c] sm:$0xf]
        %v2097 = vld [vmem:[%s2072 + $0x60] sm:$0xf]
        %v2098 = vld [vmem:[%s2072 + $0x64] sm:$0xf]
        %v2099 = vld [vmem:[%s2072 + $0x68] sm:$0xf]
        %v2100 = vld [vmem:[%s2072 + $0x6c] sm:$0xf]
        %v2101 = vld [vmem:[%s2072 + $0x70] sm:$0xf]
        %v2102 = vld [vmem:[%s2072 + $0x74] sm:$0xf]
        %v2103 = vld [vmem:[%s2072 + $0x78] sm:$0xf]
        %v2104 = vld [vmem:[%s2072 + $0x7c] sm:$0xf]
        %s2105 = scalar_lea.vmem %s1, 8
        %v2106 = vld [vmem:[%s2105] sm:$0xf]
        %v2139 = vunpack.c.l.b16 %v2073
        %v2140 = vunpack.c.l.b16 %v2074
        %v2141 = vunpack.c.l.b16 %v2075
        %v2142 = vunpack.c.l.b16 %v2076
        %v2143 = vunpack.c.l.b16 %v2077
        %v2144 = vunpack.c.l.b16 %v2078
        %v2145 = vunpack.c.l.b16 %v2079
        %v2146 = vunpack.c.l.b16 %v2080
        %v2147 = vunpack.c.l.b16 %v2081
        %v2148 = vunpack.c.l.b16 %v2082
        %v2149 = vunpack.c.l.b16 %v2083
        %v2150 = vunpack.c.l.b16 %v2084
        %v2151 = vunpack.c.l.b16 %v2085
        %v2152 = vunpack.c.l.b16 %v2086
        %v2153 = vunpack.c.l.b16 %v2087
        %v2154 = vunpack.c.l.b16 %v2088
        %v2155 = vunpack.c.l.b16 %v2089
        %v2156 = vunpack.c.l.b16 %v2090
        %v2157 = vunpack.c.l.b16 %v2091
        %v2158 = vunpack.c.l.b16 %v2092
        %v2159 = vunpack.c.l.b16 %v2093
        %v2160 = vunpack.c.l.b16 %v2094
        %v2161 = vunpack.c.l.b16 %v2095
        %v2162 = vunpack.c.l.b16 %v2096
        %v2163 = vunpack.c.l.b16 %v2097
        %v2164 = vunpack.c.l.b16 %v2098
        %v2165 = vunpack.c.l.b16 %v2099
        %v2166 = vunpack.c.l.b16 %v2100
        %v2167 = vunpack.c.l.b16 %v2101
        %v2168 = vunpack.c.l.b16 %v2102
        %v2169 = vunpack.c.l.b16 %v2103
        %v2170 = vunpack.c.l.b16 %v2104
        %v2171 = vpack.c.b16 %v2140, %v2139
        %v2172 = vpack.c.b16 %v2142, %v2141
        %v2173 = vpack.c.b16 %v2144, %v2143
        %v2174 = vpack.c.b16 %v2146, %v2145
        %v2175 = vpack.c.b16 %v2148, %v2147
        %v2176 = vpack.c.b16 %v2150, %v2149
        %v2177 = vpack.c.b16 %v2152, %v2151
        %v2178 = vpack.c.b16 %v2154, %v2153
        %v2179 = vpack.c.b16 %v2156, %v2155
        %v2180 = vpack.c.b16 %v2158, %v2157
        %v2181 = vpack.c.b16 %v2160, %v2159
        %v2182 = vpack.c.b16 %v2162, %v2161
        %v2183 = vpack.c.b16 %v2164, %v2163
        %v2184 = vpack.c.b16 %v2166, %v2165
        %v2185 = vpack.c.b16 %v2168, %v2167
        %v2186 = vpack.c.b16 %v2170, %v2169
        %v2188 = vsel %vm1566, %v2171, 0
        %v2191 = vsel %vm1566, %v2172, 0
        %v2194 = vsel %vm1566, %v2173, 0
        %v2197 = vsel %vm1566, %v2174, 0
        %v2200 = vsel %vm1566, %v2175, 0
        %v2203 = vsel %vm1566, %v2176, 0
        %v2206 = vsel %vm1566, %v2177, 0
        %v2209 = vsel %vm1566, %v2178, 0
        %v2212 = vsel %vm1566, %v2179, 0
        %v2215 = vsel %vm1566, %v2180, 0
        %v2218 = vsel %vm1566, %v2181, 0
        %v2221 = vsel %vm1566, %v2182, 0
        %v2224 = vsel %vm1566, %v2183, 0
        %v2227 = vsel %vm1566, %v2184, 0
        %v2230 = vsel %vm1566, %v2185, 0
        %v2233 = vsel %vm1566, %v2186, 0
        %v2236 = vsel %vm1615, %v2106, 0
        %2238 = vmatprep.subr.bf16.mxu0 0
        %2239 = vmatpush1.bf16.msra.mxu0 %v2236
        %2240 = vmatprep.subr.bf16.mxu0 0
        %2241 = vmatpush1.bf16.msra.mxu0 0
        %2242 = vmatprep.subr.bf16.mxu0 0
        %2243 = vmatpush1.bf16.msra.mxu0 0
        %2244 = vmatprep.subr.bf16.mxu0 0
        %2245 = vmatpush1.bf16.msra.mxu0 0
        %2246 = vmatprep.subr.bf16.mxu0 0
        %2247 = vmatpush1.bf16.msra.mxu0 0
        %2248 = vmatprep.subr.bf16.mxu0 0
        %2249 = vmatpush1.bf16.msra.mxu0 0
        %2250 = vmatprep.subr.bf16.mxu0 0
        %2251 = vmatpush1.bf16.msra.mxu0 0
        %2252 = vmatprep.subr.bf16.mxu0 0
        %2253 = vmatpush1.bf16.msra.mxu0 0
        %2254 = vmatprep.subr.bf16.mxu0 0
        %2255 = vmatpush1.bf16.msra.mxu0 0
        %2256 = vmatprep.subr.bf16.mxu0 0
        %2257 = vmatpush1.bf16.msra.mxu0 0
        %2258 = vmatprep.subr.bf16.mxu0 0
        %2259 = vmatpush1.bf16.msra.mxu0 0
        %2260 = vmatprep.subr.bf16.mxu0 0
        %2261 = vmatpush1.bf16.msra.mxu0 0
        %2262 = vmatprep.subr.bf16.mxu0 0
        %2263 = vmatpush1.bf16.msra.mxu0 0
        %2264 = vmatprep.subr.bf16.mxu0 0
        %2265 = vmatpush1.bf16.msra.mxu0 0
        %2266 = vmatprep.subr.bf16.mxu0 0
        %2267 = vmatpush1.bf16.msra.mxu0 0
        %2268 = vmatprep.subr.bf16.mxu0 0
        %2269 = vmatpush1.bf16.msra.mxu0 0
        %2270 = vmatprep.mubr.bf16.mxu0 0
        %2271 = vmatmul.mubr.bf16.gmra.mrb[0].mxu0 %v2188
        %v2272 = vpop.f32.mrb[0].mxu0
        %v2273 = vadd.f32 0.0, %v2272
        %v2274 = vpop.f32.mrb[0].mxu0
        %v2275 = vpop.f32.mrb[0].mxu0
        %v2276 = vadd.f32 0.0, %v2275
        %v2277 = vpop.f32.mrb[0].mxu0
        %2278 = vmatprep.mubr.bf16.mxu0 0
        %2279 = vmatmul.mubr.bf16.gmra.mrb[0].mxu0 %v2191
        %v2280 = vpop.f32.mrb[0].mxu0
        %v2281 = vadd.f32 0.0, %v2280
        %v2282 = vpop.f32.mrb[0].mxu0
        %v2283 = vpop.f32.mrb[0].mxu0
        %v2284 = vadd.f32 0.0, %v2283
        %v2285 = vpop.f32.mrb[0].mxu0
        %2286 = vmatprep.mubr.bf16.mxu0 0
        %2287 = vmatmul.mubr.bf16.gmra.mrb[0].mxu0 %v2194
        %v2288 = vpop.f32.mrb[0].mxu0
        %v2289 = vadd.f32 0.0, %v2288
        %v2290 = vpop.f32.mrb[0].mxu0
        %v2291 = vpop.f32.mrb[0].mxu0
        %v2292 = vadd.f32 0.0, %v2291
        %v2293 = vpop.f32.mrb[0].mxu0
        %2294 = vmatprep.mubr.bf16.mxu0 0
        %2295 = vmatmul.mubr.bf16.gmra.mrb[0].mxu0 %v2197
        %v2296 = vpop.f32.mrb[0].mxu0
        %v2297 = vadd.f32 0.0, %v2296
        %v2298 = vpop.f32.mrb[0].mxu0
        %v2299 = vpop.f32.mrb[0].mxu0
        %v2300 = vadd.f32 0.0, %v2299
        %v2301 = vpop.f32.mrb[0].mxu0
        %2302 = vmatprep.mubr.bf16.mxu0 0
        %2303 = vmatmul.mubr.bf16.gmra.mrb[0].mxu0 %v2200
        %v2304 = vpop.f32.mrb[0].mxu0
        %v2305 = vadd.f32 0.0, %v2304
        %v2306 = vpop.f32.mrb[0].mxu0
        %v2307 = vpop.f32.mrb[0].mxu0
        %v2308 = vadd.f32 0.0, %v2307
        %v2309 = vpop.f32.mrb[0].mxu0
        %2310 = vmatprep.mubr.bf16.mxu0 0
        %2311 = vmatmul.mubr.bf16.gmra.mrb[0].mxu0 %v2203
        %v2312 = vpop.f32.mrb[0].mxu0
        %v2313 = vadd.f32 0.0, %v2312
        %v2314 = vpop.f32.mrb[0].mxu0
        %v2315 = vpop.f32.mrb[0].mxu0
        %v2316 = vadd.f32 0.0, %v2315
        %v2317 = vpop.f32.mrb[0].mxu0
        %2318 = vmatprep.mubr.bf16.mxu0 0
        %2319 = vmatmul.mubr.bf16.gmra.mrb[0].mxu0 %v2206
        %v2320 = vpop.f32.mrb[0].mxu0
        %v2321 = vadd.f32 0.0, %v2320
        %v2322 = vpop.f32.mrb[0].mxu0
        %v2323 = vpop.f32.mrb[0].mxu0
        %v2324 = vadd.f32 0.0, %v2323
        %v2325 = vpop.f32.mrb[0].mxu0
        %2326 = vmatprep.mubr.bf16.mxu0 0
        %2327 = vmatmul.mubr.bf16.gmra.mrb[0].mxu0 %v2209
        %v2328 = vpop.f32.mrb[0].mxu0
        %v2329 = vadd.f32 0.0, %v2328
        %v2330 = vpop.f32.mrb[0].mxu0
        %v2331 = vpop.f32.mrb[0].mxu0
        %v2332 = vadd.f32 0.0, %v2331
        %v2333 = vpop.f32.mrb[0].mxu0
        %2334 = vmatprep.mubr.bf16.mxu0 0
        %2335 = vmatmul.mubr.bf16.gmra.mrb[0].mxu0 %v2212
        %v2336 = vpop.f32.mrb[0].mxu0
        %v2337 = vadd.f32 0.0, %v2336
        %v2338 = vpop.f32.mrb[0].mxu0
        %v2339 = vpop.f32.mrb[0].mxu0
        %v2340 = vadd.f32 0.0, %v2339
        %v2341 = vpop.f32.mrb[0].mxu0
        %2342 = vmatprep.mubr.bf16.mxu0 0
        %2343 = vmatmul.mubr.bf16.gmra.mrb[0].mxu0 %v2215
        %v2344 = vpop.f32.mrb[0].mxu0
        %v2345 = vadd.f32 0.0, %v2344
        %v2346 = vpop.f32.mrb[0].mxu0
        %v2347 = vpop.f32.mrb[0].mxu0
        %v2348 = vadd.f32 0.0, %v2347
        %v2349 = vpop.f32.mrb[0].mxu0
        %2350 = vmatprep.mubr.bf16.mxu0 0
        %2351 = vmatmul.mubr.bf16.gmra.mrb[0].mxu0 %v2218
        %v2352 = vpop.f32.mrb[0].mxu0
        %v2353 = vadd.f32 0.0, %v2352
        %v2354 = vpop.f32.mrb[0].mxu0
        %v2355 = vpop.f32.mrb[0].mxu0
        %v2356 = vadd.f32 0.0, %v2355
        %v2357 = vpop.f32.mrb[0].mxu0
        %2358 = vmatprep.mubr.bf16.mxu0 0
        %2359 = vmatmul.mubr.bf16.gmra.mrb[0].mxu0 %v2221
        %v2360 = vpop.f32.mrb[0].mxu0
        %v2361 = vadd.f32 0.0, %v2360
        %v2362 = vpop.f32.mrb[0].mxu0
        %v2363 = vpop.f32.mrb[0].mxu0
        %v2364 = vadd.f32 0.0, %v2363
        %v2365 = vpop.f32.mrb[0].mxu0
        %2366 = vmatprep.mubr.bf16.mxu0 0
        %2367 = vmatmul.mubr.bf16.gmra.mrb[0].mxu0 %v2224
        %v2368 = vpop.f32.mrb[0].mxu0
        %v2369 = vadd.f32 0.0, %v2368
        %v2370 = vpop.f32.mrb[0].mxu0
        %v2371 = vpop.f32.mrb[0].mxu0
        %v2372 = vadd.f32 0.0, %v2371
        %v2373 = vpop.f32.mrb[0].mxu0
        %2374 = vmatprep.mubr.bf16.mxu0 0
        %2375 = vmatmul.mubr.bf16.gmra.mrb[0].mxu0 %v2227
        %v2376 = vpop.f32.mrb[0].mxu0
        %v2377 = vadd.f32 0.0, %v2376
        %v2378 = vpop.f32.mrb[0].mxu0
        %v2379 = vpop.f32.mrb[0].mxu0
        %v2380 = vadd.f32 0.0, %v2379
        %v2381 = vpop.f32.mrb[0].mxu0
        %2382 = vmatprep.mubr.bf16.mxu0 0
        %2383 = vmatmul.mubr.bf16.gmra.mrb[0].mxu0 %v2230
        %v2384 = vpop.f32.mrb[0].mxu0
        %v2385 = vadd.f32 0.0, %v2384
        %v2386 = vpop.f32.mrb[0].mxu0
        %v2387 = vpop.f32.mrb[0].mxu0
        %v2388 = vadd.f32 0.0, %v2387
        %v2389 = vpop.f32.mrb[0].mxu0
        %2390 = vmatprep.mubr.bf16.mxu0 0
        %2391 = vmatmul.mubr.bf16.gmra.mrb[0].mxu0 %v2233
        %v2392 = vpop.f32.mrb[0].mxu0
        %v2393 = vadd.f32 0.0, %v2392
        %v2394 = vpop.f32.mrb[0].mxu0
        %v2395 = vpop.f32.mrb[0].mxu0
        %v2396 = vadd.f32 0.0, %v2395
        %v2397 = vpop.f32.mrb[0].mxu0
        %2398 = vdwg.mxu0
        %v2399 = vadd.f32 %v1946, %v2273
        %v2400 = vadd.f32 %v1949, %v2276
        %v2401 = vadd.f32 %v1954, %v2281
        %v2402 = vadd.f32 %v1957, %v2284
        %v2403 = vadd.f32 %v1962, %v2289
        %v2404 = vadd.f32 %v1965, %v2292
        %v2405 = vadd.f32 %v1970, %v2297
        %v2406 = vadd.f32 %v1973, %v2300
        %v2407 = vadd.f32 %v1978, %v2305
        %v2408 = vadd.f32 %v1981, %v2308
        %v2409 = vadd.f32 %v1986, %v2313
        %v2410 = vadd.f32 %v1989, %v2316
        %v2411 = vadd.f32 %v1994, %v2321
        %v2412 = vadd.f32 %v1997, %v2324
        %v2413 = vadd.f32 %v2002, %v2329
        %v2414 = vadd.f32 %v2005, %v2332
        %v2415 = vadd.f32 %v2010, %v2337
        %v2416 = vadd.f32 %v2013, %v2340
        %v2417 = vadd.f32 %v2018, %v2345
        %v2418 = vadd.f32 %v2021, %v2348
        %v2419 = vadd.f32 %v2026, %v2353
        %v2420 = vadd.f32 %v2029, %v2356
        %v2421 = vadd.f32 %v2034, %v2361
        %v2422 = vadd.f32 %v2037, %v2364
        %v2423 = vadd.f32 %v2042, %v2369
        %v2424 = vadd.f32 %v2045, %v2372
        %v2425 = vadd.f32 %v2050, %v2377
        %v2426 = vadd.f32 %v2053, %v2380
        %v2427 = vadd.f32 %v2058, %v2385
        %v2428 = vadd.f32 %v2061, %v2388
        %v2429 = vadd.f32 %v2066, %v2393
        %v2430 = vadd.f32 %v2069, %v2396
        %s2431 = scalar_lea.vmem %s1385, 384 [#allocation2]
        %v2432 = vld [vmem:[%s2431] sm:$0xf]
        %v2433 = vld [vmem:[%s2431 + $0x4] sm:$0xf]
        %v2434 = vld [vmem:[%s2431 + $0x8] sm:$0xf]
        %v2435 = vld [vmem:[%s2431 + $0xc] sm:$0xf]
        %v2436 = vld [vmem:[%s2431 + $0x10] sm:$0xf]
        %v2437 = vld [vmem:[%s2431 + $0x14] sm:$0xf]
        %v2438 = vld [vmem:[%s2431 + $0x18] sm:$0xf]
        %v2439 = vld [vmem:[%s2431 + $0x1c] sm:$0xf]
        %v2440 = vld [vmem:[%s2431 + $0x20] sm:$0xf]
        %v2441 = vld [vmem:[%s2431 + $0x24] sm:$0xf]
        %v2442 = vld [vmem:[%s2431 + $0x28] sm:$0xf]
        %v2443 = vld [vmem:[%s2431 + $0x2c] sm:$0xf]
        %v2444 = vld [vmem:[%s2431 + $0x30] sm:$0xf]
        %v2445 = vld [vmem:[%s2431 + $0x34] sm:$0xf]
        %v2446 = vld [vmem:[%s2431 + $0x38] sm:$0xf]
        %v2447 = vld [vmem:[%s2431 + $0x3c] sm:$0xf]
        %v2448 = vld [vmem:[%s2431 + $0x40] sm:$0xf]
        %v2449 = vld [vmem:[%s2431 + $0x44] sm:$0xf]
        %v2450 = vld [vmem:[%s2431 + $0x48] sm:$0xf]
        %v2451 = vld [vmem:[%s2431 + $0x4c] sm:$0xf]
        %v2452 = vld [vmem:[%s2431 + $0x50] sm:$0xf]
        %v2453 = vld [vmem:[%s2431 + $0x54] sm:$0xf]
        %v2454 = vld [vmem:[%s2431 + $0x58] sm:$0xf]
        %v2455 = vld [vmem:[%s2431 + $0x5c] sm:$0xf]
        %v2456 = vld [vmem:[%s2431 + $0x60] sm:$0xf]
        %v2457 = vld [vmem:[%s2431 + $0x64] sm:$0xf]
        %v2458 = vld [vmem:[%s2431 + $0x68] sm:$0xf]
        %v2459 = vld [vmem:[%s2431 + $0x6c] sm:$0xf]
        %v2460 = vld [vmem:[%s2431 + $0x70] sm:$0xf]
        %v2461 = vld [vmem:[%s2431 + $0x74] sm:$0xf]
        %v2462 = vld [vmem:[%s2431 + $0x78] sm:$0xf]
        %v2463 = vld [vmem:[%s2431 + $0x7c] sm:$0xf]
        %s2464 = scalar_lea.vmem %s1, 12
        %v2465 = vld [vmem:[%s2464] sm:$0xf]
        %v2498 = vunpack.c.l.b16 %v2432
        %v2499 = vunpack.c.l.b16 %v2433
        %v2500 = vunpack.c.l.b16 %v2434
        %v2501 = vunpack.c.l.b16 %v2435
        %v2502 = vunpack.c.l.b16 %v2436
        %v2503 = vunpack.c.l.b16 %v2437
        %v2504 = vunpack.c.l.b16 %v2438
        %v2505 = vunpack.c.l.b16 %v2439
        %v2506 = vunpack.c.l.b16 %v2440
        %v2507 = vunpack.c.l.b16 %v2441
        %v2508 = vunpack.c.l.b16 %v2442
        %v2509 = vunpack.c.l.b16 %v2443
        %v2510 = vunpack.c.l.b16 %v2444
        %v2511 = vunpack.c.l.b16 %v2445
        %v2512 = vunpack.c.l.b16 %v2446
        %v2513 = vunpack.c.l.b16 %v2447
        %v2514 = vunpack.c.l.b16 %v2448
        %v2515 = vunpack.c.l.b16 %v2449
        %v2516 = vunpack.c.l.b16 %v2450
        %v2517 = vunpack.c.l.b16 %v2451
        %v2518 = vunpack.c.l.b16 %v2452
        %v2519 = vunpack.c.l.b16 %v2453
        %v2520 = vunpack.c.l.b16 %v2454
        %v2521 = vunpack.c.l.b16 %v2455
        %v2522 = vunpack.c.l.b16 %v2456
        %v2523 = vunpack.c.l.b16 %v2457
        %v2524 = vunpack.c.l.b16 %v2458
        %v2525 = vunpack.c.l.b16 %v2459
        %v2526 = vunpack.c.l.b16 %v2460
        %v2527 = vunpack.c.l.b16 %v2461
        %v2528 = vunpack.c.l.b16 %v2462
        %v2529 = vunpack.c.l.b16 %v2463
        %v2530 = vpack.c.b16 %v2499, %v2498
        %v2531 = vpack.c.b16 %v2501, %v2500
        %v2532 = vpack.c.b16 %v2503, %v2502
        %v2533 = vpack.c.b16 %v2505, %v2504
        %v2534 = vpack.c.b16 %v2507, %v2506
        %v2535 = vpack.c.b16 %v2509, %v2508
        %v2536 = vpack.c.b16 %v2511, %v2510
        %v2537 = vpack.c.b16 %v2513, %v2512
        %v2538 = vpack.c.b16 %v2515, %v2514
        %v2539 = vpack.c.b16 %v2517, %v2516
        %v2540 = vpack.c.b16 %v2519, %v2518
        %v2541 = vpack.c.b16 %v2521, %v2520
        %v2542 = vpack.c.b16 %v2523, %v2522
        %v2543 = vpack.c.b16 %v2525, %v2524
        %v2544 = vpack.c.b16 %v2527, %v2526
        %v2545 = vpack.c.b16 %v2529, %v2528
        %v2547 = vsel %vm1566, %v2530, 0
        %v2550 = vsel %vm1566, %v2531, 0
        %v2553 = vsel %vm1566, %v2532, 0
        %v2556 = vsel %vm1566, %v2533, 0
        %v2559 = vsel %vm1566, %v2534, 0
        %v2562 = vsel %vm1566, %v2535, 0
        %v2565 = vsel %vm1566, %v2536, 0
        %v2568 = vsel %vm1566, %v2537, 0
        %v2571 = vsel %vm1566, %v2538, 0
        %v2574 = vsel %vm1566, %v2539, 0
        %v2577 = vsel %vm1566, %v2540, 0
        %v2580 = vsel %vm1566, %v2541, 0
        %v2583 = vsel %vm1566, %v2542, 0
        %v2586 = vsel %vm1566, %v2543, 0
        %v2589 = vsel %vm1566, %v2544, 0
        %v2592 = vsel %vm1566, %v2545, 0
        %v2595 = vsel %vm1615, %v2465, 0
        %2597 = vmatprep.subr.bf16.mxu0 0
        %2598 = vmatpush1.bf16.msra.mxu0 %v2595
        %2599 = vmatprep.subr.bf16.mxu0 0
        %2600 = vmatpush1.bf16.msra.mxu0 0
        %2601 = vmatprep.subr.bf16.mxu0 0
        %2602 = vmatpush1.bf16.msra.mxu0 0
        %2603 = vmatprep.subr.bf16.mxu0 0
        %2604 = vmatpush1.bf16.msra.mxu0 0
        %2605 = vmatprep.subr.bf16.mxu0 0
        %2606 = vmatpush1.bf16.msra.mxu0 0
        %2607 = vmatprep.subr.bf16.mxu0 0
        %2608 = vmatpush1.bf16.msra.mxu0 0
        %2609 = vmatprep.subr.bf16.mxu0 0
        %2610 = vmatpush1.bf16.msra.mxu0 0
        %2611 = vmatprep.subr.bf16.mxu0 0
        %2612 = vmatpush1.bf16.msra.mxu0 0
        %2613 = vmatprep.subr.bf16.mxu0 0
        %2614 = vmatpush1.bf16.msra.mxu0 0
        %2615 = vmatprep.subr.bf16.mxu0 0
        %2616 = vmatpush1.bf16.msra.mxu0 0
        %2617 = vmatprep.subr.bf16.mxu0 0
        %2618 = vmatpush1.bf16.msra.mxu0 0
        %2619 = vmatprep.subr.bf16.mxu0 0
        %2620 = vmatpush1.bf16.msra.mxu0 0
        %2621 = vmatprep.subr.bf16.mxu0 0
        %2622 = vmatpush1.bf16.msra.mxu0 0
        %2623 = vmatprep.subr.bf16.mxu0 0
        %2624 = vmatpush1.bf16.msra.mxu0 0
        %2625 = vmatprep.subr.bf16.mxu0 0
        %2626 = vmatpush1.bf16.msra.mxu0 0
        %2627 = vmatprep.subr.bf16.mxu0 0
        %2628 = vmatpush1.bf16.msra.mxu0 0
        %2629 = vmatprep.mubr.bf16.mxu0 0
        %2630 = vmatmul.mubr.bf16.gmra.mrb[0].mxu0 %v2547
        %v2631 = vpop.f32.mrb[0].mxu0
        %v2632 = vadd.f32 0.0, %v2631
        %v2633 = vpop.f32.mrb[0].mxu0
        %v2634 = vpop.f32.mrb[0].mxu0
        %v2635 = vadd.f32 0.0, %v2634
        %v2636 = vpop.f32.mrb[0].mxu0
        %2637 = vmatprep.mubr.bf16.mxu0 0
        %2638 = vmatmul.mubr.bf16.gmra.mrb[0].mxu0 %v2550
        %v2639 = vpop.f32.mrb[0].mxu0
        %v2640 = vadd.f32 0.0, %v2639
        %v2641 = vpop.f32.mrb[0].mxu0
        %v2642 = vpop.f32.mrb[0].mxu0
        %v2643 = vadd.f32 0.0, %v2642
        %v2644 = vpop.f32.mrb[0].mxu0
        %2645 = vmatprep.mubr.bf16.mxu0 0
        %2646 = vmatmul.mubr.bf16.gmra.mrb[0].mxu0 %v2553
        %v2647 = vpop.f32.mrb[0].mxu0
        %v2648 = vadd.f32 0.0, %v2647
        %v2649 = vpop.f32.mrb[0].mxu0
        %v2650 = vpop.f32.mrb[0].mxu0
        %v2651 = vadd.f32 0.0, %v2650
        %v2652 = vpop.f32.mrb[0].mxu0
        %2653 = vmatprep.mubr.bf16.mxu0 0
        %2654 = vmatmul.mubr.bf16.gmra.mrb[0].mxu0 %v2556
        %v2655 = vpop.f32.mrb[0].mxu0
        %v2656 = vadd.f32 0.0, %v2655
        %v2657 = vpop.f32.mrb[0].mxu0
        %v2658 = vpop.f32.mrb[0].mxu0
        %v2659 = vadd.f32 0.0, %v2658
        %v2660 = vpop.f32.mrb[0].mxu0
        %2661 = vmatprep.mubr.bf16.mxu0 0
        %2662 = vmatmul.mubr.bf16.gmra.mrb[0].mxu0 %v2559
        %v2663 = vpop.f32.mrb[0].mxu0
        %v2664 = vadd.f32 0.0, %v2663
        %v2665 = vpop.f32.mrb[0].mxu0
        %v2666 = vpop.f32.mrb[0].mxu0
        %v2667 = vadd.f32 0.0, %v2666
        %v2668 = vpop.f32.mrb[0].mxu0
        %2669 = vmatprep.mubr.bf16.mxu0 0
        %2670 = vmatmul.mubr.bf16.gmra.mrb[0].mxu0 %v2562
        %v2671 = vpop.f32.mrb[0].mxu0
        %v2672 = vadd.f32 0.0, %v2671
        %v2673 = vpop.f32.mrb[0].mxu0
        %v2674 = vpop.f32.mrb[0].mxu0
        %v2675 = vadd.f32 0.0, %v2674
        %v2676 = vpop.f32.mrb[0].mxu0
        %2677 = vmatprep.mubr.bf16.mxu0 0
        %2678 = vmatmul.mubr.bf16.gmra.mrb[0].mxu0 %v2565
        %v2679 = vpop.f32.mrb[0].mxu0
        %v2680 = vadd.f32 0.0, %v2679
        %v2681 = vpop.f32.mrb[0].mxu0
        %v2682 = vpop.f32.mrb[0].mxu0
        %v2683 = vadd.f32 0.0, %v2682
        %v2684 = vpop.f32.mrb[0].mxu0
        %2685 = vmatprep.mubr.bf16.mxu0 0
        %2686 = vmatmul.mubr.bf16.gmra.mrb[0].mxu0 %v2568
        %v2687 = vpop.f32.mrb[0].mxu0
        %v2688 = vadd.f32 0.0, %v2687
        %v2689 = vpop.f32.mrb[0].mxu0
        %v2690 = vpop.f32.mrb[0].mxu0
        %v2691 = vadd.f32 0.0, %v2690
        %v2692 = vpop.f32.mrb[0].mxu0
        %2693 = vmatprep.mubr.bf16.mxu0 0
        %2694 = vmatmul.mubr.bf16.gmra.mrb[0].mxu0 %v2571
        %v2695 = vpop.f32.mrb[0].mxu0
        %v2696 = vadd.f32 0.0, %v2695
        %v2697 = vpop.f32.mrb[0].mxu0
        %v2698 = vpop.f32.mrb[0].mxu0
        %v2699 = vadd.f32 0.0, %v2698
        %v2700 = vpop.f32.mrb[0].mxu0
        %2701 = vmatprep.mubr.bf16.mxu0 0
        %2702 = vmatmul.mubr.bf16.gmra.mrb[0].mxu0 %v2574
        %v2703 = vpop.f32.mrb[0].mxu0
        %v2704 = vadd.f32 0.0, %v2703
        %v2705 = vpop.f32.mrb[0].mxu0
        %v2706 = vpop.f32.mrb[0].mxu0
        %v2707 = vadd.f32 0.0, %v2706
        %v2708 = vpop.f32.mrb[0].mxu0
        %2709 = vmatprep.mubr.bf16.mxu0 0
        %2710 = vmatmul.mubr.bf16.gmra.mrb[0].mxu0 %v2577
        %v2711 = vpop.f32.mrb[0].mxu0
        %v2712 = vadd.f32 0.0, %v2711
        %v2713 = vpop.f32.mrb[0].mxu0
        %v2714 = vpop.f32.mrb[0].mxu0
        %v2715 = vadd.f32 0.0, %v2714
        %v2716 = vpop.f32.mrb[0].mxu0
        %2717 = vmatprep.mubr.bf16.mxu0 0
        %2718 = vmatmul.mubr.bf16.gmra.mrb[0].mxu0 %v2580
        %v2719 = vpop.f32.mrb[0].mxu0
        %v2720 = vadd.f32 0.0, %v2719
        %v2721 = vpop.f32.mrb[0].mxu0
        %v2722 = vpop.f32.mrb[0].mxu0
        %v2723 = vadd.f32 0.0, %v2722
        %v2724 = vpop.f32.mrb[0].mxu0
        %2725 = vmatprep.mubr.bf16.mxu0 0
        %2726 = vmatmul.mubr.bf16.gmra.mrb[0].mxu0 %v2583
        %v2727 = vpop.f32.mrb[0].mxu0
        %v2728 = vadd.f32 0.0, %v2727
        %v2729 = vpop.f32.mrb[0].mxu0
        %v2730 = vpop.f32.mrb[0].mxu0
        %v2731 = vadd.f32 0.0, %v2730
        %v2732 = vpop.f32.mrb[0].mxu0
        %2733 = vmatprep.mubr.bf16.mxu0 0
        %2734 = vmatmul.mubr.bf16.gmra.mrb[0].mxu0 %v2586
        %v2735 = vpop.f32.mrb[0].mxu0
        %v2736 = vadd.f32 0.0, %v2735
        %v2737 = vpop.f32.mrb[0].mxu0
        %v2738 = vpop.f32.mrb[0].mxu0
        %v2739 = vadd.f32 0.0, %v2738
        %v2740 = vpop.f32.mrb[0].mxu0
        %2741 = vmatprep.mubr.bf16.mxu0 0
        %2742 = vmatmul.mubr.bf16.gmra.mrb[0].mxu0 %v2589
        %v2743 = vpop.f32.mrb[0].mxu0
        %v2744 = vadd.f32 0.0, %v2743
        %v2745 = vpop.f32.mrb[0].mxu0
        %v2746 = vpop.f32.mrb[0].mxu0
        %v2747 = vadd.f32 0.0, %v2746
        %v2748 = vpop.f32.mrb[0].mxu0
        %2749 = vmatprep.mubr.bf16.mxu0 0
        %2750 = vmatmul.mubr.bf16.gmra.mrb[0].mxu0 %v2592
        %v2751 = vpop.f32.mrb[0].mxu0
        %v2752 = vadd.f32 0.0, %v2751
        %v2753 = vpop.f32.mrb[0].mxu0
        %v2754 = vpop.f32.mrb[0].mxu0
        %v2755 = vadd.f32 0.0, %v2754
        %v2756 = vpop.f32.mrb[0].mxu0
        %2757 = vdwg.mxu0
        %v2758 = vadd.f32 %v2399, %v2632
        %v2759 = vadd.f32 %v2400, %v2635
        %v2760 = vadd.f32 %v2401, %v2640
        %v2761 = vadd.f32 %v2402, %v2643
        %v2762 = vadd.f32 %v2403, %v2648
        %v2763 = vadd.f32 %v2404, %v2651
        %v2764 = vadd.f32 %v2405, %v2656
        %v2765 = vadd.f32 %v2406, %v2659
        %v2766 = vadd.f32 %v2407, %v2664
        %v2767 = vadd.f32 %v2408, %v2667
        %v2768 = vadd.f32 %v2409, %v2672
        %v2769 = vadd.f32 %v2410, %v2675
        %v2770 = vadd.f32 %v2411, %v2680
        %v2771 = vadd.f32 %v2412, %v2683
        %v2772 = vadd.f32 %v2413, %v2688
        %v2773 = vadd.f32 %v2414, %v2691
        %v2774 = vadd.f32 %v2415, %v2696
        %v2775 = vadd.f32 %v2416, %v2699
        %v2776 = vadd.f32 %v2417, %v2704
        %v2777 = vadd.f32 %v2418, %v2707
        %v2778 = vadd.f32 %v2419, %v2712
        %v2779 = vadd.f32 %v2420, %v2715
        %v2780 = vadd.f32 %v2421, %v2720
        %v2781 = vadd.f32 %v2422, %v2723
        %v2782 = vadd.f32 %v2423, %v2728
        %v2783 = vadd.f32 %v2424, %v2731
        %v2784 = vadd.f32 %v2425, %v2736
        %v2785 = vadd.f32 %v2426, %v2739
        %v2786 = vadd.f32 %v2427, %v2744
        %v2787 = vadd.f32 %v2428, %v2747
        %v2788 = vadd.f32 %v2429, %v2752
        %v2789 = vadd.f32 %v2430, %v2755
        %s2790 = scalar_lea.vmem %s1385, 512 [#allocation2]
        %v2791 = vld [vmem:[%s2790] sm:$0xf]
        %v2792 = vld [vmem:[%s2790 + $0x4] sm:$0xf]
        %v2793 = vld [vmem:[%s2790 + $0x8] sm:$0xf]
        %v2794 = vld [vmem:[%s2790 + $0xc] sm:$0xf]
        %v2795 = vld [vmem:[%s2790 + $0x10] sm:$0xf]
        %v2796 = vld [vmem:[%s2790 + $0x14] sm:$0xf]
        %v2797 = vld [vmem:[%s2790 + $0x18] sm:$0xf]
        %v2798 = vld [vmem:[%s2790 + $0x1c] sm:$0xf]
        %v2799 = vld [vmem:[%s2790 + $0x20] sm:$0xf]
        %v2800 = vld [vmem:[%s2790 + $0x24] sm:$0xf]
        %v2801 = vld [vmem:[%s2790 + $0x28] sm:$0xf]
        %v2802 = vld [vmem:[%s2790 + $0x2c] sm:$0xf]
        %v2803 = vld [vmem:[%s2790 + $0x30] sm:$0xf]
        %v2804 = vld [vmem:[%s2790 + $0x34] sm:$0xf]
        %v2805 = vld [vmem:[%s2790 + $0x38] sm:$0xf]
        %v2806 = vld [vmem:[%s2790 + $0x3c] sm:$0xf]
        %v2807 = vld [vmem:[%s2790 + $0x40] sm:$0xf]
        %v2808 = vld [vmem:[%s2790 + $0x44] sm:$0xf]
        %v2809 = vld [vmem:[%s2790 + $0x48] sm:$0xf]
        %v2810 = vld [vmem:[%s2790 + $0x4c] sm:$0xf]
        %v2811 = vld [vmem:[%s2790 + $0x50] sm:$0xf]
        %v2812 = vld [vmem:[%s2790 + $0x54] sm:$0xf]
        %v2813 = vld [vmem:[%s2790 + $0x58] sm:$0xf]
        %v2814 = vld [vmem:[%s2790 + $0x5c] sm:$0xf]
        %v2815 = vld [vmem:[%s2790 + $0x60] sm:$0xf]
        %v2816 = vld [vmem:[%s2790 + $0x64] sm:$0xf]
        %v2817 = vld [vmem:[%s2790 + $0x68] sm:$0xf]
        %v2818 = vld [vmem:[%s2790 + $0x6c] sm:$0xf]
        %v2819 = vld [vmem:[%s2790 + $0x70] sm:$0xf]
        %v2820 = vld [vmem:[%s2790 + $0x74] sm:$0xf]
        %v2821 = vld [vmem:[%s2790 + $0x78] sm:$0xf]
        %v2822 = vld [vmem:[%s2790 + $0x7c] sm:$0xf]
        %s2823 = scalar_lea.vmem %s1, 16
        %v2824 = vld [vmem:[%s2823] sm:$0xf]
        %v2857 = vunpack.c.l.b16 %v2791
        %v2858 = vunpack.c.l.b16 %v2792
        %v2859 = vunpack.c.l.b16 %v2793
        %v2860 = vunpack.c.l.b16 %v2794
        %v2861 = vunpack.c.l.b16 %v2795
        %v2862 = vunpack.c.l.b16 %v2796
        %v2863 = vunpack.c.l.b16 %v2797
        %v2864 = vunpack.c.l.b16 %v2798
        %v2865 = vunpack.c.l.b16 %v2799
        %v2866 = vunpack.c.l.b16 %v2800
        %v2867 = vunpack.c.l.b16 %v2801
        %v2868 = vunpack.c.l.b16 %v2802
        %v2869 = vunpack.c.l.b16 %v2803
        %v2870 = vunpack.c.l.b16 %v2804
        %v2871 = vunpack.c.l.b16 %v2805
        %v2872 = vunpack.c.l.b16 %v2806
        %v2873 = vunpack.c.l.b16 %v2807
        %v2874 = vunpack.c.l.b16 %v2808
        %v2875 = vunpack.c.l.b16 %v2809
        %v2876 = vunpack.c.l.b16 %v2810
        %v2877 = vunpack.c.l.b16 %v2811
        %v2878 = vunpack.c.l.b16 %v2812
        %v2879 = vunpack.c.l.b16 %v2813
        %v2880 = vunpack.c.l.b16 %v2814
        %v2881 = vunpack.c.l.b16 %v2815
        %v2882 = vunpack.c.l.b16 %v2816
        %v2883 = vunpack.c.l.b16 %v2817
        %v2884 = vunpack.c.l.b16 %v2818
        %v2885 = vunpack.c.l.b16 %v2819
        %v2886 = vunpack.c.l.b16 %v2820
        %v2887 = vunpack.c.l.b16 %v2821
        %v2888 = vunpack.c.l.b16 %v2822
        %v2889 = vpack.c.b16 %v2858, %v2857
        %v2890 = vpack.c.b16 %v2860, %v2859
        %v2891 = vpack.c.b16 %v2862, %v2861
        %v2892 = vpack.c.b16 %v2864, %v2863
        %v2893 = vpack.c.b16 %v2866, %v2865
        %v2894 = vpack.c.b16 %v2868, %v2867
        %v2895 = vpack.c.b16 %v2870, %v2869
        %v2896 = vpack.c.b16 %v2872, %v2871
        %v2897 = vpack.c.b16 %v2874, %v2873
        %v2898 = vpack.c.b16 %v2876, %v2875
        %v2899 = vpack.c.b16 %v2878, %v2877
        %v2900 = vpack.c.b16 %v2880, %v2879
        %v2901 = vpack.c.b16 %v2882, %v2881
        %v2902 = vpack.c.b16 %v2884, %v2883
        %v2903 = vpack.c.b16 %v2886, %v2885
        %v2904 = vpack.c.b16 %v2888, %v2887
        %v2906 = vsel %vm1566, %v2889, 0
        %v2909 = vsel %vm1566, %v2890, 0
        %v2912 = vsel %vm1566, %v2891, 0
        %v2915 = vsel %vm1566, %v2892, 0
        %v2918 = vsel %vm1566, %v2893, 0
        %v2921 = vsel %vm1566, %v2894, 0
        %v2924 = vsel %vm1566, %v2895, 0
        %v2927 = vsel %vm1566, %v2896, 0
        %v2930 = vsel %vm1566, %v2897, 0
        %v2933 = vsel %vm1566, %v2898, 0
        %v2936 = vsel %vm1566, %v2899, 0
        %v2939 = vsel %vm1566, %v2900, 0
        %v2942 = vsel %vm1566, %v2901, 0
        %v2945 = vsel %vm1566, %v2902, 0
        %v2948 = vsel %vm1566, %v2903, 0
        %v2951 = vsel %vm1566, %v2904, 0
        %v2954 = vsel %vm1615, %v2824, 0
        %2956 = vmatprep.subr.bf16.mxu0 0
        %2957 = vmatpush1.bf16.msra.mxu0 %v2954
        %2958 = vmatprep.subr.bf16.mxu0 0
        %2959 = vmatpush1.bf16.msra.mxu0 0
        %2960 = vmatprep.subr.bf16.mxu0 0
        %2961 = vmatpush1.bf16.msra.mxu0 0
        %2962 = vmatprep.subr.bf16.mxu0 0
        %2963 = vmatpush1.bf16.msra.mxu0 0
        %2964 = vmatprep.subr.bf16.mxu0 0
        %2965 = vmatpush1.bf16.msra.mxu0 0
        %2966 = vmatprep.subr.bf16.mxu0 0
        %2967 = vmatpush1.bf16.msra.mxu0 0
        %2968 = vmatprep.subr.bf16.mxu0 0
        %2969 = vmatpush1.bf16.msra.mxu0 0
        %2970 = vmatprep.subr.bf16.mxu0 0
        %2971 = vmatpush1.bf16.msra.mxu0 0
        %2972 = vmatprep.subr.bf16.mxu0 0
        %2973 = vmatpush1.bf16.msra.mxu0 0
        %2974 = vmatprep.subr.bf16.mxu0 0
        %2975 = vmatpush1.bf16.msra.mxu0 0
        %2976 = vmatprep.subr.bf16.mxu0 0
        %2977 = vmatpush1.bf16.msra.mxu0 0
        %2978 = vmatprep.subr.bf16.mxu0 0
        %2979 = vmatpush1.bf16.msra.mxu0 0
        %2980 = vmatprep.subr.bf16.mxu0 0
        %2981 = vmatpush1.bf16.msra.mxu0 0
        %2982 = vmatprep.subr.bf16.mxu0 0
        %2983 = vmatpush1.bf16.msra.mxu0 0
        %2984 = vmatprep.subr.bf16.mxu0 0
        %2985 = vmatpush1.bf16.msra.mxu0 0
        %2986 = vmatprep.subr.bf16.mxu0 0
        %2987 = vmatpush1.bf16.msra.mxu0 0
        %2988 = vmatprep.mubr.bf16.mxu0 0
        %2989 = vmatmul.mubr.bf16.gmra.mrb[0].mxu0 %v2906
        %v2990 = vpop.f32.mrb[0].mxu0
        %v2991 = vadd.f32 0.0, %v2990
        %v2992 = vpop.f32.mrb[0].mxu0
        %v2993 = vpop.f32.mrb[0].mxu0
        %v2994 = vadd.f32 0.0, %v2993
        %v2995 = vpop.f32.mrb[0].mxu0
        %2996 = vmatprep.mubr.bf16.mxu0 0
        %2997 = vmatmul.mubr.bf16.gmra.mrb[0].mxu0 %v2909
        %v2998 = vpop.f32.mrb[0].mxu0
        %v2999 = vadd.f32 0.0, %v2998
        %v3000 = vpop.f32.mrb[0].mxu0
        %v3001 = vpop.f32.mrb[0].mxu0
        %v3002 = vadd.f32 0.0, %v3001
        %v3003 = vpop.f32.mrb[0].mxu0
        %3004 = vmatprep.mubr.bf16.mxu0 0
        %3005 = vmatmul.mubr.bf16.gmra.mrb[0].mxu0 %v2912
        %v3006 = vpop.f32.mrb[0].mxu0
        %v3007 = vadd.f32 0.0, %v3006
        %v3008 = vpop.f32.mrb[0].mxu0
        %v3009 = vpop.f32.mrb[0].mxu0
        %v3010 = vadd.f32 0.0, %v3009
        %v3011 = vpop.f32.mrb[0].mxu0
        %3012 = vmatprep.mubr.bf16.mxu0 0
        %3013 = vmatmul.mubr.bf16.gmra.mrb[0].mxu0 %v2915
        %v3014 = vpop.f32.mrb[0].mxu0
        %v3015 = vadd.f32 0.0, %v3014
        %v3016 = vpop.f32.mrb[0].mxu0
        %v3017 = vpop.f32.mrb[0].mxu0
        %v3018 = vadd.f32 0.0, %v3017
        %v3019 = vpop.f32.mrb[0].mxu0
        %3020 = vmatprep.mubr.bf16.mxu0 0
        %3021 = vmatmul.mubr.bf16.gmra.mrb[0].mxu0 %v2918
        %v3022 = vpop.f32.mrb[0].mxu0
        %v3023 = vadd.f32 0.0, %v3022
        %v3024 = vpop.f32.mrb[0].mxu0
        %v3025 = vpop.f32.mrb[0].mxu0
        %v3026 = vadd.f32 0.0, %v3025
        %v3027 = vpop.f32.mrb[0].mxu0
        %3028 = vmatprep.mubr.bf16.mxu0 0
        %3029 = vmatmul.mubr.bf16.gmra.mrb[0].mxu0 %v2921
        %v3030 = vpop.f32.mrb[0].mxu0
        %v3031 = vadd.f32 0.0, %v3030
        %v3032 = vpop.f32.mrb[0].mxu0
        %v3033 = vpop.f32.mrb[0].mxu0
        %v3034 = vadd.f32 0.0, %v3033
        %v3035 = vpop.f32.mrb[0].mxu0
        %3036 = vmatprep.mubr.bf16.mxu0 0
        %3037 = vmatmul.mubr.bf16.gmra.mrb[0].mxu0 %v2924
        %v3038 = vpop.f32.mrb[0].mxu0
        %v3039 = vadd.f32 0.0, %v3038
        %v3040 = vpop.f32.mrb[0].mxu0
        %v3041 = vpop.f32.mrb[0].mxu0
        %v3042 = vadd.f32 0.0, %v3041
        %v3043 = vpop.f32.mrb[0].mxu0
        %3044 = vmatprep.mubr.bf16.mxu0 0
        %3045 = vmatmul.mubr.bf16.gmra.mrb[0].mxu0 %v2927
        %v3046 = vpop.f32.mrb[0].mxu0
        %v3047 = vadd.f32 0.0, %v3046
        %v3048 = vpop.f32.mrb[0].mxu0
        %v3049 = vpop.f32.mrb[0].mxu0
        %v3050 = vadd.f32 0.0, %v3049
        %v3051 = vpop.f32.mrb[0].mxu0
        %3052 = vmatprep.mubr.bf16.mxu0 0
        %3053 = vmatmul.mubr.bf16.gmra.mrb[0].mxu0 %v2930
        %v3054 = vpop.f32.mrb[0].mxu0
        %v3055 = vadd.f32 0.0, %v3054
        %v3056 = vpop.f32.mrb[0].mxu0
        %v3057 = vpop.f32.mrb[0].mxu0
        %v3058 = vadd.f32 0.0, %v3057
        %v3059 = vpop.f32.mrb[0].mxu0
        %3060 = vmatprep.mubr.bf16.mxu0 0
        %3061 = vmatmul.mubr.bf16.gmra.mrb[0].mxu0 %v2933
        %v3062 = vpop.f32.mrb[0].mxu0
        %v3063 = vadd.f32 0.0, %v3062
        %v3064 = vpop.f32.mrb[0].mxu0
        %v3065 = vpop.f32.mrb[0].mxu0
        %v3066 = vadd.f32 0.0, %v3065
        %v3067 = vpop.f32.mrb[0].mxu0
        %3068 = vmatprep.mubr.bf16.mxu0 0
        %3069 = vmatmul.mubr.bf16.gmra.mrb[0].mxu0 %v2936
        %v3070 = vpop.f32.mrb[0].mxu0
        %v3071 = vadd.f32 0.0, %v3070
        %v3072 = vpop.f32.mrb[0].mxu0
        %v3073 = vpop.f32.mrb[0].mxu0
        %v3074 = vadd.f32 0.0, %v3073
        %v3075 = vpop.f32.mrb[0].mxu0
        %3076 = vmatprep.mubr.bf16.mxu0 0
        %3077 = vmatmul.mubr.bf16.gmra.mrb[0].mxu0 %v2939
        %v3078 = vpop.f32.mrb[0].mxu0
        %v3079 = vadd.f32 0.0, %v3078
        %v3080 = vpop.f32.mrb[0].mxu0
        %v3081 = vpop.f32.mrb[0].mxu0
        %v3082 = vadd.f32 0.0, %v3081
        %v3083 = vpop.f32.mrb[0].mxu0
        %3084 = vmatprep.mubr.bf16.mxu0 0
        %3085 = vmatmul.mubr.bf16.gmra.mrb[0].mxu0 %v2942
        %v3086 = vpop.f32.mrb[0].mxu0
        %v3087 = vadd.f32 0.0, %v3086
        %v3088 = vpop.f32.mrb[0].mxu0
        %v3089 = vpop.f32.mrb[0].mxu0
        %v3090 = vadd.f32 0.0, %v3089
        %v3091 = vpop.f32.mrb[0].mxu0
        %3092 = vmatprep.mubr.bf16.mxu0 0
        %3093 = vmatmul.mubr.bf16.gmra.mrb[0].mxu0 %v2945
        %v3094 = vpop.f32.mrb[0].mxu0
        %v3095 = vadd.f32 0.0, %v3094
        %v3096 = vpop.f32.mrb[0].mxu0
        %v3097 = vpop.f32.mrb[0].mxu0
        %v3098 = vadd.f32 0.0, %v3097
        %v3099 = vpop.f32.mrb[0].mxu0
        %3100 = vmatprep.mubr.bf16.mxu0 0
        %3101 = vmatmul.mubr.bf16.gmra.mrb[0].mxu0 %v2948
        %v3102 = vpop.f32.mrb[0].mxu0
        %v3103 = vadd.f32 0.0, %v3102
        %v3104 = vpop.f32.mrb[0].mxu0
        %v3105 = vpop.f32.mrb[0].mxu0
        %v3106 = vadd.f32 0.0, %v3105
        %v3107 = vpop.f32.mrb[0].mxu0
        %3108 = vmatprep.mubr.bf16.mxu0 0
        %3109 = vmatmul.mubr.bf16.gmra.mrb[0].mxu0 %v2951
        %v3110 = vpop.f32.mrb[0].mxu0
        %v3111 = vadd.f32 0.0, %v3110
        %v3112 = vpop.f32.mrb[0].mxu0
        %v3113 = vpop.f32.mrb[0].mxu0
        %v3114 = vadd.f32 0.0, %v3113
        %v3115 = vpop.f32.mrb[0].mxu0
        %3116 = vdwg.mxu0
        %v3117 = vadd.f32 %v2758, %v2991
        %v3118 = vadd.f32 %v2759, %v2994
        %v3119 = vadd.f32 %v2760, %v2999
        %v3120 = vadd.f32 %v2761, %v3002
        %v3121 = vadd.f32 %v2762, %v3007
        %v3122 = vadd.f32 %v2763, %v3010
        %v3123 = vadd.f32 %v2764, %v3015
        %v3124 = vadd.f32 %v2765, %v3018
        %v3125 = vadd.f32 %v2766, %v3023
        %v3126 = vadd.f32 %v2767, %v3026
        %v3127 = vadd.f32 %v2768, %v3031
        %v3128 = vadd.f32 %v2769, %v3034
        %v3129 = vadd.f32 %v2770, %v3039
        %v3130 = vadd.f32 %v2771, %v3042
        %v3131 = vadd.f32 %v2772, %v3047
        %v3132 = vadd.f32 %v2773, %v3050
        %v3133 = vadd.f32 %v2774, %v3055
        %v3134 = vadd.f32 %v2775, %v3058
        %v3135 = vadd.f32 %v2776, %v3063
        %v3136 = vadd.f32 %v2777, %v3066
        %v3137 = vadd.f32 %v2778, %v3071
        %v3138 = vadd.f32 %v2779, %v3074
        %v3139 = vadd.f32 %v2780, %v3079
        %v3140 = vadd.f32 %v2781, %v3082
        %v3141 = vadd.f32 %v2782, %v3087
        %v3142 = vadd.f32 %v2783, %v3090
        %v3143 = vadd.f32 %v2784, %v3095
        %v3144 = vadd.f32 %v2785, %v3098
        %v3145 = vadd.f32 %v2786, %v3103
        %v3146 = vadd.f32 %v2787, %v3106
        %v3147 = vadd.f32 %v2788, %v3111
        %v3148 = vadd.f32 %v2789, %v3114
        %s3149 = scalar_lea.vmem %s1385, 640 [#allocation2]
        %v3150 = vld [vmem:[%s3149] sm:$0xf]
        %v3151 = vld [vmem:[%s3149 + $0x4] sm:$0xf]
        %v3152 = vld [vmem:[%s3149 + $0x8] sm:$0xf]
        %v3153 = vld [vmem:[%s3149 + $0xc] sm:$0xf]
        %v3154 = vld [vmem:[%s3149 + $0x10] sm:$0xf]
        %v3155 = vld [vmem:[%s3149 + $0x14] sm:$0xf]
        %v3156 = vld [vmem:[%s3149 + $0x18] sm:$0xf]
        %v3157 = vld [vmem:[%s3149 + $0x1c] sm:$0xf]
        %v3158 = vld [vmem:[%s3149 + $0x20] sm:$0xf]
        %v3159 = vld [vmem:[%s3149 + $0x24] sm:$0xf]
        %v3160 = vld [vmem:[%s3149 + $0x28] sm:$0xf]
        %v3161 = vld [vmem:[%s3149 + $0x2c] sm:$0xf]
        %v3162 = vld [vmem:[%s3149 + $0x30] sm:$0xf]
        %v3163 = vld [vmem:[%s3149 + $0x34] sm:$0xf]
        %v3164 = vld [vmem:[%s3149 + $0x38] sm:$0xf]
        %v3165 = vld [vmem:[%s3149 + $0x3c] sm:$0xf]
        %v3166 = vld [vmem:[%s3149 + $0x40] sm:$0xf]
        %v3167 = vld [vmem:[%s3149 + $0x44] sm:$0xf]
        %v3168 = vld [vmem:[%s3149 + $0x48] sm:$0xf]
        %v3169 = vld [vmem:[%s3149 + $0x4c] sm:$0xf]
        %v3170 = vld [vmem:[%s3149 + $0x50] sm:$0xf]
        %v3171 = vld [vmem:[%s3149 + $0x54] sm:$0xf]
        %v3172 = vld [vmem:[%s3149 + $0x58] sm:$0xf]
        %v3173 = vld [vmem:[%s3149 + $0x5c] sm:$0xf]
        %v3174 = vld [vmem:[%s3149 + $0x60] sm:$0xf]
        %v3175 = vld [vmem:[%s3149 + $0x64] sm:$0xf]
        %v3176 = vld [vmem:[%s3149 + $0x68] sm:$0xf]
        %v3177 = vld [vmem:[%s3149 + $0x6c] sm:$0xf]
        %v3178 = vld [vmem:[%s3149 + $0x70] sm:$0xf]
        %v3179 = vld [vmem:[%s3149 + $0x74] sm:$0xf]
        %v3180 = vld [vmem:[%s3149 + $0x78] sm:$0xf]
        %v3181 = vld [vmem:[%s3149 + $0x7c] sm:$0xf]
        %s3182 = scalar_lea.vmem %s1, 20
        %v3183 = vld [vmem:[%s3182] sm:$0xf]
        %v3216 = vunpack.c.l.b16 %v3150
        %v3217 = vunpack.c.l.b16 %v3151
        %v3218 = vunpack.c.l.b16 %v3152
        %v3219 = vunpack.c.l.b16 %v3153
        %v3220 = vunpack.c.l.b16 %v3154
        %v3221 = vunpack.c.l.b16 %v3155
        %v3222 = vunpack.c.l.b16 %v3156
        %v3223 = vunpack.c.l.b16 %v3157
        %v3224 = vunpack.c.l.b16 %v3158
        %v3225 = vunpack.c.l.b16 %v3159
        %v3226 = vunpack.c.l.b16 %v3160
        %v3227 = vunpack.c.l.b16 %v3161
        %v3228 = vunpack.c.l.b16 %v3162
        %v3229 = vunpack.c.l.b16 %v3163
        %v3230 = vunpack.c.l.b16 %v3164
        %v3231 = vunpack.c.l.b16 %v3165
        %v3232 = vunpack.c.l.b16 %v3166
        %v3233 = vunpack.c.l.b16 %v3167
        %v3234 = vunpack.c.l.b16 %v3168
        %v3235 = vunpack.c.l.b16 %v3169
        %v3236 = vunpack.c.l.b16 %v3170
        %v3237 = vunpack.c.l.b16 %v3171
        %v3238 = vunpack.c.l.b16 %v3172
        %v3239 = vunpack.c.l.b16 %v3173
        %v3240 = vunpack.c.l.b16 %v3174
        %v3241 = vunpack.c.l.b16 %v3175
        %v3242 = vunpack.c.l.b16 %v3176
        %v3243 = vunpack.c.l.b16 %v3177
        %v3244 = vunpack.c.l.b16 %v3178
        %v3245 = vunpack.c.l.b16 %v3179
        %v3246 = vunpack.c.l.b16 %v3180
        %v3247 = vunpack.c.l.b16 %v3181
        %v3248 = vpack.c.b16 %v3217, %v3216
        %v3249 = vpack.c.b16 %v3219, %v3218
        %v3250 = vpack.c.b16 %v3221, %v3220
        %v3251 = vpack.c.b16 %v3223, %v3222
        %v3252 = vpack.c.b16 %v3225, %v3224
        %v3253 = vpack.c.b16 %v3227, %v3226
        %v3254 = vpack.c.b16 %v3229, %v3228
        %v3255 = vpack.c.b16 %v3231, %v3230
        %v3256 = vpack.c.b16 %v3233, %v3232
        %v3257 = vpack.c.b16 %v3235, %v3234
        %v3258 = vpack.c.b16 %v3237, %v3236
        %v3259 = vpack.c.b16 %v3239, %v3238
        %v3260 = vpack.c.b16 %v3241, %v3240
        %v3261 = vpack.c.b16 %v3243, %v3242
        %v3262 = vpack.c.b16 %v3245, %v3244
        %v3263 = vpack.c.b16 %v3247, %v3246
        %v3265 = vsel %vm1566, %v3248, 0
        %v3268 = vsel %vm1566, %v3249, 0
        %v3271 = vsel %vm1566, %v3250, 0
        %v3274 = vsel %vm1566, %v3251, 0
        %v3277 = vsel %vm1566, %v3252, 0
        %v3280 = vsel %vm1566, %v3253, 0
        %v3283 = vsel %vm1566, %v3254, 0
        %v3286 = vsel %vm1566, %v3255, 0
        %v3289 = vsel %vm1566, %v3256, 0
        %v3292 = vsel %vm1566, %v3257, 0
        %v3295 = vsel %vm1566, %v3258, 0
        %v3298 = vsel %vm1566, %v3259, 0
        %v3301 = vsel %vm1566, %v3260, 0
        %v3304 = vsel %vm1566, %v3261, 0
        %v3307 = vsel %vm1566, %v3262, 0
        %v3310 = vsel %vm1566, %v3263, 0
        %v3313 = vsel %vm1615, %v3183, 0
        %3315 = vmatprep.subr.bf16.mxu0 0
        %3316 = vmatpush1.bf16.msra.mxu0 %v3313
        %3317 = vmatprep.subr.bf16.mxu0 0
        %3318 = vmatpush1.bf16.msra.mxu0 0
        %3319 = vmatprep.subr.bf16.mxu0 0
        %3320 = vmatpush1.bf16.msra.mxu0 0
        %3321 = vmatprep.subr.bf16.mxu0 0
        %3322 = vmatpush1.bf16.msra.mxu0 0
        %3323 = vmatprep.subr.bf16.mxu0 0
        %3324 = vmatpush1.bf16.msra.mxu0 0
        %3325 = vmatprep.subr.bf16.mxu0 0
        %3326 = vmatpush1.bf16.msra.mxu0 0
        %3327 = vmatprep.subr.bf16.mxu0 0
        %3328 = vmatpush1.bf16.msra.mxu0 0
        %3329 = vmatprep.subr.bf16.mxu0 0
        %3330 = vmatpush1.bf16.msra.mxu0 0
        %3331 = vmatprep.subr.bf16.mxu0 0
        %3332 = vmatpush1.bf16.msra.mxu0 0
        %3333 = vmatprep.subr.bf16.mxu0 0
        %3334 = vmatpush1.bf16.msra.mxu0 0
        %3335 = vmatprep.subr.bf16.mxu0 0
        %3336 = vmatpush1.bf16.msra.mxu0 0
        %3337 = vmatprep.subr.bf16.mxu0 0
        %3338 = vmatpush1.bf16.msra.mxu0 0
        %3339 = vmatprep.subr.bf16.mxu0 0
        %3340 = vmatpush1.bf16.msra.mxu0 0
        %3341 = vmatprep.subr.bf16.mxu0 0
        %3342 = vmatpush1.bf16.msra.mxu0 0
        %3343 = vmatprep.subr.bf16.mxu0 0
        %3344 = vmatpush1.bf16.msra.mxu0 0
        %3345 = vmatprep.subr.bf16.mxu0 0
        %3346 = vmatpush1.bf16.msra.mxu0 0
        %3347 = vmatprep.mubr.bf16.mxu0 0
        %3348 = vmatmul.mubr.bf16.gmra.mrb[0].mxu0 %v3265
        %v3349 = vpop.f32.mrb[0].mxu0
        %v3350 = vadd.f32 0.0, %v3349
        %v3351 = vpop.f32.mrb[0].mxu0
        %v3352 = vpop.f32.mrb[0].mxu0
        %v3353 = vadd.f32 0.0, %v3352
        %v3354 = vpop.f32.mrb[0].mxu0
        %3355 = vmatprep.mubr.bf16.mxu0 0
        %3356 = vmatmul.mubr.bf16.gmra.mrb[0].mxu0 %v3268
        %v3357 = vpop.f32.mrb[0].mxu0
        %v3358 = vadd.f32 0.0, %v3357
        %v3359 = vpop.f32.mrb[0].mxu0
        %v3360 = vpop.f32.mrb[0].mxu0
        %v3361 = vadd.f32 0.0, %v3360
        %v3362 = vpop.f32.mrb[0].mxu0
        %3363 = vmatprep.mubr.bf16.mxu0 0
        %3364 = vmatmul.mubr.bf16.gmra.mrb[0].mxu0 %v3271
        %v3365 = vpop.f32.mrb[0].mxu0
        %v3366 = vadd.f32 0.0, %v3365
        %v3367 = vpop.f32.mrb[0].mxu0
        %v3368 = vpop.f32.mrb[0].mxu0
        %v3369 = vadd.f32 0.0, %v3368
        %v3370 = vpop.f32.mrb[0].mxu0
        %3371 = vmatprep.mubr.bf16.mxu0 0
        %3372 = vmatmul.mubr.bf16.gmra.mrb[0].mxu0 %v3274
        %v3373 = vpop.f32.mrb[0].mxu0
        %v3374 = vadd.f32 0.0, %v3373
        %v3375 = vpop.f32.mrb[0].mxu0
        %v3376 = vpop.f32.mrb[0].mxu0
        %v3377 = vadd.f32 0.0, %v3376
        %v3378 = vpop.f32.mrb[0].mxu0
        %3379 = vmatprep.mubr.bf16.mxu0 0
        %3380 = vmatmul.mubr.bf16.gmra.mrb[0].mxu0 %v3277
        %v3381 = vpop.f32.mrb[0].mxu0
        %v3382 = vadd.f32 0.0, %v3381
        %v3383 = vpop.f32.mrb[0].mxu0
        %v3384 = vpop.f32.mrb[0].mxu0
        %v3385 = vadd.f32 0.0, %v3384
        %v3386 = vpop.f32.mrb[0].mxu0
        %3387 = vmatprep.mubr.bf16.mxu0 0
        %3388 = vmatmul.mubr.bf16.gmra.mrb[0].mxu0 %v3280
        %v3389 = vpop.f32.mrb[0].mxu0
        %v3390 = vadd.f32 0.0, %v3389
        %v3391 = vpop.f32.mrb[0].mxu0
        %v3392 = vpop.f32.mrb[0].mxu0
        %v3393 = vadd.f32 0.0, %v3392
        %v3394 = vpop.f32.mrb[0].mxu0
        %3395 = vmatprep.mubr.bf16.mxu0 0
        %3396 = vmatmul.mubr.bf16.gmra.mrb[0].mxu0 %v3283
        %v3397 = vpop.f32.mrb[0].mxu0
        %v3398 = vadd.f32 0.0, %v3397
        %v3399 = vpop.f32.mrb[0].mxu0
        %v3400 = vpop.f32.mrb[0].mxu0
        %v3401 = vadd.f32 0.0, %v3400
        %v3402 = vpop.f32.mrb[0].mxu0
        %3403 = vmatprep.mubr.bf16.mxu0 0
        %3404 = vmatmul.mubr.bf16.gmra.mrb[0].mxu0 %v3286
        %v3405 = vpop.f32.mrb[0].mxu0
        %v3406 = vadd.f32 0.0, %v3405
        %v3407 = vpop.f32.mrb[0].mxu0
        %v3408 = vpop.f32.mrb[0].mxu0
        %v3409 = vadd.f32 0.0, %v3408
        %v3410 = vpop.f32.mrb[0].mxu0
        %3411 = vmatprep.mubr.bf16.mxu0 0
        %3412 = vmatmul.mubr.bf16.gmra.mrb[0].mxu0 %v3289
        %v3413 = vpop.f32.mrb[0].mxu0
        %v3414 = vadd.f32 0.0, %v3413
        %v3415 = vpop.f32.mrb[0].mxu0
        %v3416 = vpop.f32.mrb[0].mxu0
        %v3417 = vadd.f32 0.0, %v3416
        %v3418 = vpop.f32.mrb[0].mxu0
        %3419 = vmatprep.mubr.bf16.mxu0 0
        %3420 = vmatmul.mubr.bf16.gmra.mrb[0].mxu0 %v3292
        %v3421 = vpop.f32.mrb[0].mxu0
        %v3422 = vadd.f32 0.0, %v3421
        %v3423 = vpop.f32.mrb[0].mxu0
        %v3424 = vpop.f32.mrb[0].mxu0
        %v3425 = vadd.f32 0.0, %v3424
        %v3426 = vpop.f32.mrb[0].mxu0
        %3427 = vmatprep.mubr.bf16.mxu0 0
        %3428 = vmatmul.mubr.bf16.gmra.mrb[0].mxu0 %v3295
        %v3429 = vpop.f32.mrb[0].mxu0
        %v3430 = vadd.f32 0.0, %v3429
        %v3431 = vpop.f32.mrb[0].mxu0
        %v3432 = vpop.f32.mrb[0].mxu0
        %v3433 = vadd.f32 0.0, %v3432
        %v3434 = vpop.f32.mrb[0].mxu0
        %3435 = vmatprep.mubr.bf16.mxu0 0
        %3436 = vmatmul.mubr.bf16.gmra.mrb[0].mxu0 %v3298
        %v3437 = vpop.f32.mrb[0].mxu0
        %v3438 = vadd.f32 0.0, %v3437
        %v3439 = vpop.f32.mrb[0].mxu0
        %v3440 = vpop.f32.mrb[0].mxu0
        %v3441 = vadd.f32 0.0, %v3440
        %v3442 = vpop.f32.mrb[0].mxu0
        %3443 = vmatprep.mubr.bf16.mxu0 0
        %3444 = vmatmul.mubr.bf16.gmra.mrb[0].mxu0 %v3301
        %v3445 = vpop.f32.mrb[0].mxu0
        %v3446 = vadd.f32 0.0, %v3445
        %v3447 = vpop.f32.mrb[0].mxu0
        %v3448 = vpop.f32.mrb[0].mxu0
        %v3449 = vadd.f32 0.0, %v3448
        %v3450 = vpop.f32.mrb[0].mxu0
        %3451 = vmatprep.mubr.bf16.mxu0 0
        %3452 = vmatmul.mubr.bf16.gmra.mrb[0].mxu0 %v3304
        %v3453 = vpop.f32.mrb[0].mxu0
        %v3454 = vadd.f32 0.0, %v3453
        %v3455 = vpop.f32.mrb[0].mxu0
        %v3456 = vpop.f32.mrb[0].mxu0
        %v3457 = vadd.f32 0.0, %v3456
        %v3458 = vpop.f32.mrb[0].mxu0
        %3459 = vmatprep.mubr.bf16.mxu0 0
        %3460 = vmatmul.mubr.bf16.gmra.mrb[0].mxu0 %v3307
        %v3461 = vpop.f32.mrb[0].mxu0
        %v3462 = vadd.f32 0.0, %v3461
        %v3463 = vpop.f32.mrb[0].mxu0
        %v3464 = vpop.f32.mrb[0].mxu0
        %v3465 = vadd.f32 0.0, %v3464
        %v3466 = vpop.f32.mrb[0].mxu0
        %3467 = vmatprep.mubr.bf16.mxu0 0
        %3468 = vmatmul.mubr.bf16.gmra.mrb[0].mxu0 %v3310
        %v3469 = vpop.f32.mrb[0].mxu0
        %v3470 = vadd.f32 0.0, %v3469
        %v3471 = vpop.f32.mrb[0].mxu0
        %v3472 = vpop.f32.mrb[0].mxu0
        %v3473 = vadd.f32 0.0, %v3472
        %v3474 = vpop.f32.mrb[0].mxu0
        %3475 = vdwg.mxu0
        %v3476 = vadd.f32 %v3117, %v3350
        %v3477 = vadd.f32 %v3118, %v3353
        %v3478 = vadd.f32 %v3119, %v3358
        %v3479 = vadd.f32 %v3120, %v3361
        %v3480 = vadd.f32 %v3121, %v3366
        %v3481 = vadd.f32 %v3122, %v3369
        %v3482 = vadd.f32 %v3123, %v3374
        %v3483 = vadd.f32 %v3124, %v3377
        %v3484 = vadd.f32 %v3125, %v3382
        %v3485 = vadd.f32 %v3126, %v3385
        %v3486 = vadd.f32 %v3127, %v3390
        %v3487 = vadd.f32 %v3128, %v3393
        %v3488 = vadd.f32 %v3129, %v3398
        %v3489 = vadd.f32 %v3130, %v3401
        %v3490 = vadd.f32 %v3131, %v3406
        %v3491 = vadd.f32 %v3132, %v3409
        %v3492 = vadd.f32 %v3133, %v3414
        %v3493 = vadd.f32 %v3134, %v3417
        %v3494 = vadd.f32 %v3135, %v3422
        %v3495 = vadd.f32 %v3136, %v3425
        %v3496 = vadd.f32 %v3137, %v3430
        %v3497 = vadd.f32 %v3138, %v3433
        %v3498 = vadd.f32 %v3139, %v3438
        %v3499 = vadd.f32 %v3140, %v3441
        %v3500 = vadd.f32 %v3141, %v3446
        %v3501 = vadd.f32 %v3142, %v3449
        %v3502 = vadd.f32 %v3143, %v3454
        %v3503 = vadd.f32 %v3144, %v3457
        %v3504 = vadd.f32 %v3145, %v3462
        %v3505 = vadd.f32 %v3146, %v3465
        %v3506 = vadd.f32 %v3147, %v3470
        %v3507 = vadd.f32 %v3148, %v3473
        %s3508 = scalar_lea.vmem %s1385, 768 [#allocation2]
        %v3509 = vld [vmem:[%s3508] sm:$0xf]
        %v3510 = vld [vmem:[%s3508 + $0x4] sm:$0xf]
        %v3511 = vld [vmem:[%s3508 + $0x8] sm:$0xf]
        %v3512 = vld [vmem:[%s3508 + $0xc] sm:$0xf]
        %v3513 = vld [vmem:[%s3508 + $0x10] sm:$0xf]
        %v3514 = vld [vmem:[%s3508 + $0x14] sm:$0xf]
        %v3515 = vld [vmem:[%s3508 + $0x18] sm:$0xf]
        %v3516 = vld [vmem:[%s3508 + $0x1c] sm:$0xf]
        %v3517 = vld [vmem:[%s3508 + $0x20] sm:$0xf]
        %v3518 = vld [vmem:[%s3508 + $0x24] sm:$0xf]
        %v3519 = vld [vmem:[%s3508 + $0x28] sm:$0xf]
        %v3520 = vld [vmem:[%s3508 + $0x2c] sm:$0xf]
        %v3521 = vld [vmem:[%s3508 + $0x30] sm:$0xf]
        %v3522 = vld [vmem:[%s3508 + $0x34] sm:$0xf]
        %v3523 = vld [vmem:[%s3508 + $0x38] sm:$0xf]
        %v3524 = vld [vmem:[%s3508 + $0x3c] sm:$0xf]
        %v3525 = vld [vmem:[%s3508 + $0x40] sm:$0xf]
        %v3526 = vld [vmem:[%s3508 + $0x44] sm:$0xf]
        %v3527 = vld [vmem:[%s3508 + $0x48] sm:$0xf]
        %v3528 = vld [vmem:[%s3508 + $0x4c] sm:$0xf]
        %v3529 = vld [vmem:[%s3508 + $0x50] sm:$0xf]
        %v3530 = vld [vmem:[%s3508 + $0x54] sm:$0xf]
        %v3531 = vld [vmem:[%s3508 + $0x58] sm:$0xf]
        %v3532 = vld [vmem:[%s3508 + $0x5c] sm:$0xf]
        %v3533 = vld [vmem:[%s3508 + $0x60] sm:$0xf]
        %v3534 = vld [vmem:[%s3508 + $0x64] sm:$0xf]
        %v3535 = vld [vmem:[%s3508 + $0x68] sm:$0xf]
        %v3536 = vld [vmem:[%s3508 + $0x6c] sm:$0xf]
        %v3537 = vld [vmem:[%s3508 + $0x70] sm:$0xf]
        %v3538 = vld [vmem:[%s3508 + $0x74] sm:$0xf]
        %v3539 = vld [vmem:[%s3508 + $0x78] sm:$0xf]
        %v3540 = vld [vmem:[%s3508 + $0x7c] sm:$0xf]
        %s3541 = scalar_lea.vmem %s1, 24
        %v3542 = vld [vmem:[%s3541] sm:$0xf]
        %v3575 = vunpack.c.l.b16 %v3509
        %v3576 = vunpack.c.l.b16 %v3510
        %v3577 = vunpack.c.l.b16 %v3511
        %v3578 = vunpack.c.l.b16 %v3512
        %v3579 = vunpack.c.l.b16 %v3513
        %v3580 = vunpack.c.l.b16 %v3514
        %v3581 = vunpack.c.l.b16 %v3515
        %v3582 = vunpack.c.l.b16 %v3516
        %v3583 = vunpack.c.l.b16 %v3517
        %v3584 = vunpack.c.l.b16 %v3518
        %v3585 = vunpack.c.l.b16 %v3519
        %v3586 = vunpack.c.l.b16 %v3520
        %v3587 = vunpack.c.l.b16 %v3521
        %v3588 = vunpack.c.l.b16 %v3522
        %v3589 = vunpack.c.l.b16 %v3523
        %v3590 = vunpack.c.l.b16 %v3524
        %v3591 = vunpack.c.l.b16 %v3525
        %v3592 = vunpack.c.l.b16 %v3526
        %v3593 = vunpack.c.l.b16 %v3527
        %v3594 = vunpack.c.l.b16 %v3528
        %v3595 = vunpack.c.l.b16 %v3529
        %v3596 = vunpack.c.l.b16 %v3530
        %v3597 = vunpack.c.l.b16 %v3531
        %v3598 = vunpack.c.l.b16 %v3532
        %v3599 = vunpack.c.l.b16 %v3533
        %v3600 = vunpack.c.l.b16 %v3534
        %v3601 = vunpack.c.l.b16 %v3535
        %v3602 = vunpack.c.l.b16 %v3536
        %v3603 = vunpack.c.l.b16 %v3537
        %v3604 = vunpack.c.l.b16 %v3538
        %v3605 = vunpack.c.l.b16 %v3539
        %v3606 = vunpack.c.l.b16 %v3540
        %v3607 = vpack.c.b16 %v3576, %v3575
        %v3608 = vpack.c.b16 %v3578, %v3577
        %v3609 = vpack.c.b16 %v3580, %v3579
        %v3610 = vpack.c.b16 %v3582, %v3581
        %v3611 = vpack.c.b16 %v3584, %v3583
        %v3612 = vpack.c.b16 %v3586, %v3585
        %v3613 = vpack.c.b16 %v3588, %v3587
        %v3614 = vpack.c.b16 %v3590, %v3589
        %v3615 = vpack.c.b16 %v3592, %v3591
        %v3616 = vpack.c.b16 %v3594, %v3593
        %v3617 = vpack.c.b16 %v3596, %v3595
        %v3618 = vpack.c.b16 %v3598, %v3597
        %v3619 = vpack.c.b16 %v3600, %v3599
        %v3620 = vpack.c.b16 %v3602, %v3601
        %v3621 = vpack.c.b16 %v3604, %v3603
        %v3622 = vpack.c.b16 %v3606, %v3605
        %v3624 = vsel %vm1566, %v3607, 0
        %v3627 = vsel %vm1566, %v3608, 0
        %v3630 = vsel %vm1566, %v3609, 0
        %v3633 = vsel %vm1566, %v3610, 0
        %v3636 = vsel %vm1566, %v3611, 0
        %v3639 = vsel %vm1566, %v3612, 0
        %v3642 = vsel %vm1566, %v3613, 0
        %v3645 = vsel %vm1566, %v3614, 0
        %v3648 = vsel %vm1566, %v3615, 0
        %v3651 = vsel %vm1566, %v3616, 0
        %v3654 = vsel %vm1566, %v3617, 0
        %v3657 = vsel %vm1566, %v3618, 0
        %v3660 = vsel %vm1566, %v3619, 0
        %v3663 = vsel %vm1566, %v3620, 0
        %v3666 = vsel %vm1566, %v3621, 0
        %v3669 = vsel %vm1566, %v3622, 0
        %v3672 = vsel %vm1615, %v3542, 0
        %3674 = vmatprep.subr.bf16.mxu0 0
        %3675 = vmatpush1.bf16.msra.mxu0 %v3672
        %3676 = vmatprep.subr.bf16.mxu0 0
        %3677 = vmatpush1.bf16.msra.mxu0 0
        %3678 = vmatprep.subr.bf16.mxu0 0
        %3679 = vmatpush1.bf16.msra.mxu0 0
        %3680 = vmatprep.subr.bf16.mxu0 0
        %3681 = vmatpush1.bf16.msra.mxu0 0
        %3682 = vmatprep.subr.bf16.mxu0 0
        %3683 = vmatpush1.bf16.msra.mxu0 0
        %3684 = vmatprep.subr.bf16.mxu0 0
        %3685 = vmatpush1.bf16.msra.mxu0 0
        %3686 = vmatprep.subr.bf16.mxu0 0
        %3687 = vmatpush1.bf16.msra.mxu0 0
        %3688 = vmatprep.subr.bf16.mxu0 0
        %3689 = vmatpush1.bf16.msra.mxu0 0
        %3690 = vmatprep.subr.bf16.mxu0 0
        %3691 = vmatpush1.bf16.msra.mxu0 0
        %3692 = vmatprep.subr.bf16.mxu0 0
        %3693 = vmatpush1.bf16.msra.mxu0 0
        %3694 = vmatprep.subr.bf16.mxu0 0
        %3695 = vmatpush1.bf16.msra.mxu0 0
        %3696 = vmatprep.subr.bf16.mxu0 0
        %3697 = vmatpush1.bf16.msra.mxu0 0
        %3698 = vmatprep.subr.bf16.mxu0 0
        %3699 = vmatpush1.bf16.msra.mxu0 0
        %3700 = vmatprep.subr.bf16.mxu0 0
        %3701 = vmatpush1.bf16.msra.mxu0 0
        %3702 = vmatprep.subr.bf16.mxu0 0
        %3703 = vmatpush1.bf16.msra.mxu0 0
        %3704 = vmatprep.subr.bf16.mxu0 0
        %3705 = vmatpush1.bf16.msra.mxu0 0
        %3706 = vmatprep.mubr.bf16.mxu0 0
        %3707 = vmatmul.mubr.bf16.gmra.mrb[0].mxu0 %v3624
        %v3708 = vpop.f32.mrb[0].mxu0
        %v3709 = vadd.f32 0.0, %v3708
        %v3710 = vpop.f32.mrb[0].mxu0
        %v3711 = vpop.f32.mrb[0].mxu0
        %v3712 = vadd.f32 0.0, %v3711
        %v3713 = vpop.f32.mrb[0].mxu0
        %3714 = vmatprep.mubr.bf16.mxu0 0
        %3715 = vmatmul.mubr.bf16.gmra.mrb[0].mxu0 %v3627
        %v3716 = vpop.f32.mrb[0].mxu0
        %v3717 = vadd.f32 0.0, %v3716
        %v3718 = vpop.f32.mrb[0].mxu0
        %v3719 = vpop.f32.mrb[0].mxu0
        %v3720 = vadd.f32 0.0, %v3719
        %v3721 = vpop.f32.mrb[0].mxu0
        %3722 = vmatprep.mubr.bf16.mxu0 0
        %3723 = vmatmul.mubr.bf16.gmra.mrb[0].mxu0 %v3630
        %v3724 = vpop.f32.mrb[0].mxu0
        %v3725 = vadd.f32 0.0, %v3724
        %v3726 = vpop.f32.mrb[0].mxu0
        %v3727 = vpop.f32.mrb[0].mxu0
        %v3728 = vadd.f32 0.0, %v3727
        %v3729 = vpop.f32.mrb[0].mxu0
        %3730 = vmatprep.mubr.bf16.mxu0 0
        %3731 = vmatmul.mubr.bf16.gmra.mrb[0].mxu0 %v3633
        %v3732 = vpop.f32.mrb[0].mxu0
        %v3733 = vadd.f32 0.0, %v3732
        %v3734 = vpop.f32.mrb[0].mxu0
        %v3735 = vpop.f32.mrb[0].mxu0
        %v3736 = vadd.f32 0.0, %v3735
        %v3737 = vpop.f32.mrb[0].mxu0
        %3738 = vmatprep.mubr.bf16.mxu0 0
        %3739 = vmatmul.mubr.bf16.gmra.mrb[0].mxu0 %v3636
        %v3740 = vpop.f32.mrb[0].mxu0
        %v3741 = vadd.f32 0.0, %v3740
        %v3742 = vpop.f32.mrb[0].mxu0
        %v3743 = vpop.f32.mrb[0].mxu0
        %v3744 = vadd.f32 0.0, %v3743
        %v3745 = vpop.f32.mrb[0].mxu0
        %3746 = vmatprep.mubr.bf16.mxu0 0
        %3747 = vmatmul.mubr.bf16.gmra.mrb[0].mxu0 %v3639
        %v3748 = vpop.f32.mrb[0].mxu0
        %v3749 = vadd.f32 0.0, %v3748
        %v3750 = vpop.f32.mrb[0].mxu0
        %v3751 = vpop.f32.mrb[0].mxu0
        %v3752 = vadd.f32 0.0, %v3751
        %v3753 = vpop.f32.mrb[0].mxu0
        %3754 = vmatprep.mubr.bf16.mxu0 0
        %3755 = vmatmul.mubr.bf16.gmra.mrb[0].mxu0 %v3642
        %v3756 = vpop.f32.mrb[0].mxu0
        %v3757 = vadd.f32 0.0, %v3756
        %v3758 = vpop.f32.mrb[0].mxu0
        %v3759 = vpop.f32.mrb[0].mxu0
        %v3760 = vadd.f32 0.0, %v3759
        %v3761 = vpop.f32.mrb[0].mxu0
        %3762 = vmatprep.mubr.bf16.mxu0 0
        %3763 = vmatmul.mubr.bf16.gmra.mrb[0].mxu0 %v3645
        %v3764 = vpop.f32.mrb[0].mxu0
        %v3765 = vadd.f32 0.0, %v3764
        %v3766 = vpop.f32.mrb[0].mxu0
        %v3767 = vpop.f32.mrb[0].mxu0
        %v3768 = vadd.f32 0.0, %v3767
        %v3769 = vpop.f32.mrb[0].mxu0
        %3770 = vmatprep.mubr.bf16.mxu0 0
        %3771 = vmatmul.mubr.bf16.gmra.mrb[0].mxu0 %v3648
        %v3772 = vpop.f32.mrb[0].mxu0
        %v3773 = vadd.f32 0.0, %v3772
        %v3774 = vpop.f32.mrb[0].mxu0
        %v3775 = vpop.f32.mrb[0].mxu0
        %v3776 = vadd.f32 0.0, %v3775
        %v3777 = vpop.f32.mrb[0].mxu0
        %3778 = vmatprep.mubr.bf16.mxu0 0
        %3779 = vmatmul.mubr.bf16.gmra.mrb[0].mxu0 %v3651
        %v3780 = vpop.f32.mrb[0].mxu0
        %v3781 = vadd.f32 0.0, %v3780
        %v3782 = vpop.f32.mrb[0].mxu0
        %v3783 = vpop.f32.mrb[0].mxu0
        %v3784 = vadd.f32 0.0, %v3783
        %v3785 = vpop.f32.mrb[0].mxu0
        %3786 = vmatprep.mubr.bf16.mxu0 0
        %3787 = vmatmul.mubr.bf16.gmra.mrb[0].mxu0 %v3654
        %v3788 = vpop.f32.mrb[0].mxu0
        %v3789 = vadd.f32 0.0, %v3788
        %v3790 = vpop.f32.mrb[0].mxu0
        %v3791 = vpop.f32.mrb[0].mxu0
        %v3792 = vadd.f32 0.0, %v3791
        %v3793 = vpop.f32.mrb[0].mxu0
        %3794 = vmatprep.mubr.bf16.mxu0 0
        %3795 = vmatmul.mubr.bf16.gmra.mrb[0].mxu0 %v3657
        %v3796 = vpop.f32.mrb[0].mxu0
        %v3797 = vadd.f32 0.0, %v3796
        %v3798 = vpop.f32.mrb[0].mxu0
        %v3799 = vpop.f32.mrb[0].mxu0
        %v3800 = vadd.f32 0.0, %v3799
        %v3801 = vpop.f32.mrb[0].mxu0
        %3802 = vmatprep.mubr.bf16.mxu0 0
        %3803 = vmatmul.mubr.bf16.gmra.mrb[0].mxu0 %v3660
        %v3804 = vpop.f32.mrb[0].mxu0
        %v3805 = vadd.f32 0.0, %v3804
        %v3806 = vpop.f32.mrb[0].mxu0
        %v3807 = vpop.f32.mrb[0].mxu0
        %v3808 = vadd.f32 0.0, %v3807
        %v3809 = vpop.f32.mrb[0].mxu0
        %3810 = vmatprep.mubr.bf16.mxu0 0
        %3811 = vmatmul.mubr.bf16.gmra.mrb[0].mxu0 %v3663
        %v3812 = vpop.f32.mrb[0].mxu0
        %v3813 = vadd.f32 0.0, %v3812
        %v3814 = vpop.f32.mrb[0].mxu0
        %v3815 = vpop.f32.mrb[0].mxu0
        %v3816 = vadd.f32 0.0, %v3815
        %v3817 = vpop.f32.mrb[0].mxu0
        %3818 = vmatprep.mubr.bf16.mxu0 0
        %3819 = vmatmul.mubr.bf16.gmra.mrb[0].mxu0 %v3666
        %v3820 = vpop.f32.mrb[0].mxu0
        %v3821 = vadd.f32 0.0, %v3820
        %v3822 = vpop.f32.mrb[0].mxu0
        %v3823 = vpop.f32.mrb[0].mxu0
        %v3824 = vadd.f32 0.0, %v3823
        %v3825 = vpop.f32.mrb[0].mxu0
        %3826 = vmatprep.mubr.bf16.mxu0 0
        %3827 = vmatmul.mubr.bf16.gmra.mrb[0].mxu0 %v3669
        %v3828 = vpop.f32.mrb[0].mxu0
        %v3829 = vadd.f32 0.0, %v3828
        %v3830 = vpop.f32.mrb[0].mxu0
        %v3831 = vpop.f32.mrb[0].mxu0
        %v3832 = vadd.f32 0.0, %v3831
        %v3833 = vpop.f32.mrb[0].mxu0
        %3834 = vdwg.mxu0
        %v3835 = vadd.f32 %v3476, %v3709
        %v3836 = vadd.f32 %v3477, %v3712
        %v3837 = vadd.f32 %v3478, %v3717
        %v3838 = vadd.f32 %v3479, %v3720
        %v3839 = vadd.f32 %v3480, %v3725
        %v3840 = vadd.f32 %v3481, %v3728
        %v3841 = vadd.f32 %v3482, %v3733
        %v3842 = vadd.f32 %v3483, %v3736
        %v3843 = vadd.f32 %v3484, %v3741
        %v3844 = vadd.f32 %v3485, %v3744
        %v3845 = vadd.f32 %v3486, %v3749
        %v3846 = vadd.f32 %v3487, %v3752
        %v3847 = vadd.f32 %v3488, %v3757
        %v3848 = vadd.f32 %v3489, %v3760
        %v3849 = vadd.f32 %v3490, %v3765
        %v3850 = vadd.f32 %v3491, %v3768
        %v3851 = vadd.f32 %v3492, %v3773
        %v3852 = vadd.f32 %v3493, %v3776
        %v3853 = vadd.f32 %v3494, %v3781
        %v3854 = vadd.f32 %v3495, %v3784
        %v3855 = vadd.f32 %v3496, %v3789
        %v3856 = vadd.f32 %v3497, %v3792
        %v3857 = vadd.f32 %v3498, %v3797
        %v3858 = vadd.f32 %v3499, %v3800
        %v3859 = vadd.f32 %v3500, %v3805
        %v3860 = vadd.f32 %v3501, %v3808
        %v3861 = vadd.f32 %v3502, %v3813
        %v3862 = vadd.f32 %v3503, %v3816
        %v3863 = vadd.f32 %v3504, %v3821
        %v3864 = vadd.f32 %v3505, %v3824
        %v3865 = vadd.f32 %v3506, %v3829
        %v3866 = vadd.f32 %v3507, %v3832
        %s3867 = scalar_lea.vmem %s1385, 896 [#allocation2]
        %v3868 = vld [vmem:[%s3867] sm:$0xf]
        %v3869 = vld [vmem:[%s3867 + $0x4] sm:$0xf]
        %v3870 = vld [vmem:[%s3867 + $0x8] sm:$0xf]
        %v3871 = vld [vmem:[%s3867 + $0xc] sm:$0xf]
        %v3872 = vld [vmem:[%s3867 + $0x10] sm:$0xf]
        %v3873 = vld [vmem:[%s3867 + $0x14] sm:$0xf]
        %v3874 = vld [vmem:[%s3867 + $0x18] sm:$0xf]
        %v3875 = vld [vmem:[%s3867 + $0x1c] sm:$0xf]
        %v3876 = vld [vmem:[%s3867 + $0x20] sm:$0xf]
        %v3877 = vld [vmem:[%s3867 + $0x24] sm:$0xf]
        %v3878 = vld [vmem:[%s3867 + $0x28] sm:$0xf]
        %v3879 = vld [vmem:[%s3867 + $0x2c] sm:$0xf]
        %v3880 = vld [vmem:[%s3867 + $0x30] sm:$0xf]
        %v3881 = vld [vmem:[%s3867 + $0x34] sm:$0xf]
        %v3882 = vld [vmem:[%s3867 + $0x38] sm:$0xf]
        %v3883 = vld [vmem:[%s3867 + $0x3c] sm:$0xf]
        %v3884 = vld [vmem:[%s3867 + $0x40] sm:$0xf]
        %v3885 = vld [vmem:[%s3867 + $0x44] sm:$0xf]
        %v3886 = vld [vmem:[%s3867 + $0x48] sm:$0xf]
        %v3887 = vld [vmem:[%s3867 + $0x4c] sm:$0xf]
        %v3888 = vld [vmem:[%s3867 + $0x50] sm:$0xf]
        %v3889 = vld [vmem:[%s3867 + $0x54] sm:$0xf]
        %v3890 = vld [vmem:[%s3867 + $0x58] sm:$0xf]
        %v3891 = vld [vmem:[%s3867 + $0x5c] sm:$0xf]
        %v3892 = vld [vmem:[%s3867 + $0x60] sm:$0xf]
        %v3893 = vld [vmem:[%s3867 + $0x64] sm:$0xf]
        %v3894 = vld [vmem:[%s3867 + $0x68] sm:$0xf]
        %v3895 = vld [vmem:[%s3867 + $0x6c] sm:$0xf]
        %v3896 = vld [vmem:[%s3867 + $0x70] sm:$0xf]
        %v3897 = vld [vmem:[%s3867 + $0x74] sm:$0xf]
        %v3898 = vld [vmem:[%s3867 + $0x78] sm:$0xf]
        %v3899 = vld [vmem:[%s3867 + $0x7c] sm:$0xf]
        %s3900 = scalar_lea.vmem %s1, 28
        %v3901 = vld [vmem:[%s3900] sm:$0xf]
        %v3934 = vunpack.c.l.b16 %v3868
        %v3935 = vunpack.c.l.b16 %v3869
        %v3936 = vunpack.c.l.b16 %v3870
        %v3937 = vunpack.c.l.b16 %v3871
        %v3938 = vunpack.c.l.b16 %v3872
        %v3939 = vunpack.c.l.b16 %v3873
        %v3940 = vunpack.c.l.b16 %v3874
        %v3941 = vunpack.c.l.b16 %v3875
        %v3942 = vunpack.c.l.b16 %v3876
        %v3943 = vunpack.c.l.b16 %v3877
        %v3944 = vunpack.c.l.b16 %v3878
        %v3945 = vunpack.c.l.b16 %v3879
        %v3946 = vunpack.c.l.b16 %v3880
        %v3947 = vunpack.c.l.b16 %v3881
        %v3948 = vunpack.c.l.b16 %v3882
        %v3949 = vunpack.c.l.b16 %v3883
        %v3950 = vunpack.c.l.b16 %v3884
        %v3951 = vunpack.c.l.b16 %v3885
        %v3952 = vunpack.c.l.b16 %v3886
        %v3953 = vunpack.c.l.b16 %v3887
        %v3954 = vunpack.c.l.b16 %v3888
        %v3955 = vunpack.c.l.b16 %v3889
        %v3956 = vunpack.c.l.b16 %v3890
        %v3957 = vunpack.c.l.b16 %v3891
        %v3958 = vunpack.c.l.b16 %v3892
        %v3959 = vunpack.c.l.b16 %v3893
        %v3960 = vunpack.c.l.b16 %v3894
        %v3961 = vunpack.c.l.b16 %v3895
        %v3962 = vunpack.c.l.b16 %v3896
        %v3963 = vunpack.c.l.b16 %v3897
        %v3964 = vunpack.c.l.b16 %v3898
        %v3965 = vunpack.c.l.b16 %v3899
        %v3966 = vpack.c.b16 %v3935, %v3934
        %v3967 = vpack.c.b16 %v3937, %v3936
        %v3968 = vpack.c.b16 %v3939, %v3938
        %v3969 = vpack.c.b16 %v3941, %v3940
        %v3970 = vpack.c.b16 %v3943, %v3942
        %v3971 = vpack.c.b16 %v3945, %v3944
        %v3972 = vpack.c.b16 %v3947, %v3946
        %v3973 = vpack.c.b16 %v3949, %v3948
        %v3974 = vpack.c.b16 %v3951, %v3950
        %v3975 = vpack.c.b16 %v3953, %v3952
        %v3976 = vpack.c.b16 %v3955, %v3954
        %v3977 = vpack.c.b16 %v3957, %v3956
        %v3978 = vpack.c.b16 %v3959, %v3958
        %v3979 = vpack.c.b16 %v3961, %v3960
        %v3980 = vpack.c.b16 %v3963, %v3962
        %v3981 = vpack.c.b16 %v3965, %v3964
        %v3983 = vsel %vm1566, %v3966, 0
        %v3986 = vsel %vm1566, %v3967, 0
        %v3989 = vsel %vm1566, %v3968, 0
        %v3992 = vsel %vm1566, %v3969, 0
        %v3995 = vsel %vm1566, %v3970, 0
        %v3998 = vsel %vm1566, %v3971, 0
        %v4001 = vsel %vm1566, %v3972, 0
        %v4004 = vsel %vm1566, %v3973, 0
        %v4007 = vsel %vm1566, %v3974, 0
        %v4010 = vsel %vm1566, %v3975, 0
        %v4013 = vsel %vm1566, %v3976, 0
        %v4016 = vsel %vm1566, %v3977, 0
        %v4019 = vsel %vm1566, %v3978, 0
        %v4022 = vsel %vm1566, %v3979, 0
        %v4025 = vsel %vm1566, %v3980, 0
        %v4028 = vsel %vm1566, %v3981, 0
        %v4031 = vsel %vm1615, %v3901, 0
        %4033 = vmatprep.subr.bf16.mxu0 0
        %4034 = vmatpush1.bf16.msra.mxu0 %v4031
        %4035 = vmatprep.subr.bf16.mxu0 0
        %4036 = vmatpush1.bf16.msra.mxu0 0
        %4037 = vmatprep.subr.bf16.mxu0 0
        %4038 = vmatpush1.bf16.msra.mxu0 0
        %4039 = vmatprep.subr.bf16.mxu0 0
        %4040 = vmatpush1.bf16.msra.mxu0 0
        %4041 = vmatprep.subr.bf16.mxu0 0
        %4042 = vmatpush1.bf16.msra.mxu0 0
        %4043 = vmatprep.subr.bf16.mxu0 0
        %4044 = vmatpush1.bf16.msra.mxu0 0
        %4045 = vmatprep.subr.bf16.mxu0 0
        %4046 = vmatpush1.bf16.msra.mxu0 0
        %4047 = vmatprep.subr.bf16.mxu0 0
        %4048 = vmatpush1.bf16.msra.mxu0 0
        %4049 = vmatprep.subr.bf16.mxu0 0
        %4050 = vmatpush1.bf16.msra.mxu0 0
        %4051 = vmatprep.subr.bf16.mxu0 0
        %4052 = vmatpush1.bf16.msra.mxu0 0
        %4053 = vmatprep.subr.bf16.mxu0 0
        %4054 = vmatpush1.bf16.msra.mxu0 0
        %4055 = vmatprep.subr.bf16.mxu0 0
        %4056 = vmatpush1.bf16.msra.mxu0 0
        %4057 = vmatprep.subr.bf16.mxu0 0
        %4058 = vmatpush1.bf16.msra.mxu0 0
        %4059 = vmatprep.subr.bf16.mxu0 0
        %4060 = vmatpush1.bf16.msra.mxu0 0
        %4061 = vmatprep.subr.bf16.mxu0 0
        %4062 = vmatpush1.bf16.msra.mxu0 0
        %4063 = vmatprep.subr.bf16.mxu0 0
        %4064 = vmatpush1.bf16.msra.mxu0 0
        %4065 = vmatprep.mubr.bf16.mxu0 0
        %4066 = vmatmul.mubr.bf16.gmra.mrb[0].mxu0 %v3983
        %v4067 = vpop.f32.mrb[0].mxu0
        %v4068 = vadd.f32 0.0, %v4067
        %v4069 = vpop.f32.mrb[0].mxu0
        %v4070 = vpop.f32.mrb[0].mxu0
        %v4071 = vadd.f32 0.0, %v4070
        %v4072 = vpop.f32.mrb[0].mxu0
        %4073 = vmatprep.mubr.bf16.mxu0 0
        %4074 = vmatmul.mubr.bf16.gmra.mrb[0].mxu0 %v3986
        %v4075 = vpop.f32.mrb[0].mxu0
        %v4076 = vadd.f32 0.0, %v4075
        %v4077 = vpop.f32.mrb[0].mxu0
        %v4078 = vpop.f32.mrb[0].mxu0
        %v4079 = vadd.f32 0.0, %v4078
        %v4080 = vpop.f32.mrb[0].mxu0
        %4081 = vmatprep.mubr.bf16.mxu0 0
        %4082 = vmatmul.mubr.bf16.gmra.mrb[0].mxu0 %v3989
        %v4083 = vpop.f32.mrb[0].mxu0
        %v4084 = vadd.f32 0.0, %v4083
        %v4085 = vpop.f32.mrb[0].mxu0
        %v4086 = vpop.f32.mrb[0].mxu0
        %v4087 = vadd.f32 0.0, %v4086
        %v4088 = vpop.f32.mrb[0].mxu0
        %4089 = vmatprep.mubr.bf16.mxu0 0
        %4090 = vmatmul.mubr.bf16.gmra.mrb[0].mxu0 %v3992
        %v4091 = vpop.f32.mrb[0].mxu0
        %v4092 = vadd.f32 0.0, %v4091
        %v4093 = vpop.f32.mrb[0].mxu0
        %v4094 = vpop.f32.mrb[0].mxu0
        %v4095 = vadd.f32 0.0, %v4094
        %v4096 = vpop.f32.mrb[0].mxu0
        %4097 = vmatprep.mubr.bf16.mxu0 0
        %4098 = vmatmul.mubr.bf16.gmra.mrb[0].mxu0 %v3995
        %v4099 = vpop.f32.mrb[0].mxu0
        %v4100 = vadd.f32 0.0, %v4099
        %v4101 = vpop.f32.mrb[0].mxu0
        %v4102 = vpop.f32.mrb[0].mxu0
        %v4103 = vadd.f32 0.0, %v4102
        %v4104 = vpop.f32.mrb[0].mxu0
        %4105 = vmatprep.mubr.bf16.mxu0 0
        %4106 = vmatmul.mubr.bf16.gmra.mrb[0].mxu0 %v3998
        %v4107 = vpop.f32.mrb[0].mxu0
        %v4108 = vadd.f32 0.0, %v4107
        %v4109 = vpop.f32.mrb[0].mxu0
        %v4110 = vpop.f32.mrb[0].mxu0
        %v4111 = vadd.f32 0.0, %v4110
        %v4112 = vpop.f32.mrb[0].mxu0
        %4113 = vmatprep.mubr.bf16.mxu0 0
        %4114 = vmatmul.mubr.bf16.gmra.mrb[0].mxu0 %v4001
        %v4115 = vpop.f32.mrb[0].mxu0
        %v4116 = vadd.f32 0.0, %v4115
        %v4117 = vpop.f32.mrb[0].mxu0
        %v4118 = vpop.f32.mrb[0].mxu0
        %v4119 = vadd.f32 0.0, %v4118
        %v4120 = vpop.f32.mrb[0].mxu0
        %4121 = vmatprep.mubr.bf16.mxu0 0
        %4122 = vmatmul.mubr.bf16.gmra.mrb[0].mxu0 %v4004
        %v4123 = vpop.f32.mrb[0].mxu0
        %v4124 = vadd.f32 0.0, %v4123
        %v4125 = vpop.f32.mrb[0].mxu0
        %v4126 = vpop.f32.mrb[0].mxu0
        %v4127 = vadd.f32 0.0, %v4126
        %v4128 = vpop.f32.mrb[0].mxu0
        %4129 = vmatprep.mubr.bf16.mxu0 0
        %4130 = vmatmul.mubr.bf16.gmra.mrb[0].mxu0 %v4007
        %v4131 = vpop.f32.mrb[0].mxu0
        %v4132 = vadd.f32 0.0, %v4131
        %v4133 = vpop.f32.mrb[0].mxu0
        %v4134 = vpop.f32.mrb[0].mxu0
        %v4135 = vadd.f32 0.0, %v4134
        %v4136 = vpop.f32.mrb[0].mxu0
        %4137 = vmatprep.mubr.bf16.mxu0 0
        %4138 = vmatmul.mubr.bf16.gmra.mrb[0].mxu0 %v4010
        %v4139 = vpop.f32.mrb[0].mxu0
        %v4140 = vadd.f32 0.0, %v4139
        %v4141 = vpop.f32.mrb[0].mxu0
        %v4142 = vpop.f32.mrb[0].mxu0
        %v4143 = vadd.f32 0.0, %v4142
        %v4144 = vpop.f32.mrb[0].mxu0
        %4145 = vmatprep.mubr.bf16.mxu0 0
        %4146 = vmatmul.mubr.bf16.gmra.mrb[0].mxu0 %v4013
        %v4147 = vpop.f32.mrb[0].mxu0
        %v4148 = vadd.f32 0.0, %v4147
        %v4149 = vpop.f32.mrb[0].mxu0
        %v4150 = vpop.f32.mrb[0].mxu0
        %v4151 = vadd.f32 0.0, %v4150
        %v4152 = vpop.f32.mrb[0].mxu0
        %4153 = vmatprep.mubr.bf16.mxu0 0
        %4154 = vmatmul.mubr.bf16.gmra.mrb[0].mxu0 %v4016
        %v4155 = vpop.f32.mrb[0].mxu0
        %v4156 = vadd.f32 0.0, %v4155
        %v4157 = vpop.f32.mrb[0].mxu0
        %v4158 = vpop.f32.mrb[0].mxu0
        %v4159 = vadd.f32 0.0, %v4158
        %v4160 = vpop.f32.mrb[0].mxu0
        %4161 = vmatprep.mubr.bf16.mxu0 0
        %4162 = vmatmul.mubr.bf16.gmra.mrb[0].mxu0 %v4019
        %v4163 = vpop.f32.mrb[0].mxu0
        %v4164 = vadd.f32 0.0, %v4163
        %v4165 = vpop.f32.mrb[0].mxu0
        %v4166 = vpop.f32.mrb[0].mxu0
        %v4167 = vadd.f32 0.0, %v4166
        %v4168 = vpop.f32.mrb[0].mxu0
        %4169 = vmatprep.mubr.bf16.mxu0 0
        %4170 = vmatmul.mubr.bf16.gmra.mrb[0].mxu0 %v4022
        %v4171 = vpop.f32.mrb[0].mxu0
        %v4172 = vadd.f32 0.0, %v4171
        %v4173 = vpop.f32.mrb[0].mxu0
        %v4174 = vpop.f32.mrb[0].mxu0
        %v4175 = vadd.f32 0.0, %v4174
        %v4176 = vpop.f32.mrb[0].mxu0
        %4177 = vmatprep.mubr.bf16.mxu0 0
        %4178 = vmatmul.mubr.bf16.gmra.mrb[0].mxu0 %v4025
        %v4179 = vpop.f32.mrb[0].mxu0
        %v4180 = vadd.f32 0.0, %v4179
        %v4181 = vpop.f32.mrb[0].mxu0
        %v4182 = vpop.f32.mrb[0].mxu0
        %v4183 = vadd.f32 0.0, %v4182
        %v4184 = vpop.f32.mrb[0].mxu0
        %4185 = vmatprep.mubr.bf16.mxu0 0
        %4186 = vmatmul.mubr.bf16.gmra.mrb[0].mxu0 %v4028
        %v4187 = vpop.f32.mrb[0].mxu0
        %v4188 = vadd.f32 0.0, %v4187
        %v4189 = vpop.f32.mrb[0].mxu0
        %v4190 = vpop.f32.mrb[0].mxu0
        %v4191 = vadd.f32 0.0, %v4190
        %v4192 = vpop.f32.mrb[0].mxu0
        %4193 = vdwg.mxu0
        %v4194 = vadd.f32 %v3835, %v4068
        %v4195 = vadd.f32 %v3836, %v4071
        %v4196 = vadd.f32 %v3837, %v4076
        %v4197 = vadd.f32 %v3838, %v4079
        %v4198 = vadd.f32 %v3839, %v4084
        %v4199 = vadd.f32 %v3840, %v4087
        %v4200 = vadd.f32 %v3841, %v4092
        %v4201 = vadd.f32 %v3842, %v4095
        %v4202 = vadd.f32 %v3843, %v4100
        %v4203 = vadd.f32 %v3844, %v4103
        %v4204 = vadd.f32 %v3845, %v4108
        %v4205 = vadd.f32 %v3846, %v4111
        %v4206 = vadd.f32 %v3847, %v4116
        %v4207 = vadd.f32 %v3848, %v4119
        %v4208 = vadd.f32 %v3849, %v4124
        %v4209 = vadd.f32 %v3850, %v4127
        %v4210 = vadd.f32 %v3851, %v4132
        %v4211 = vadd.f32 %v3852, %v4135
        %v4212 = vadd.f32 %v3853, %v4140
        %v4213 = vadd.f32 %v3854, %v4143
        %v4214 = vadd.f32 %v3855, %v4148
        %v4215 = vadd.f32 %v3856, %v4151
        %v4216 = vadd.f32 %v3857, %v4156
        %v4217 = vadd.f32 %v3858, %v4159
        %v4218 = vadd.f32 %v3859, %v4164
        %v4219 = vadd.f32 %v3860, %v4167
        %v4220 = vadd.f32 %v3861, %v4172
        %v4221 = vadd.f32 %v3862, %v4175
        %v4222 = vadd.f32 %v3863, %v4180
        %v4223 = vadd.f32 %v3864, %v4183
        %v4224 = vadd.f32 %v3865, %v4188
        %v4225 = vadd.f32 %v3866, %v4191
        %s4226 = scalar_lea.vmem %s1385, 1024 [#allocation2]
        %v4227 = vld [vmem:[%s4226] sm:$0xf]
        %v4228 = vld [vmem:[%s4226 + $0x4] sm:$0xf]
        %v4229 = vld [vmem:[%s4226 + $0x8] sm:$0xf]
        %v4230 = vld [vmem:[%s4226 + $0xc] sm:$0xf]
        %v4231 = vld [vmem:[%s4226 + $0x10] sm:$0xf]
        %v4232 = vld [vmem:[%s4226 + $0x14] sm:$0xf]
        %v4233 = vld [vmem:[%s4226 + $0x18] sm:$0xf]
        %v4234 = vld [vmem:[%s4226 + $0x1c] sm:$0xf]
        %v4235 = vld [vmem:[%s4226 + $0x20] sm:$0xf]
        %v4236 = vld [vmem:[%s4226 + $0x24] sm:$0xf]
        %v4237 = vld [vmem:[%s4226 + $0x28] sm:$0xf]
        %v4238 = vld [vmem:[%s4226 + $0x2c] sm:$0xf]
        %v4239 = vld [vmem:[%s4226 + $0x30] sm:$0xf]
        %v4240 = vld [vmem:[%s4226 + $0x34] sm:$0xf]
        %v4241 = vld [vmem:[%s4226 + $0x38] sm:$0xf]
        %v4242 = vld [vmem:[%s4226 + $0x3c] sm:$0xf]
        %v4243 = vld [vmem:[%s4226 + $0x40] sm:$0xf]
        %v4244 = vld [vmem:[%s4226 + $0x44] sm:$0xf]
        %v4245 = vld [vmem:[%s4226 + $0x48] sm:$0xf]
        %v4246 = vld [vmem:[%s4226 + $0x4c] sm:$0xf]
        %v4247 = vld [vmem:[%s4226 + $0x50] sm:$0xf]
        %v4248 = vld [vmem:[%s4226 + $0x54] sm:$0xf]
        %v4249 = vld [vmem:[%s4226 + $0x58] sm:$0xf]
        %v4250 = vld [vmem:[%s4226 + $0x5c] sm:$0xf]
        %v4251 = vld [vmem:[%s4226 + $0x60] sm:$0xf]
        %v4252 = vld [vmem:[%s4226 + $0x64] sm:$0xf]
        %v4253 = vld [vmem:[%s4226 + $0x68] sm:$0xf]
        %v4254 = vld [vmem:[%s4226 + $0x6c] sm:$0xf]
        %v4255 = vld [vmem:[%s4226 + $0x70] sm:$0xf]
        %v4256 = vld [vmem:[%s4226 + $0x74] sm:$0xf]
        %v4257 = vld [vmem:[%s4226 + $0x78] sm:$0xf]
        %v4258 = vld [vmem:[%s4226 + $0x7c] sm:$0xf]
        %s4259 = scalar_lea.vmem %s1, 32
        %v4260 = vld [vmem:[%s4259] sm:$0xf]
        %v4293 = vunpack.c.l.b16 %v4227
        %v4294 = vunpack.c.l.b16 %v4228
        %v4295 = vunpack.c.l.b16 %v4229
        %v4296 = vunpack.c.l.b16 %v4230
        %v4297 = vunpack.c.l.b16 %v4231
        %v4298 = vunpack.c.l.b16 %v4232
        %v4299 = vunpack.c.l.b16 %v4233
        %v4300 = vunpack.c.l.b16 %v4234
        %v4301 = vunpack.c.l.b16 %v4235
        %v4302 = vunpack.c.l.b16 %v4236
        %v4303 = vunpack.c.l.b16 %v4237
        %v4304 = vunpack.c.l.b16 %v4238
        %v4305 = vunpack.c.l.b16 %v4239
        %v4306 = vunpack.c.l.b16 %v4240
        %v4307 = vunpack.c.l.b16 %v4241
        %v4308 = vunpack.c.l.b16 %v4242
        %v4309 = vunpack.c.l.b16 %v4243
        %v4310 = vunpack.c.l.b16 %v4244
        %v4311 = vunpack.c.l.b16 %v4245
        %v4312 = vunpack.c.l.b16 %v4246
        %v4313 = vunpack.c.l.b16 %v4247
        %v4314 = vunpack.c.l.b16 %v4248
        %v4315 = vunpack.c.l.b16 %v4249
        %v4316 = vunpack.c.l.b16 %v4250
        %v4317 = vunpack.c.l.b16 %v4251
        %v4318 = vunpack.c.l.b16 %v4252
        %v4319 = vunpack.c.l.b16 %v4253
        %v4320 = vunpack.c.l.b16 %v4254
        %v4321 = vunpack.c.l.b16 %v4255
        %v4322 = vunpack.c.l.b16 %v4256
        %v4323 = vunpack.c.l.b16 %v4257
        %v4324 = vunpack.c.l.b16 %v4258
        %v4325 = vpack.c.b16 %v4294, %v4293
        %v4326 = vpack.c.b16 %v4296, %v4295
        %v4327 = vpack.c.b16 %v4298, %v4297
        %v4328 = vpack.c.b16 %v4300, %v4299
        %v4329 = vpack.c.b16 %v4302, %v4301
        %v4330 = vpack.c.b16 %v4304, %v4303
        %v4331 = vpack.c.b16 %v4306, %v4305
        %v4332 = vpack.c.b16 %v4308, %v4307
        %v4333 = vpack.c.b16 %v4310, %v4309
        %v4334 = vpack.c.b16 %v4312, %v4311
        %v4335 = vpack.c.b16 %v4314, %v4313
        %v4336 = vpack.c.b16 %v4316, %v4315
        %v4337 = vpack.c.b16 %v4318, %v4317
        %v4338 = vpack.c.b16 %v4320, %v4319
        %v4339 = vpack.c.b16 %v4322, %v4321
        %v4340 = vpack.c.b16 %v4324, %v4323
        %v4342 = vsel %vm1566, %v4325, 0
        %v4345 = vsel %vm1566, %v4326, 0
        %v4348 = vsel %vm1566, %v4327, 0
        %v4351 = vsel %vm1566, %v4328, 0
        %v4354 = vsel %vm1566, %v4329, 0
        %v4357 = vsel %vm1566, %v4330, 0
        %v4360 = vsel %vm1566, %v4331, 0
        %v4363 = vsel %vm1566, %v4332, 0
        %v4366 = vsel %vm1566, %v4333, 0
        %v4369 = vsel %vm1566, %v4334, 0
        %v4372 = vsel %vm1566, %v4335, 0
        %v4375 = vsel %vm1566, %v4336, 0
        %v4378 = vsel %vm1566, %v4337, 0
        %v4381 = vsel %vm1566, %v4338, 0
        %v4384 = vsel %vm1566, %v4339, 0
        %v4387 = vsel %vm1566, %v4340, 0
        %v4390 = vsel %vm1615, %v4260, 0
        %4392 = vmatprep.subr.bf16.mxu0 0
        %4393 = vmatpush1.bf16.msra.mxu0 %v4390
        %4394 = vmatprep.subr.bf16.mxu0 0
        %4395 = vmatpush1.bf16.msra.mxu0 0
        %4396 = vmatprep.subr.bf16.mxu0 0
        %4397 = vmatpush1.bf16.msra.mxu0 0
        %4398 = vmatprep.subr.bf16.mxu0 0
        %4399 = vmatpush1.bf16.msra.mxu0 0
        %4400 = vmatprep.subr.bf16.mxu0 0
        %4401 = vmatpush1.bf16.msra.mxu0 0
        %4402 = vmatprep.subr.bf16.mxu0 0
        %4403 = vmatpush1.bf16.msra.mxu0 0
        %4404 = vmatprep.subr.bf16.mxu0 0
        %4405 = vmatpush1.bf16.msra.mxu0 0
        %4406 = vmatprep.subr.bf16.mxu0 0
        %4407 = vmatpush1.bf16.msra.mxu0 0
        %4408 = vmatprep.subr.bf16.mxu0 0
        %4409 = vmatpush1.bf16.msra.mxu0 0
        %4410 = vmatprep.subr.bf16.mxu0 0
        %4411 = vmatpush1.bf16.msra.mxu0 0
        %4412 = vmatprep.subr.bf16.mxu0 0
        %4413 = vmatpush1.bf16.msra.mxu0 0
        %4414 = vmatprep.subr.bf16.mxu0 0
        %4415 = vmatpush1.bf16.msra.mxu0 0
        %4416 = vmatprep.subr.bf16.mxu0 0
        %4417 = vmatpush1.bf16.msra.mxu0 0
        %4418 = vmatprep.subr.bf16.mxu0 0
        %4419 = vmatpush1.bf16.msra.mxu0 0
        %4420 = vmatprep.subr.bf16.mxu0 0
        %4421 = vmatpush1.bf16.msra.mxu0 0
        %4422 = vmatprep.subr.bf16.mxu0 0
        %4423 = vmatpush1.bf16.msra.mxu0 0
        %4424 = vmatprep.mubr.bf16.mxu0 0
        %4425 = vmatmul.mubr.bf16.gmra.mrb[0].mxu0 %v4342
        %v4426 = vpop.f32.mrb[0].mxu0
        %v4427 = vadd.f32 0.0, %v4426
        %v4428 = vpop.f32.mrb[0].mxu0
        %v4429 = vpop.f32.mrb[0].mxu0
        %v4430 = vadd.f32 0.0, %v4429
        %v4431 = vpop.f32.mrb[0].mxu0
        %4432 = vmatprep.mubr.bf16.mxu0 0
        %4433 = vmatmul.mubr.bf16.gmra.mrb[0].mxu0 %v4345
        %v4434 = vpop.f32.mrb[0].mxu0
        %v4435 = vadd.f32 0.0, %v4434
        %v4436 = vpop.f32.mrb[0].mxu0
        %v4437 = vpop.f32.mrb[0].mxu0
        %v4438 = vadd.f32 0.0, %v4437
        %v4439 = vpop.f32.mrb[0].mxu0
        %4440 = vmatprep.mubr.bf16.mxu0 0
        %4441 = vmatmul.mubr.bf16.gmra.mrb[0].mxu0 %v4348
        %v4442 = vpop.f32.mrb[0].mxu0
        %v4443 = vadd.f32 0.0, %v4442
        %v4444 = vpop.f32.mrb[0].mxu0
        %v4445 = vpop.f32.mrb[0].mxu0
        %v4446 = vadd.f32 0.0, %v4445
        %v4447 = vpop.f32.mrb[0].mxu0
        %4448 = vmatprep.mubr.bf16.mxu0 0
        %4449 = vmatmul.mubr.bf16.gmra.mrb[0].mxu0 %v4351
        %v4450 = vpop.f32.mrb[0].mxu0
        %v4451 = vadd.f32 0.0, %v4450
        %v4452 = vpop.f32.mrb[0].mxu0
        %v4453 = vpop.f32.mrb[0].mxu0
        %v4454 = vadd.f32 0.0, %v4453
        %v4455 = vpop.f32.mrb[0].mxu0
        %4456 = vmatprep.mubr.bf16.mxu0 0
        %4457 = vmatmul.mubr.bf16.gmra.mrb[0].mxu0 %v4354
        %v4458 = vpop.f32.mrb[0].mxu0
        %v4459 = vadd.f32 0.0, %v4458
        %v4460 = vpop.f32.mrb[0].mxu0
        %v4461 = vpop.f32.mrb[0].mxu0
        %v4462 = vadd.f32 0.0, %v4461
        %v4463 = vpop.f32.mrb[0].mxu0
        %4464 = vmatprep.mubr.bf16.mxu0 0
        %4465 = vmatmul.mubr.bf16.gmra.mrb[0].mxu0 %v4357
        %v4466 = vpop.f32.mrb[0].mxu0
        %v4467 = vadd.f32 0.0, %v4466
        %v4468 = vpop.f32.mrb[0].mxu0
        %v4469 = vpop.f32.mrb[0].mxu0
        %v4470 = vadd.f32 0.0, %v4469
        %v4471 = vpop.f32.mrb[0].mxu0
        %4472 = vmatprep.mubr.bf16.mxu0 0
        %4473 = vmatmul.mubr.bf16.gmra.mrb[0].mxu0 %v4360
        %v4474 = vpop.f32.mrb[0].mxu0
        %v4475 = vadd.f32 0.0, %v4474
        %v4476 = vpop.f32.mrb[0].mxu0
        %v4477 = vpop.f32.mrb[0].mxu0
        %v4478 = vadd.f32 0.0, %v4477
        %v4479 = vpop.f32.mrb[0].mxu0
        %4480 = vmatprep.mubr.bf16.mxu0 0
        %4481 = vmatmul.mubr.bf16.gmra.mrb[0].mxu0 %v4363
        %v4482 = vpop.f32.mrb[0].mxu0
        %v4483 = vadd.f32 0.0, %v4482
        %v4484 = vpop.f32.mrb[0].mxu0
        %v4485 = vpop.f32.mrb[0].mxu0
        %v4486 = vadd.f32 0.0, %v4485
        %v4487 = vpop.f32.mrb[0].mxu0
        %4488 = vmatprep.mubr.bf16.mxu0 0
        %4489 = vmatmul.mubr.bf16.gmra.mrb[0].mxu0 %v4366
        %v4490 = vpop.f32.mrb[0].mxu0
        %v4491 = vadd.f32 0.0, %v4490
        %v4492 = vpop.f32.mrb[0].mxu0
        %v4493 = vpop.f32.mrb[0].mxu0
        %v4494 = vadd.f32 0.0, %v4493
        %v4495 = vpop.f32.mrb[0].mxu0
        %4496 = vmatprep.mubr.bf16.mxu0 0
        %4497 = vmatmul.mubr.bf16.gmra.mrb[0].mxu0 %v4369
        %v4498 = vpop.f32.mrb[0].mxu0
        %v4499 = vadd.f32 0.0, %v4498
        %v4500 = vpop.f32.mrb[0].mxu0
        %v4501 = vpop.f32.mrb[0].mxu0
        %v4502 = vadd.f32 0.0, %v4501
        %v4503 = vpop.f32.mrb[0].mxu0
        %4504 = vmatprep.mubr.bf16.mxu0 0
        %4505 = vmatmul.mubr.bf16.gmra.mrb[0].mxu0 %v4372
        %v4506 = vpop.f32.mrb[0].mxu0
        %v4507 = vadd.f32 0.0, %v4506
        %v4508 = vpop.f32.mrb[0].mxu0
        %v4509 = vpop.f32.mrb[0].mxu0
        %v4510 = vadd.f32 0.0, %v4509
        %v4511 = vpop.f32.mrb[0].mxu0
        %4512 = vmatprep.mubr.bf16.mxu0 0
        %4513 = vmatmul.mubr.bf16.gmra.mrb[0].mxu0 %v4375
        %v4514 = vpop.f32.mrb[0].mxu0
        %v4515 = vadd.f32 0.0, %v4514
        %v4516 = vpop.f32.mrb[0].mxu0
        %v4517 = vpop.f32.mrb[0].mxu0
        %v4518 = vadd.f32 0.0, %v4517
        %v4519 = vpop.f32.mrb[0].mxu0
        %4520 = vmatprep.mubr.bf16.mxu0 0
        %4521 = vmatmul.mubr.bf16.gmra.mrb[0].mxu0 %v4378
        %v4522 = vpop.f32.mrb[0].mxu0
        %v4523 = vadd.f32 0.0, %v4522
        %v4524 = vpop.f32.mrb[0].mxu0
        %v4525 = vpop.f32.mrb[0].mxu0
        %v4526 = vadd.f32 0.0, %v4525
        %v4527 = vpop.f32.mrb[0].mxu0
        %4528 = vmatprep.mubr.bf16.mxu0 0
        %4529 = vmatmul.mubr.bf16.gmra.mrb[0].mxu0 %v4381
        %v4530 = vpop.f32.mrb[0].mxu0
        %v4531 = vadd.f32 0.0, %v4530
        %v4532 = vpop.f32.mrb[0].mxu0
        %v4533 = vpop.f32.mrb[0].mxu0
        %v4534 = vadd.f32 0.0, %v4533
        %v4535 = vpop.f32.mrb[0].mxu0
        %4536 = vmatprep.mubr.bf16.mxu0 0
        %4537 = vmatmul.mubr.bf16.gmra.mrb[0].mxu0 %v4384
        %v4538 = vpop.f32.mrb[0].mxu0
        %v4539 = vadd.f32 0.0, %v4538
        %v4540 = vpop.f32.mrb[0].mxu0
        %v4541 = vpop.f32.mrb[0].mxu0
        %v4542 = vadd.f32 0.0, %v4541
        %v4543 = vpop.f32.mrb[0].mxu0
        %4544 = vmatprep.mubr.bf16.mxu0 0
        %4545 = vmatmul.mubr.bf16.gmra.mrb[0].mxu0 %v4387
        %v4546 = vpop.f32.mrb[0].mxu0
        %v4547 = vadd.f32 0.0, %v4546
        %v4548 = vpop.f32.mrb[0].mxu0
        %v4549 = vpop.f32.mrb[0].mxu0
        %v4550 = vadd.f32 0.0, %v4549
        %v4551 = vpop.f32.mrb[0].mxu0
        %4552 = vdwg.mxu0
        %v4553 = vadd.f32 %v4194, %v4427
        %v4554 = vadd.f32 %v4195, %v4430
        %v4555 = vadd.f32 %v4196, %v4435
        %v4556 = vadd.f32 %v4197, %v4438
        %v4557 = vadd.f32 %v4198, %v4443
        %v4558 = vadd.f32 %v4199, %v4446
        %v4559 = vadd.f32 %v4200, %v4451
        %v4560 = vadd.f32 %v4201, %v4454
        %v4561 = vadd.f32 %v4202, %v4459
        %v4562 = vadd.f32 %v4203, %v4462
        %v4563 = vadd.f32 %v4204, %v4467
        %v4564 = vadd.f32 %v4205, %v4470
        %v4565 = vadd.f32 %v4206, %v4475
        %v4566 = vadd.f32 %v4207, %v4478
        %v4567 = vadd.f32 %v4208, %v4483
        %v4568 = vadd.f32 %v4209, %v4486
        %v4569 = vadd.f32 %v4210, %v4491
        %v4570 = vadd.f32 %v4211, %v4494
        %v4571 = vadd.f32 %v4212, %v4499
        %v4572 = vadd.f32 %v4213, %v4502
        %v4573 = vadd.f32 %v4214, %v4507
        %v4574 = vadd.f32 %v4215, %v4510
        %v4575 = vadd.f32 %v4216, %v4515
        %v4576 = vadd.f32 %v4217, %v4518
        %v4577 = vadd.f32 %v4218, %v4523
        %v4578 = vadd.f32 %v4219, %v4526
        %v4579 = vadd.f32 %v4220, %v4531
        %v4580 = vadd.f32 %v4221, %v4534
        %v4581 = vadd.f32 %v4222, %v4539
        %v4582 = vadd.f32 %v4223, %v4542
        %v4583 = vadd.f32 %v4224, %v4547
        %v4584 = vadd.f32 %v4225, %v4550
        %v4585 = vld [vmem:[%s2] sm:$0x1]
        %v4587 = vlaneseq
        %v4588 = vshrl.u32 %v4587, 7
        %v4589 = vsub.s32 0, %v4588
        %v4590 = vrot.slane %v4585, %v4589
        %v4592 = vmul.f32 %v4553, %v4590
        %v4593 = vmul.f32 %v4554, %v4590
        %v4594 = vmul.f32 %v4555, %v4590
        %v4595 = vmul.f32 %v4556, %v4590
        %v4596 = vmul.f32 %v4557, %v4590
        %v4597 = vmul.f32 %v4558, %v4590
        %v4598 = vmul.f32 %v4559, %v4590
        %v4599 = vmul.f32 %v4560, %v4590
        %v4600 = vmul.f32 %v4561, %v4590
        %v4601 = vmul.f32 %v4562, %v4590
        %v4602 = vmul.f32 %v4563, %v4590
        %v4603 = vmul.f32 %v4564, %v4590
        %v4604 = vmul.f32 %v4565, %v4590
        %v4605 = vmul.f32 %v4566, %v4590
        %v4606 = vmul.f32 %v4567, %v4590
        %v4607 = vmul.f32 %v4568, %v4590
        %v4608 = vmul.f32 %v4569, %v4590
        %v4609 = vmul.f32 %v4570, %v4590
        %v4610 = vmul.f32 %v4571, %v4590
        %v4611 = vmul.f32 %v4572, %v4590
        %v4612 = vmul.f32 %v4573, %v4590
        %v4613 = vmul.f32 %v4574, %v4590
        %v4614 = vmul.f32 %v4575, %v4590
        %v4615 = vmul.f32 %v4576, %v4590
        %v4616 = vmul.f32 %v4577, %v4590
        %v4617 = vmul.f32 %v4578, %v4590
        %v4618 = vmul.f32 %v4579, %v4590
        %v4619 = vmul.f32 %v4580, %v4590
        %v4620 = vmul.f32 %v4581, %v4590
        %v4621 = vmul.f32 %v4582, %v4590
        %v4622 = vmul.f32 %v4583, %v4590
        %v4623 = vmul.f32 %v4584, %v4590
        %v4624 = vld [vmem:[%s3] sm:$0x1]
        %v4626 = vlaneseq
        %v4627 = vshrl.u32 %v4626, 7
        %v4628 = vsub.s32 0, %v4627
        %v4629 = vrot.slane %v4624, %v4628
        %v4631 = vadd.f32 %v4592, %v4629
        %v4632 = vadd.f32 %v4593, %v4629
        %v4633 = vadd.f32 %v4594, %v4629
        %v4634 = vadd.f32 %v4595, %v4629
        %v4635 = vadd.f32 %v4596, %v4629
        %v4636 = vadd.f32 %v4597, %v4629
        %v4637 = vadd.f32 %v4598, %v4629
        %v4638 = vadd.f32 %v4599, %v4629
        %v4639 = vadd.f32 %v4600, %v4629
        %v4640 = vadd.f32 %v4601, %v4629
        %v4641 = vadd.f32 %v4602, %v4629
        %v4642 = vadd.f32 %v4603, %v4629
        %v4643 = vadd.f32 %v4604, %v4629
        %v4644 = vadd.f32 %v4605, %v4629
        %v4645 = vadd.f32 %v4606, %v4629
        %v4646 = vadd.f32 %v4607, %v4629
        %v4647 = vadd.f32 %v4608, %v4629
        %v4648 = vadd.f32 %v4609, %v4629
        %v4649 = vadd.f32 %v4610, %v4629
        %v4650 = vadd.f32 %v4611, %v4629
        %v4651 = vadd.f32 %v4612, %v4629
        %v4652 = vadd.f32 %v4613, %v4629
        %v4653 = vadd.f32 %v4614, %v4629
        %v4654 = vadd.f32 %v4615, %v4629
        %v4655 = vadd.f32 %v4616, %v4629
        %v4656 = vadd.f32 %v4617, %v4629
        %v4657 = vadd.f32 %v4618, %v4629
        %v4658 = vadd.f32 %v4619, %v4629
        %v4659 = vadd.f32 %v4620, %v4629
        %v4660 = vadd.f32 %v4621, %v4629
        %v4661 = vadd.f32 %v4622, %v4629
        %v4662 = vadd.f32 %v4623, %v4629
        %vm4663 = vcmp.ge.f32.partialorder %v4631, 0.0
        %vm4664 = vcmp.ge.f32.partialorder %v4632, 0.0
        %vm4665 = vcmp.ge.f32.partialorder %v4633, 0.0
        %vm4666 = vcmp.ge.f32.partialorder %v4634, 0.0
        %vm4667 = vcmp.ge.f32.partialorder %v4635, 0.0
        %vm4668 = vcmp.ge.f32.partialorder %v4636, 0.0
        %vm4669 = vcmp.ge.f32.partialorder %v4637, 0.0
        %vm4670 = vcmp.ge.f32.partialorder %v4638, 0.0
        %vm4671 = vcmp.ge.f32.partialorder %v4639, 0.0
        %vm4672 = vcmp.ge.f32.partialorder %v4640, 0.0
        %vm4673 = vcmp.ge.f32.partialorder %v4641, 0.0
        %vm4674 = vcmp.ge.f32.partialorder %v4642, 0.0
        %vm4675 = vcmp.ge.f32.partialorder %v4643, 0.0
        %vm4676 = vcmp.ge.f32.partialorder %v4644, 0.0
        %vm4677 = vcmp.ge.f32.partialorder %v4645, 0.0
        %vm4678 = vcmp.ge.f32.partialorder %v4646, 0.0
        %vm4679 = vcmp.ge.f32.partialorder %v4647, 0.0
        %vm4680 = vcmp.ge.f32.partialorder %v4648, 0.0
        %vm4681 = vcmp.ge.f32.partialorder %v4649, 0.0
        %vm4682 = vcmp.ge.f32.partialorder %v4650, 0.0
        %vm4683 = vcmp.ge.f32.partialorder %v4651, 0.0
        %vm4684 = vcmp.ge.f32.partialorder %v4652, 0.0
        %vm4685 = vcmp.ge.f32.partialorder %v4653, 0.0
        %vm4686 = vcmp.ge.f32.partialorder %v4654, 0.0
        %vm4687 = vcmp.ge.f32.partialorder %v4655, 0.0
        %vm4688 = vcmp.ge.f32.partialorder %v4656, 0.0
        %vm4689 = vcmp.ge.f32.partialorder %v4657, 0.0
        %vm4690 = vcmp.ge.f32.partialorder %v4658, 0.0
        %vm4691 = vcmp.ge.f32.partialorder %v4659, 0.0
        %vm4692 = vcmp.ge.f32.partialorder %v4660, 0.0
        %vm4693 = vcmp.ge.f32.partialorder %v4661, 0.0
        %vm4694 = vcmp.ge.f32.partialorder %v4662, 0.0
        %v4695 = vld [vmem:[%s4] sm:$0x1]
        %v4697 = vlaneseq
        %v4698 = vshrl.u32 %v4697, 7
        %v4699 = vsub.s32 0, %v4698
        %v4700 = vrot.slane %v4695, %v4699
        %v4702 = vmul.f32 %v4700, %v4631
        %v4703 = vmul.f32 %v4700, %v4632
        %v4704 = vmul.f32 %v4700, %v4633
        %v4705 = vmul.f32 %v4700, %v4634
        %v4706 = vmul.f32 %v4700, %v4635
        %v4707 = vmul.f32 %v4700, %v4636
        %v4708 = vmul.f32 %v4700, %v4637
        %v4709 = vmul.f32 %v4700, %v4638
        %v4710 = vmul.f32 %v4700, %v4639
        %v4711 = vmul.f32 %v4700, %v4640
        %v4712 = vmul.f32 %v4700, %v4641
        %v4713 = vmul.f32 %v4700, %v4642
        %v4714 = vmul.f32 %v4700, %v4643
        %v4715 = vmul.f32 %v4700, %v4644
        %v4716 = vmul.f32 %v4700, %v4645
        %v4717 = vmul.f32 %v4700, %v4646
        %v4718 = vmul.f32 %v4700, %v4647
        %v4719 = vmul.f32 %v4700, %v4648
        %v4720 = vmul.f32 %v4700, %v4649
        %v4721 = vmul.f32 %v4700, %v4650
        %v4722 = vmul.f32 %v4700, %v4651
        %v4723 = vmul.f32 %v4700, %v4652
        %v4724 = vmul.f32 %v4700, %v4653
        %v4725 = vmul.f32 %v4700, %v4654
        %v4726 = vmul.f32 %v4700, %v4655
        %v4727 = vmul.f32 %v4700, %v4656
        %v4728 = vmul.f32 %v4700, %v4657
        %v4729 = vmul.f32 %v4700, %v4658
        %v4730 = vmul.f32 %v4700, %v4659
        %v4731 = vmul.f32 %v4700, %v4660
        %v4732 = vmul.f32 %v4700, %v4661
        %v4733 = vmul.f32 %v4700, %v4662
        %v4734 = vsel %vm4663, %v4631, %v4702
        %v4735 = vsel %vm4664, %v4632, %v4703
        %v4736 = vsel %vm4665, %v4633, %v4704
        %v4737 = vsel %vm4666, %v4634, %v4705
        %v4738 = vsel %vm4667, %v4635, %v4706
        %v4739 = vsel %vm4668, %v4636, %v4707
        %v4740 = vsel %vm4669, %v4637, %v4708
        %v4741 = vsel %vm4670, %v4638, %v4709
        %v4742 = vsel %vm4671, %v4639, %v4710
        %v4743 = vsel %vm4672, %v4640, %v4711
        %v4744 = vsel %vm4673, %v4641, %v4712
        %v4745 = vsel %vm4674, %v4642, %v4713
        %v4746 = vsel %vm4675, %v4643, %v4714
        %v4747 = vsel %vm4676, %v4644, %v4715
        %v4748 = vsel %vm4677, %v4645, %v4716
        %v4749 = vsel %vm4678, %v4646, %v4717
        %v4750 = vsel %vm4679, %v4647, %v4718
        %v4751 = vsel %vm4680, %v4648, %v4719
        %v4752 = vsel %vm4681, %v4649, %v4720
        %v4753 = vsel %vm4682, %v4650, %v4721
        %v4754 = vsel %vm4683, %v4651, %v4722
        %v4755 = vsel %vm4684, %v4652, %v4723
        %v4756 = vsel %vm4685, %v4653, %v4724
        %v4757 = vsel %vm4686, %v4654, %v4725
        %v4758 = vsel %vm4687, %v4655, %v4726
        %v4759 = vsel %vm4688, %v4656, %v4727
        %v4760 = vsel %vm4689, %v4657, %v4728
        %v4761 = vsel %vm4690, %v4658, %v4729
        %v4762 = vsel %vm4691, %v4659, %v4730
        %v4763 = vsel %vm4692, %v4660, %v4731
        %v4764 = vsel %vm4693, %v4661, %v4732
        %v4765 = vsel %vm4694, %v4662, %v4733
        %vm4766 = vcmask 523264
        %4767 = vst.msk [vmem:[%s1415] sm:$0xff] %vm4766, %v4734
        %4768 = vst.msk [vmem:[%s1415 + $0x8] sm:$0xff] %vm4766, %v4735
        %4769 = vst.msk [vmem:[%s1415 + $0x10] sm:$0xff] %vm4766, %v4736
        %4770 = vst.msk [vmem:[%s1415 + $0x18] sm:$0xff] %vm4766, %v4737
        %4771 = vst.msk [vmem:[%s1415 + $0x20] sm:$0xff] %vm4766, %v4738
        %4772 = vst.msk [vmem:[%s1415 + $0x28] sm:$0xff] %vm4766, %v4739
        %4773 = vst.msk [vmem:[%s1415 + $0x30] sm:$0xff] %vm4766, %v4740
        %4774 = vst.msk [vmem:[%s1415 + $0x38] sm:$0xff] %vm4766, %v4741
        %4775 = vst.msk [vmem:[%s1415 + $0x40] sm:$0xff] %vm4766, %v4742
        %4776 = vst.msk [vmem:[%s1415 + $0x48] sm:$0xff] %vm4766, %v4743
        %4777 = vst.msk [vmem:[%s1415 + $0x50] sm:$0xff] %vm4766, %v4744
        %4778 = vst.msk [vmem:[%s1415 + $0x58] sm:$0xff] %vm4766, %v4745
        %4779 = vst.msk [vmem:[%s1415 + $0x60] sm:$0xff] %vm4766, %v4746
        %4780 = vst.msk [vmem:[%s1415 + $0x68] sm:$0xff] %vm4766, %v4747
        %4781 = vst.msk [vmem:[%s1415 + $0x70] sm:$0xff] %vm4766, %v4748
        %4782 = vst.msk [vmem:[%s1415 + $0x78] sm:$0xff] %vm4766, %v4749
        %4783 = vst.msk [vmem:[%s1415 + $0x80] sm:$0xff] %vm4766, %v4750
        %4784 = vst.msk [vmem:[%s1415 + $0x88] sm:$0xff] %vm4766, %v4751
        %4785 = vst.msk [vmem:[%s1415 + $0x90] sm:$0xff] %vm4766, %v4752
        %4786 = vst.msk [vmem:[%s1415 + $0x98] sm:$0xff] %vm4766, %v4753
        %4787 = vst.msk [vmem:[%s1415 + $0xa0] sm:$0xff] %vm4766, %v4754
        %4788 = vst.msk [vmem:[%s1415 + $0xa8] sm:$0xff] %vm4766, %v4755
        %4789 = vst.msk [vmem:[%s1415 + $0xb0] sm:$0xff] %vm4766, %v4756
        %4790 = vst.msk [vmem:[%s1415 + $0xb8] sm:$0xff] %vm4766, %v4757
        %4791 = vst.msk [vmem:[%s1415 + $0xc0] sm:$0xff] %vm4766, %v4758
        %4792 = vst.msk [vmem:[%s1415 + $0xc8] sm:$0xff] %vm4766, %v4759
        %4793 = vst.msk [vmem:[%s1415 + $0xd0] sm:$0xff] %vm4766, %v4760
        %4794 = vst.msk [vmem:[%s1415 + $0xd8] sm:$0xff] %vm4766, %v4761
        %4795 = vst.msk [vmem:[%s1415 + $0xe0] sm:$0xff] %vm4766, %v4762
        %4796 = vst.msk [vmem:[%s1415 + $0xe8] sm:$0xff] %vm4766, %v4763
        %4797 = vst.msk [vmem:[%s1415 + $0xf0] sm:$0xff] %vm4766, %v4764
        %4798 = vst.msk [vmem:[%s1415 + $0xf8] sm:$0xff] %vm4766, %v4765
        %s4799 = smul.u32 32, %s16
        %p4800 = scmp.lt.s32.totalorder %s4799, 63
        %s4801 = scalar_select %p4800, %s4799, 63
        %s4802 = smul.addr %s4801, 8
        %s4803 = scalar_lea.vmem %s5, %s4802
        // Predicated region
        $region82: #{tpu_custom_call.1} parent=76 // pred_check
          %p4804 = pneg %p144
        $region83: #{tpu_custom_call.1} parent=76 // pred_check_branch
          %4806 = sbr.rel (%p4804) target = $region85
        $region84: #{tpu_custom_call.1} parent=76 // pred_region
          %s4807 = smul.u32 32, %s16
        $region85: #{tpu_custom_call.1} parent=76 // pred_fallthru
          _
      $region77: #{tpu_custom_call.1} parent=5 // pred_fallthru
        _
      %p4808 = scmp.le.s32.totalorder 2, %s11
      // Predicated region
      $region86: #{tpu_custom_call.1} parent=5 // pred_check
        %p4809 = pneg %p4808
      $region87: #{tpu_custom_call.1} parent=5 // pred_check_branch
        %4811 = sbr.rel (%p4809) target = $region89
      $region88: #{tpu_custom_call.1} parent=5 // pred_region
        %s4812 = ssub.s32 %s11, 2
        // Predicated region
        $region90: #{tpu_custom_call.1} parent=88 // pred_check
          %p4813 = pneg %p150
        $region91: #{tpu_custom_call.1} parent=88 // pred_check_branch
          %4815 = sbr.rel (%p4813) target = $region93
        $region92: #{tpu_custom_call.1} parent=88 // pred_region
          %s4816 = smul.u32 32, %s17
          %p4817 = scmp.lt.s32.totalorder %s4816, 63
          %s4818 = scalar_select %p4817, %s4816, 63
          %s4819 = smul.addr %s4818, 8
          %s4820 = scalar_lea.vmem %s5, %s4819
        $region93: #{tpu_custom_call.1} parent=88 // pred_fallthru
          _
      $region89: #{tpu_custom_call.1} parent=5 // pred_fallthru
        _
    $region6: #{tpu_custom_call.1} parent=1 // loop_footer
      %s15 = sadd.s32 1, %s11
    $region7: #{tpu_custom_call.1} parent=1 // loop_footer_branch
      %10 = sbr.rel target = $region3
    $region8: #{tpu_custom_call.1} parent=1 // loop_exit
      _

</llo_original>
